<compile_context>
chip_gen: v5e
topology: v5e:2x2
jax: 0.10.0
libtpu: 0.0.40
codegen_flags: <defaults>
</compile_context>

<pallas_src>
import functools

import numpy as np
import jax
import jax.numpy as jnp
from jax.experimental import pallas as pl
from jax.experimental.pallas import tpu as pltpu

LANE = 128   # lane padding for (pooled output column, channel) pairs
KH = 5       # conv kernel size


# ----------------------------------------------------------------------------
# Fused whole-network kernel (per grid step: BT images)
# ----------------------------------------------------------------------------
def _net_kernel(x_ref, c1w_ref, c1b_ref, c2w_ref, c2b_ref,
                f1w_ref, f1b_ref, f2w_ref, f2b_ref, o_ref, *, bt):
    """x_ref : (BT, 32, 96) bf16, rows mod-4-blocked (orig row r at 8*(r%4)+r//4)
       c1w   : (5, 96, 256)  bf16 banded conv1 weight
       c1b   : (1, 128)      f32  conv1 bias tiled per pooled column
       c2w   : (5, 128, 256) bf16 banded conv2 weight
       c2b   : (1, 128)      f32
       f1w   : (128, 1280)   bf16 fc1 weight, column block r = conv2-row-r weights
       f1b   : (1, 256)      f32
       f2w   : (256, 10)     bf16
       f2b   : (1, 10)       f32
       o_ref : (BT, 1, 10)   f32 logits
    """
    nh = f1b_ref.shape[1]
    for b in range(bt):
        # ---- conv1 + bias + ReLU + 2x2 maxpool --------------------------------
        # accs[j][q] = conv output row 4q + j (q = 0..6); input row 4q + j + ki
        # is a contiguous 7-row slice in the mod-4-blocked layout.
        accs = [None, None, None, None]
        for ki in range(KH):
            wk = c1w_ref[ki]                                    # (96, 256) bf16
            for j in range(4):
                t = j + ki
                start = 8 * (t % 4) + t // 4
                part = jnp.dot(x_ref[b, start:start + 7, :], wk,
                               preferred_element_type=jnp.float32)
                accs[j] = part if accs[j] is None else accs[j] + part
        pool_e = jnp.maximum(accs[0], accs[1])                  # pooled rows 0,2,...,12
        pool_o = jnp.maximum(accs[2], accs[3])                  # pooled rows 1,3,...,13
        pe = jnp.maximum(jnp.maximum(pool_e[:, :LANE], pool_e[:, LANE:]) + c1b_ref[...], 0.0)
        po = jnp.maximum(jnp.maximum(pool_o[:, :LANE], pool_o[:, LANE:]) + c1b_ref[...], 0.0)

        # ---- conv2 + bias + ReLU + 2x2 maxpool --------------------------------
        # conv2 input row 2q -> pe[q], row 2q+1 -> po[q]  (even-first layout)
        acc_e = None                                            # conv2 rows 0,2,...,8
        acc_o = None                                            # conv2 rows 1,3,...,9
        for ki in range(KH):
            wk = c2w_ref[ki]                                    # (128, 256) bf16
            if ki % 2 == 0:
                xe = pe[ki // 2:ki // 2 + 5, :]
                xo = po[ki // 2:ki // 2 + 5, :]
            else:
                xe = po[(ki - 1) // 2:(ki - 1) // 2 + 5, :]
                xo = pe[(ki + 1) // 2:(ki + 1) // 2 + 5, :]
            ce = jnp.dot(xe.astype(jnp.bfloat16), wk, preferred_element_type=jnp.float32)
            co = jnp.dot(xo.astype(jnp.bfloat16), wk, preferred_element_type=jnp.float32)
            acc_e = ce if acc_e is None else acc_e + ce
            acc_o = co if acc_o is None else acc_o + co
        m2 = jnp.maximum(acc_e, acc_o)                          # row pool   (5, 256)
        m2 = jnp.maximum(m2[:, :LANE], m2[:, LANE:])            # column pool (5, 128)
        m2 = jnp.maximum(m2 + c2b_ref[...], 0.0).astype(jnp.bfloat16)

        # ---- fc1 + ReLU + (eval dropout) + fc2 --------------------------------
        hcat = jnp.dot(m2, f1w_ref[...], preferred_element_type=jnp.float32)  # (5, 1280)
        h = None
        for r in range(5):
            hr = hcat[r:r + 1, r * nh:(r + 1) * nh]             # block r of row r
            h = hr if h is None else h + hr
        h = jnp.maximum(h + f1b_ref[...], 0.0)                  # (1, 256)
        # TODO(synk): train-mode Dropout(p=0.5) (pltpu.prng_*) not wired in; eval identity.
        h8 = jnp.broadcast_to(h, (8, nh)).astype(jnp.bfloat16)
        y = jnp.dot(h8, f2w_ref[...], preferred_element_type=jnp.float32)[0:1, :]
        o_ref[b] = (y + f2b_ref[...]).astype(o_ref.dtype)


# ----------------------------------------------------------------------------
# pallas_call wrapper
# ----------------------------------------------------------------------------
def _pick_bt(n):
    for bt in (8, 4, 2):
        if n % bt == 0 and n // bt >= 2:
            return bt
    return 1


def net_forward(x_nchw, p):
    """x_nchw: (N, 3, 32, 32) float. Returns (N, 10) float32 logits."""
    n = x_nchw.shape[0]
    # NCHW -> (N, H, W*C), rows mod-4-blocked (tiny glue, 1x input bytes), bf16 for MXU.
    x = jnp.transpose(x_nchw, (0, 2, 3, 1)).reshape(n, 32, 32 * 3)
    x = jnp.concatenate([x[:, m::4, :] for m in range(4)], axis=1).astype(jnp.bfloat16)

    bt = _pick_bt(n)
    kernel = functools.partial(_net_kernel, bt=bt)
    out = pl.pallas_call(
        kernel,
        out_shape=jax.ShapeDtypeStruct((n, 1, 10), jnp.float32),
        grid=(n // bt,),
        in_specs=[
            pl.BlockSpec((bt, 32, 96), lambda i: (i, 0, 0)),     # per-batch-tile input
            pl.BlockSpec(p["c1_w"].shape, lambda i: (0, 0, 0)),  # weights stay VMEM-resident
            pl.BlockSpec(p["c1_b"].shape, lambda i: (0, 0)),
            pl.BlockSpec(p["c2_w"].shape, lambda i: (0, 0, 0)),
            pl.BlockSpec(p["c2_b"].shape, lambda i: (0, 0)),
            pl.BlockSpec(p["fc1_w"].shape, lambda i: (0, 0)),
            pl.BlockSpec(p["fc1_b"].shape, lambda i: (0, 0)),
            pl.BlockSpec(p["fc2_w"].shape, lambda i: (0, 0)),
            pl.BlockSpec(p["fc2_b"].shape, lambda i: (0, 0)),
        ],
        out_specs=pl.BlockSpec((bt, 1, 10), lambda i: (i, 0, 0)),
        compiler_params=pltpu.CompilerParams(dimension_semantics=("parallel",)),
    )(x, p["c1_w"], p["c1_b"], p["c2_w"], p["c2_b"],
      p["fc1_w"], p["fc1_b"], p["fc2_w"], p["fc2_b"])
    return out[:, 0, :]


# ----------------------------------------------------------------------------
# One-time parameter preparation (pre-pack / pre-pad / bf16 cast)
# ----------------------------------------------------------------------------
def _banded_conv_weight(w_oihw, w_in, lin, pad):
    """Torch conv weight (Cout,Cin,KH,KW) -> banded matmul weight (KH, lin, 2*pad).

    Input lane  : w*Cin + cin  (w < w_in; rows >= w_in*Cin stay 0 for padded inputs)
    Output lane : t*pad + wo2*Cout + co  with conv output column wo = 2*wo2 + t,
    so the 2x2 column pool is a max of the two aligned `pad`-lane halves.
    """
    w = np.asarray(w_oihw, np.float32)
    cout, cin, kh, kw = w.shape
    wo = w_in - kw + 1
    wb = np.zeros((kh, lin, 2 * pad), np.float32)
    for ki in range(kh):
        for kj in range(kw):
            wt = w[:, :, ki, kj].T                              # (Cin, Cout)
            for o in range(wo):
                t, o2 = o % 2, o // 2
                r0 = (o + kj) * cin
                c0 = t * pad + o2 * cout
                wb[ki, r0:r0 + cin, c0:c0 + cout] = wt
    return jnp.asarray(wb, jnp.bfloat16)


def _tiled_bias(b, wo2, pad):
    b = np.asarray(b, np.float32)
    cout = b.shape[0]
    bt_ = np.zeros((1, pad), np.float32)
    for o2 in range(wo2):
        bt_[0, o2 * cout:(o2 + 1) * cout] = b
    return jnp.asarray(bt_)


def _fc1_weight(fc1_w, c_dim, h2, w2, pad):
    """Torch fc1 (out, C*H2*W2) [idx c*H2*W2 + h*W2 + w] -> (pad, H2*out).

    Column block h holds the weights contracting conv2 pooled row h (lane = w*C + c);
    the kernel keeps the h-th 256-lane block of fc1-matmul row h and sums over h.
    """
    w = np.asarray(fc1_w, np.float32)
    out_dim = w.shape[0]
    wm = np.zeros((pad, h2 * out_dim), np.float32)
    for c in range(c_dim):
        for h in range(h2):
            for ww in range(w2):
                wm[ww * c_dim + c, h * out_dim:(h + 1) * out_dim] = \
                    w[:, c * h2 * w2 + h * w2 + ww]
    return jnp.asarray(wm, jnp.bfloat16)


def prepare_params(params):
    return {
        "c1_w": _banded_conv_weight(params["conv1_w"], w_in=32, lin=32 * 3, pad=LANE),
        "c1_b": _tiled_bias(params["conv1_b"], wo2=14, pad=LANE),
        "c2_w": _banded_conv_weight(params["conv2_w"], w_in=14, lin=LANE, pad=LANE),
        "c2_b": _tiled_bias(params["conv2_b"], wo2=5, pad=LANE),
        "fc1_w": _fc1_weight(params["fc1_w"], c_dim=16, h2=5, w2=5, pad=LANE),
        "fc1_b": jnp.asarray(np.asarray(params["fc1_b"], np.float32)[None, :]),
        "fc2_w": jnp.asarray(np.asarray(params["fc2_w"], np.float32).T, jnp.bfloat16),
        "fc2_b": jnp.asarray(np.asarray(params["fc2_b"], np.float32)[None, :]),
    }


def init_params(key):
    """Torch-layout parameters with torch default (uniform +-1/sqrt(fan_in)) init."""
    ks = jax.random.split(key, 8)

    def u(k, shape, fan_in):
        bound = 1.0 / float(np.sqrt(fan_in))
        return jax.random.uniform(k, shape, jnp.float32, -bound, bound)

    return {
        "conv1_w": u(ks[0], (8, 3, 5, 5), 3 * 5 * 5),
        "conv1_b": u(ks[1], (8,), 3 * 5 * 5),
        "conv2_w": u(ks[2], (16, 8, 5, 5), 8 * 5 * 5),
        "conv2_b": u(ks[3], (16,), 8 * 5 * 5),
        "fc1_w": u(ks[4], (256, 400), 400),   # torch layout (out, in)
        "fc1_b": u(ks[5], (256,), 400),
        "fc2_w": u(ks[6], (10, 256), 256),
        "fc2_b": u(ks[7], (10,), 256),
    }


# ----------------------------------------------------------------------------
# Pure-JAX float32 reference (matches the PyTorch Net in eval mode)
# ----------------------------------------------------------------------------
def reference_forward(x_nchw, params):
    hp = jax.lax.Precision.HIGHEST
    y = jax.lax.conv_general_dilated(
        x_nchw.astype(jnp.float32), params["conv1_w"], (1, 1), "VALID",
        dimension_numbers=("NCHW", "OIHW", "NCHW"), precision=hp)
    y = jnp.maximum(y + params["conv1_b"][None, :, None, None], 0.0)
    y = jax.lax.reduce_window(y, -jnp.inf, jax.lax.max, (1, 1, 2, 2), (1, 1, 2, 2), "VALID")
    y = jax.lax.conv_general_dilated(
        y, params["conv2_w"], (1, 1), "VALID",
        dimension_numbers=("NCHW", "OIHW", "NCHW"), precision=hp)
    y = jnp.maximum(y + params["conv2_b"][None, :, None, None], 0.0)
    y = jax.lax.reduce_window(y, -jnp.inf, jax.lax.max, (1, 1, 2, 2), (1, 1, 2, 2), "VALID")
    feat = y.reshape(y.shape[0], -1)                            # torch .view: (C,H,W) order
    h = jnp.maximum(jnp.dot(feat, params["fc1_w"].T, precision=hp) + params["fc1_b"], 0.0)
    return jnp.dot(h, params["fc2_w"].T, precision=hp) + params["fc2_b"]


if __name__ == "__main__":
    key = jax.random.PRNGKey(0)
    k_x, k_p = jax.random.split(key)
    # CIFAR-10-shaped input (spatial must be 32 for the 16*5*5 flatten), batch=2.
    x = jax.random.normal(k_x, (2, 3, 32, 32), jnp.float32)
    raw = init_params(k_p)
    params = prepare_params(raw)

    out = jax.block_until_ready(jax.jit(net_forward)(x, params))
    assert out.shape == (2, 10) and out.dtype == jnp.float32
    assert bool(jnp.all(jnp.isfinite(out)))

    ref = reference_forward(x, raw)
    max_err = float(jnp.max(jnp.abs(out - ref)))
    assert max_err < 1e-1, f"kernel deviates from reference: max abs err {max_err}"
    print("KERNEL_OK")
</pallas_src>

<mosaic_0001>
module attributes {stable_mosaic.version = 11 : i64} {
  func.func @_net_kernel(%arg0: i32, %arg1: memref<1x32x96xbf16, #tpu.memory_space<vmem>>, %arg2: memref<5x96x256xbf16, #tpu.memory_space<vmem>>, %arg3: memref<1x128xf32, #tpu.memory_space<vmem>>, %arg4: memref<5x128x256xbf16, #tpu.memory_space<vmem>>, %arg5: memref<1x128xf32, #tpu.memory_space<vmem>>, %arg6: memref<128x1280xbf16, #tpu.memory_space<vmem>>, %arg7: memref<1x256xf32, #tpu.memory_space<vmem>>, %arg8: memref<256x10xbf16, #tpu.memory_space<vmem>>, %arg9: memref<1x10xf32, #tpu.memory_space<vmem>>, %arg10: memref<1x1x10xf32, #tpu.memory_space<vmem>>) attributes {dimension_semantics = [#tpu.dimension_semantics<parallel>], iteration_bounds = array<i64: 2>, scalar_prefetch = 0 : i64, scratch_operands = 0 : i64, tpu.core_type = #tpu.core_type<tc>, window_params = [{transform_indices = @transform_0, window_bounds = array<i64: 1, 32, 96>}, {pipeline_mode = #tpu.pipeline_mode<synchronous>, transform_indices = @transform_1, window_bounds = array<i64: 5, 96, 256>}, {pipeline_mode = #tpu.pipeline_mode<synchronous>, transform_indices = @transform_2, window_bounds = array<i64: 1, 128>}, {pipeline_mode = #tpu.pipeline_mode<synchronous>, transform_indices = @transform_3, window_bounds = array<i64: 5, 128, 256>}, {pipeline_mode = #tpu.pipeline_mode<synchronous>, transform_indices = @transform_4, window_bounds = array<i64: 1, 128>}, {pipeline_mode = #tpu.pipeline_mode<synchronous>, transform_indices = @transform_5, window_bounds = array<i64: 128, 1280>}, {pipeline_mode = #tpu.pipeline_mode<synchronous>, transform_indices = @transform_6, window_bounds = array<i64: 1, 256>}, {pipeline_mode = #tpu.pipeline_mode<synchronous>, transform_indices = @transform_7, window_bounds = array<i64: 256, 10>}, {pipeline_mode = #tpu.pipeline_mode<synchronous>, transform_indices = @transform_8, window_bounds = array<i64: 1, 10>}, {transform_indices = @transform_9, window_bounds = array<i64: 1, 1, 10>}]} {
    %c0 = arith.constant 0 : index
    %c0_0 = arith.constant 0 : index
    %c0_1 = arith.constant 0 : index
    %0 = vector.load %arg2[%c0, %c0_0, %c0_1] : memref<5x96x256xbf16, #tpu.memory_space<vmem>>, vector<1x96x256xbf16>
    %1 = vector.shape_cast %0 : vector<1x96x256xbf16> to vector<96x256xbf16>
    %c0_2 = arith.constant 0 : index
    %c0_3 = arith.constant 0 : index
    %c0_4 = arith.constant 0 : index
    %2 = vector.load %arg1[%c0_2, %c0_3, %c0_4] : memref<1x32x96xbf16, #tpu.memory_space<vmem>>, vector<1x7x96xbf16>
    %3 = vector.shape_cast %2 : vector<1x7x96xbf16> to vector<7x96xbf16>
    %cst = arith.constant dense<0.000000e+00> : vector<7x256xf32>
    %4 = tpu.matmul %3, %1, %cst {dimension_numbers = #tpu.dot_dimension_numbers<[1], [0], [0], [1], [0, 0, 1, 1], [], []>} : vector<7x96xbf16>, vector<96x256xbf16>, vector<7x256xf32> -> vector<7x256xf32>
    %c0_5 = arith.constant 0 : index
    %c8 = arith.constant 8 : index
    %c0_6 = arith.constant 0 : index
    %5 = vector.load %arg1[%c0_5, %c8, %c0_6] : memref<1x32x96xbf16, #tpu.memory_space<vmem>>, vector<1x7x96xbf16>
    %6 = vector.shape_cast %5 : vector<1x7x96xbf16> to vector<7x96xbf16>
    %cst_7 = arith.constant dense<0.000000e+00> : vector<7x256xf32>
    %7 = tpu.matmul %6, %1, %cst_7 {dimension_numbers = #tpu.dot_dimension_numbers<[1], [0], [0], [1], [0, 0, 1, 1], [], []>} : vector<7x96xbf16>, vector<96x256xbf16>, vector<7x256xf32> -> vector<7x256xf32>
    %c0_8 = arith.constant 0 : index
    %c16 = arith.constant 16 : index
    %c0_9 = arith.constant 0 : index
    %8 = vector.load %arg1[%c0_8, %c16, %c0_9] : memref<1x32x96xbf16, #tpu.memory_space<vmem>>, vector<1x7x96xbf16>
    %9 = vector.shape_cast %8 : vector<1x7x96xbf16> to vector<7x96xbf16>
    %cst_10 = arith.constant dense<0.000000e+00> : vector<7x256xf32>
    %10 = tpu.matmul %9, %1, %cst_10 {dimension_numbers = #tpu.dot_dimension_numbers<[1], [0], [0], [1], [0, 0, 1, 1], [], []>} : vector<7x96xbf16>, vector<96x256xbf16>, vector<7x256xf32> -> vector<7x256xf32>
    %c0_11 = arith.constant 0 : index
    %c24 = arith.constant 24 : index
    %c0_12 = arith.constant 0 : index
    %11 = vector.load %arg1[%c0_11, %c24, %c0_12] : memref<1x32x96xbf16, #tpu.memory_space<vmem>>, vector<1x7x96xbf16>
    %12 = vector.shape_cast %11 : vector<1x7x96xbf16> to vector<7x96xbf16>
    %cst_13 = arith.constant dense<0.000000e+00> : vector<7x256xf32>
    %13 = tpu.matmul %12, %1, %cst_13 {dimension_numbers = #tpu.dot_dimension_numbers<[1], [0], [0], [1], [0, 0, 1, 1], [], []>} : vector<7x96xbf16>, vector<96x256xbf16>, vector<7x256xf32> -> vector<7x256xf32>
    %c1 = arith.constant 1 : index
    %c0_14 = arith.constant 0 : index
    %c0_15 = arith.constant 0 : index
    %14 = vector.load %arg2[%c1, %c0_14, %c0_15] : memref<5x96x256xbf16, #tpu.memory_space<vmem>>, vector<1x96x256xbf16>
    %15 = vector.shape_cast %14 : vector<1x96x256xbf16> to vector<96x256xbf16>
    %c0_16 = arith.constant 0 : index
    %c8_17 = arith.constant 8 : index
    %c0_18 = arith.constant 0 : index
    %16 = vector.load %arg1[%c0_16, %c8_17, %c0_18] : memref<1x32x96xbf16, #tpu.memory_space<vmem>>, vector<1x7x96xbf16>
    %17 = vector.shape_cast %16 : vector<1x7x96xbf16> to vector<7x96xbf16>
    %cst_19 = arith.constant dense<0.000000e+00> : vector<7x256xf32>
    %18 = tpu.matmul %17, %15, %cst_19 {dimension_numbers = #tpu.dot_dimension_numbers<[1], [0], [0], [1], [0, 0, 1, 1], [], []>} : vector<7x96xbf16>, vector<96x256xbf16>, vector<7x256xf32> -> vector<7x256xf32>
    %19 = arith.addf %4, %18 : vector<7x256xf32>
    %c0_20 = arith.constant 0 : index
    %c16_21 = arith.constant 16 : index
    %c0_22 = arith.constant 0 : index
    %20 = vector.load %arg1[%c0_20, %c16_21, %c0_22] : memref<1x32x96xbf16, #tpu.memory_space<vmem>>, vector<1x7x96xbf16>
    %21 = vector.shape_cast %20 : vector<1x7x96xbf16> to vector<7x96xbf16>
    %cst_23 = arith.constant dense<0.000000e+00> : vector<7x256xf32>
    %22 = tpu.matmul %21, %15, %cst_23 {dimension_numbers = #tpu.dot_dimension_numbers<[1], [0], [0], [1], [0, 0, 1, 1], [], []>} : vector<7x96xbf16>, vector<96x256xbf16>, vector<7x256xf32> -> vector<7x256xf32>
    %23 = arith.addf %7, %22 : vector<7x256xf32>
    %c0_24 = arith.constant 0 : index
    %c24_25 = arith.constant 24 : index
    %c0_26 = arith.constant 0 : index
    %24 = vector.load %arg1[%c0_24, %c24_25, %c0_26] : memref<1x32x96xbf16, #tpu.memory_space<vmem>>, vector<1x7x96xbf16>
    %25 = vector.shape_cast %24 : vector<1x7x96xbf16> to vector<7x96xbf16>
    %cst_27 = arith.constant dense<0.000000e+00> : vector<7x256xf32>
    %26 = tpu.matmul %25, %15, %cst_27 {dimension_numbers = #tpu.dot_dimension_numbers<[1], [0], [0], [1], [0, 0, 1, 1], [], []>} : vector<7x96xbf16>, vector<96x256xbf16>, vector<7x256xf32> -> vector<7x256xf32>
    %27 = arith.addf %10, %26 : vector<7x256xf32>
    %c0_28 = arith.constant 0 : index
    %c1_29 = arith.constant 1 : index
    %c0_30 = arith.constant 0 : index
    %28 = vector.load %arg1[%c0_28, %c1_29, %c0_30] : memref<1x32x96xbf16, #tpu.memory_space<vmem>>, vector<1x7x96xbf16>
    %29 = vector.shape_cast %28 : vector<1x7x96xbf16> to vector<7x96xbf16>
    %cst_31 = arith.constant dense<0.000000e+00> : vector<7x256xf32>
    %30 = tpu.matmul %29, %15, %cst_31 {dimension_numbers = #tpu.dot_dimension_numbers<[1], [0], [0], [1], [0, 0, 1, 1], [], []>} : vector<7x96xbf16>, vector<96x256xbf16>, vector<7x256xf32> -> vector<7x256xf32>
    %31 = arith.addf %13, %30 : vector<7x256xf32>
    %c2 = arith.constant 2 : index
    %c0_32 = arith.constant 0 : index
    %c0_33 = arith.constant 0 : index
    %32 = vector.load %arg2[%c2, %c0_32, %c0_33] : memref<5x96x256xbf16, #tpu.memory_space<vmem>>, vector<1x96x256xbf16>
    %33 = vector.shape_cast %32 : vector<1x96x256xbf16> to vector<96x256xbf16>
    %c0_34 = arith.constant 0 : index
    %c16_35 = arith.constant 16 : index
    %c0_36 = arith.constant 0 : index
    %34 = vector.load %arg1[%c0_34, %c16_35, %c0_36] : memref<1x32x96xbf16, #tpu.memory_space<vmem>>, vector<1x7x96xbf16>
    %35 = vector.shape_cast %34 : vector<1x7x96xbf16> to vector<7x96xbf16>
    %cst_37 = arith.constant dense<0.000000e+00> : vector<7x256xf32>
    %36 = tpu.matmul %35, %33, %cst_37 {dimension_numbers = #tpu.dot_dimension_numbers<[1], [0], [0], [1], [0, 0, 1, 1], [], []>} : vector<7x96xbf16>, vector<96x256xbf16>, vector<7x256xf32> -> vector<7x256xf32>
    %37 = arith.addf %19, %36 : vector<7x256xf32>
    %c0_38 = arith.constant 0 : index
    %c24_39 = arith.constant 24 : index
    %c0_40 = arith.constant 0 : index
    %38 = vector.load %arg1[%c0_38, %c24_39, %c0_40] : memref<1x32x96xbf16, #tpu.memory_space<vmem>>, vector<1x7x96xbf16>
    %39 = vector.shape_cast %38 : vector<1x7x96xbf16> to vector<7x96xbf16>
    %cst_41 = arith.constant dense<0.000000e+00> : vector<7x256xf32>
    %40 = tpu.matmul %39, %33, %cst_41 {dimension_numbers = #tpu.dot_dimension_numbers<[1], [0], [0], [1], [0, 0, 1, 1], [], []>} : vector<7x96xbf16>, vector<96x256xbf16>, vector<7x256xf32> -> vector<7x256xf32>
    %41 = arith.addf %23, %40 : vector<7x256xf32>
    %c0_42 = arith.constant 0 : index
    %c1_43 = arith.constant 1 : index
    %c0_44 = arith.constant 0 : index
    %42 = vector.load %arg1[%c0_42, %c1_43, %c0_44] : memref<1x32x96xbf16, #tpu.memory_space<vmem>>, vector<1x7x96xbf16>
    %43 = vector.shape_cast %42 : vector<1x7x96xbf16> to vector<7x96xbf16>
    %cst_45 = arith.constant dense<0.000000e+00> : vector<7x256xf32>
    %44 = tpu.matmul %43, %33, %cst_45 {dimension_numbers = #tpu.dot_dimension_numbers<[1], [0], [0], [1], [0, 0, 1, 1], [], []>} : vector<7x96xbf16>, vector<96x256xbf16>, vector<7x256xf32> -> vector<7x256xf32>
    %45 = arith.addf %27, %44 : vector<7x256xf32>
    %c0_46 = arith.constant 0 : index
    %c9 = arith.constant 9 : index
    %c0_47 = arith.constant 0 : index
    %46 = vector.load %arg1[%c0_46, %c9, %c0_47] : memref<1x32x96xbf16, #tpu.memory_space<vmem>>, vector<1x7x96xbf16>
    %47 = vector.shape_cast %46 : vector<1x7x96xbf16> to vector<7x96xbf16>
    %cst_48 = arith.constant dense<0.000000e+00> : vector<7x256xf32>
    %48 = tpu.matmul %47, %33, %cst_48 {dimension_numbers = #tpu.dot_dimension_numbers<[1], [0], [0], [1], [0, 0, 1, 1], [], []>} : vector<7x96xbf16>, vector<96x256xbf16>, vector<7x256xf32> -> vector<7x256xf32>
    %49 = arith.addf %31, %48 : vector<7x256xf32>
    %c3 = arith.constant 3 : index
    %c0_49 = arith.constant 0 : index
    %c0_50 = arith.constant 0 : index
    %50 = vector.load %arg2[%c3, %c0_49, %c0_50] : memref<5x96x256xbf16, #tpu.memory_space<vmem>>, vector<1x96x256xbf16>
    %51 = vector.shape_cast %50 : vector<1x96x256xbf16> to vector<96x256xbf16>
    %c0_51 = arith.constant 0 : index
    %c24_52 = arith.constant 24 : index
    %c0_53 = arith.constant 0 : index
    %52 = vector.load %arg1[%c0_51, %c24_52, %c0_53] : memref<1x32x96xbf16, #tpu.memory_space<vmem>>, vector<1x7x96xbf16>
    %53 = vector.shape_cast %52 : vector<1x7x96xbf16> to vector<7x96xbf16>
    %cst_54 = arith.constant dense<0.000000e+00> : vector<7x256xf32>
    %54 = tpu.matmul %53, %51, %cst_54 {dimension_numbers = #tpu.dot_dimension_numbers<[1], [0], [0], [1], [0, 0, 1, 1], [], []>} : vector<7x96xbf16>, vector<96x256xbf16>, vector<7x256xf32> -> vector<7x256xf32>
    %55 = arith.addf %37, %54 : vector<7x256xf32>
    %c0_55 = arith.constant 0 : index
    %c1_56 = arith.constant 1 : index
    %c0_57 = arith.constant 0 : index
    %56 = vector.load %arg1[%c0_55, %c1_56, %c0_57] : memref<1x32x96xbf16, #tpu.memory_space<vmem>>, vector<1x7x96xbf16>
    %57 = vector.shape_cast %56 : vector<1x7x96xbf16> to vector<7x96xbf16>
    %cst_58 = arith.constant dense<0.000000e+00> : vector<7x256xf32>
    %58 = tpu.matmul %57, %51, %cst_58 {dimension_numbers = #tpu.dot_dimension_numbers<[1], [0], [0], [1], [0, 0, 1, 1], [], []>} : vector<7x96xbf16>, vector<96x256xbf16>, vector<7x256xf32> -> vector<7x256xf32>
    %59 = arith.addf %41, %58 : vector<7x256xf32>
    %c0_59 = arith.constant 0 : index
    %c9_60 = arith.constant 9 : index
    %c0_61 = arith.constant 0 : index
    %60 = vector.load %arg1[%c0_59, %c9_60, %c0_61] : memref<1x32x96xbf16, #tpu.memory_space<vmem>>, vector<1x7x96xbf16>
    %61 = vector.shape_cast %60 : vector<1x7x96xbf16> to vector<7x96xbf16>
    %cst_62 = arith.constant dense<0.000000e+00> : vector<7x256xf32>
    %62 = tpu.matmul %61, %51, %cst_62 {dimension_numbers = #tpu.dot_dimension_numbers<[1], [0], [0], [1], [0, 0, 1, 1], [], []>} : vector<7x96xbf16>, vector<96x256xbf16>, vector<7x256xf32> -> vector<7x256xf32>
    %63 = arith.addf %45, %62 : vector<7x256xf32>
    %c0_63 = arith.constant 0 : index
    %c17 = arith.constant 17 : index
    %c0_64 = arith.constant 0 : index
    %64 = vector.load %arg1[%c0_63, %c17, %c0_64] : memref<1x32x96xbf16, #tpu.memory_space<vmem>>, vector<1x7x96xbf16>
    %65 = vector.shape_cast %64 : vector<1x7x96xbf16> to vector<7x96xbf16>
    %cst_65 = arith.constant dense<0.000000e+00> : vector<7x256xf32>
    %66 = tpu.matmul %65, %51, %cst_65 {dimension_numbers = #tpu.dot_dimension_numbers<[1], [0], [0], [1], [0, 0, 1, 1], [], []>} : vector<7x96xbf16>, vector<96x256xbf16>, vector<7x256xf32> -> vector<7x256xf32>
    %67 = arith.addf %49, %66 : vector<7x256xf32>
    %c4 = arith.constant 4 : index
    %c0_66 = arith.constant 0 : index
    %c0_67 = arith.constant 0 : index
    %68 = vector.load %arg2[%c4, %c0_66, %c0_67] : memref<5x96x256xbf16, #tpu.memory_space<vmem>>, vector<1x96x256xbf16>
    %69 = vector.shape_cast %68 : vector<1x96x256xbf16> to vector<96x256xbf16>
    %c0_68 = arith.constant 0 : index
    %c1_69 = arith.constant 1 : index
    %c0_70 = arith.constant 0 : index
    %70 = vector.load %arg1[%c0_68, %c1_69, %c0_70] : memref<1x32x96xbf16, #tpu.memory_space<vmem>>, vector<1x7x96xbf16>
    %71 = vector.shape_cast %70 : vector<1x7x96xbf16> to vector<7x96xbf16>
    %cst_71 = arith.constant dense<0.000000e+00> : vector<7x256xf32>
    %72 = tpu.matmul %71, %69, %cst_71 {dimension_numbers = #tpu.dot_dimension_numbers<[1], [0], [0], [1], [0, 0, 1, 1], [], []>} : vector<7x96xbf16>, vector<96x256xbf16>, vector<7x256xf32> -> vector<7x256xf32>
    %73 = arith.addf %55, %72 : vector<7x256xf32>
    %c0_72 = arith.constant 0 : index
    %c9_73 = arith.constant 9 : index
    %c0_74 = arith.constant 0 : index
    %74 = vector.load %arg1[%c0_72, %c9_73, %c0_74] : memref<1x32x96xbf16, #tpu.memory_space<vmem>>, vector<1x7x96xbf16>
    %75 = vector.shape_cast %74 : vector<1x7x96xbf16> to vector<7x96xbf16>
    %cst_75 = arith.constant dense<0.000000e+00> : vector<7x256xf32>
    %76 = tpu.matmul %75, %69, %cst_75 {dimension_numbers = #tpu.dot_dimension_numbers<[1], [0], [0], [1], [0, 0, 1, 1], [], []>} : vector<7x96xbf16>, vector<96x256xbf16>, vector<7x256xf32> -> vector<7x256xf32>
    %77 = arith.addf %59, %76 : vector<7x256xf32>
    %c0_76 = arith.constant 0 : index
    %c17_77 = arith.constant 17 : index
    %c0_78 = arith.constant 0 : index
    %78 = vector.load %arg1[%c0_76, %c17_77, %c0_78] : memref<1x32x96xbf16, #tpu.memory_space<vmem>>, vector<1x7x96xbf16>
    %79 = vector.shape_cast %78 : vector<1x7x96xbf16> to vector<7x96xbf16>
    %cst_79 = arith.constant dense<0.000000e+00> : vector<7x256xf32>
    %80 = tpu.matmul %79, %69, %cst_79 {dimension_numbers = #tpu.dot_dimension_numbers<[1], [0], [0], [1], [0, 0, 1, 1], [], []>} : vector<7x96xbf16>, vector<96x256xbf16>, vector<7x256xf32> -> vector<7x256xf32>
    %81 = arith.addf %63, %80 : vector<7x256xf32>
    %c0_80 = arith.constant 0 : index
    %c25 = arith.constant 25 : index
    %c0_81 = arith.constant 0 : index
    %82 = vector.load %arg1[%c0_80, %c25, %c0_81] : memref<1x32x96xbf16, #tpu.memory_space<vmem>>, vector<1x7x96xbf16>
    %83 = vector.shape_cast %82 : vector<1x7x96xbf16> to vector<7x96xbf16>
    %cst_82 = arith.constant dense<0.000000e+00> : vector<7x256xf32>
    %84 = tpu.matmul %83, %69, %cst_82 {dimension_numbers = #tpu.dot_dimension_numbers<[1], [0], [0], [1], [0, 0, 1, 1], [], []>} : vector<7x96xbf16>, vector<96x256xbf16>, vector<7x256xf32> -> vector<7x256xf32>
    %85 = arith.addf %67, %84 : vector<7x256xf32>
    %86 = arith.maximumf %73, %77 : vector<7x256xf32>
    %87 = arith.maximumf %81, %85 : vector<7x256xf32>
    %88 = vector.extract_strided_slice %86 {offsets = [0, 0], sizes = [7, 128], strides = [1, 1]} : vector<7x256xf32> to vector<7x128xf32>
    %89 = vector.extract_strided_slice %86 {offsets = [0, 128], sizes = [7, 128], strides = [1, 1]} : vector<7x256xf32> to vector<7x128xf32>
    %90 = arith.maximumf %88, %89 : vector<7x128xf32>
    %c0_83 = arith.constant 0 : index
    %c0_84 = arith.constant 0 : index
    %91 = vector.load %arg3[%c0_83, %c0_84] : memref<1x128xf32, #tpu.memory_space<vmem>>, vector<1x128xf32>
    %92 = vector.broadcast %91 : vector<1x128xf32> to vector<7x128xf32>
    %93 = arith.addf %90, %92 : vector<7x128xf32>
    %cst_85 = arith.constant 0.000000e+00 : f32
    %94 = vector.broadcast %cst_85 : f32 to vector<7x128xf32>
    %95 = arith.maximumf %93, %94 : vector<7x128xf32>
    %96 = vector.extract_strided_slice %87 {offsets = [0, 0], sizes = [7, 128], strides = [1, 1]} : vector<7x256xf32> to vector<7x128xf32>
    %97 = vector.extract_strided_slice %87 {offsets = [0, 128], sizes = [7, 128], strides = [1, 1]} : vector<7x256xf32> to vector<7x128xf32>
    %98 = arith.maximumf %96, %97 : vector<7x128xf32>
    %c0_86 = arith.constant 0 : index
    %c0_87 = arith.constant 0 : index
    %99 = vector.load %arg3[%c0_86, %c0_87] : memref<1x128xf32, #tpu.memory_space<vmem>>, vector<1x128xf32>
    %100 = vector.broadcast %99 : vector<1x128xf32> to vector<7x128xf32>
    %101 = arith.addf %98, %100 : vector<7x128xf32>
    %cst_88 = arith.constant 0.000000e+00 : f32
    %102 = vector.broadcast %cst_88 : f32 to vector<7x128xf32>
    %103 = arith.maximumf %101, %102 : vector<7x128xf32>
    %c0_89 = arith.constant 0 : index
    %c0_90 = arith.constant 0 : index
    %c0_91 = arith.constant 0 : index
    %104 = vector.load %arg4[%c0_89, %c0_90, %c0_91] : memref<5x128x256xbf16, #tpu.memory_space<vmem>>, vector<1x128x256xbf16>
    %105 = vector.shape_cast %104 : vector<1x128x256xbf16> to vector<128x256xbf16>
    %106 = vector.extract_strided_slice %95 {offsets = [0, 0], sizes = [5, 128], strides = [1, 1]} : vector<7x128xf32> to vector<5x128xf32>
    %107 = vector.extract_strided_slice %103 {offsets = [0, 0], sizes = [5, 128], strides = [1, 1]} : vector<7x128xf32> to vector<5x128xf32>
    %108 = arith.truncf %106 : vector<5x128xf32> to vector<5x128xbf16>
    %cst_92 = arith.constant dense<0.000000e+00> : vector<5x256xf32>
    %109 = tpu.matmul %108, %105, %cst_92 {dimension_numbers = #tpu.dot_dimension_numbers<[1], [0], [0], [1], [0, 0, 1, 1], [], []>} : vector<5x128xbf16>, vector<128x256xbf16>, vector<5x256xf32> -> vector<5x256xf32>
    %110 = arith.truncf %107 : vector<5x128xf32> to vector<5x128xbf16>
    %cst_93 = arith.constant dense<0.000000e+00> : vector<5x256xf32>
    %111 = tpu.matmul %110, %105, %cst_93 {dimension_numbers = #tpu.dot_dimension_numbers<[1], [0], [0], [1], [0, 0, 1, 1], [], []>} : vector<5x128xbf16>, vector<128x256xbf16>, vector<5x256xf32> -> vector<5x256xf32>
    %c1_94 = arith.constant 1 : index
    %c0_95 = arith.constant 0 : index
    %c0_96 = arith.constant 0 : index
    %112 = vector.load %arg4[%c1_94, %c0_95, %c0_96] : memref<5x128x256xbf16, #tpu.memory_space<vmem>>, vector<1x128x256xbf16>
    %113 = vector.shape_cast %112 : vector<1x128x256xbf16> to vector<128x256xbf16>
    %114 = vector.extract_strided_slice %103 {offsets = [0, 0], sizes = [5, 128], strides = [1, 1]} : vector<7x128xf32> to vector<5x128xf32>
    %115 = vector.extract_strided_slice %95 {offsets = [1, 0], sizes = [5, 128], strides = [1, 1]} : vector<7x128xf32> to vector<5x128xf32>
    %116 = arith.truncf %114 : vector<5x128xf32> to vector<5x128xbf16>
    %cst_97 = arith.constant dense<0.000000e+00> : vector<5x256xf32>
    %117 = tpu.matmul %116, %113, %cst_97 {dimension_numbers = #tpu.dot_dimension_numbers<[1], [0], [0], [1], [0, 0, 1, 1], [], []>} : vector<5x128xbf16>, vector<128x256xbf16>, vector<5x256xf32> -> vector<5x256xf32>
    %118 = arith.truncf %115 : vector<5x128xf32> to vector<5x128xbf16>
    %cst_98 = arith.constant dense<0.000000e+00> : vector<5x256xf32>
    %119 = tpu.matmul %118, %113, %cst_98 {dimension_numbers = #tpu.dot_dimension_numbers<[1], [0], [0], [1], [0, 0, 1, 1], [], []>} : vector<5x128xbf16>, vector<128x256xbf16>, vector<5x256xf32> -> vector<5x256xf32>
    %120 = arith.addf %109, %117 : vector<5x256xf32>
    %121 = arith.addf %111, %119 : vector<5x256xf32>
    %c2_99 = arith.constant 2 : index
    %c0_100 = arith.constant 0 : index
    %c0_101 = arith.constant 0 : index
    %122 = vector.load %arg4[%c2_99, %c0_100, %c0_101] : memref<5x128x256xbf16, #tpu.memory_space<vmem>>, vector<1x128x256xbf16>
    %123 = vector.shape_cast %122 : vector<1x128x256xbf16> to vector<128x256xbf16>
    %124 = vector.extract_strided_slice %95 {offsets = [1, 0], sizes = [5, 128], strides = [1, 1]} : vector<7x128xf32> to vector<5x128xf32>
    %125 = vector.extract_strided_slice %103 {offsets = [1, 0], sizes = [5, 128], strides = [1, 1]} : vector<7x128xf32> to vector<5x128xf32>
    %126 = arith.truncf %124 : vector<5x128xf32> to vector<5x128xbf16>
    %cst_102 = arith.constant dense<0.000000e+00> : vector<5x256xf32>
    %127 = tpu.matmul %126, %123, %cst_102 {dimension_numbers = #tpu.dot_dimension_numbers<[1], [0], [0], [1], [0, 0, 1, 1], [], []>} : vector<5x128xbf16>, vector<128x256xbf16>, vector<5x256xf32> -> vector<5x256xf32>
    %128 = arith.truncf %125 : vector<5x128xf32> to vector<5x128xbf16>
    %cst_103 = arith.constant dense<0.000000e+00> : vector<5x256xf32>
    %129 = tpu.matmul %128, %123, %cst_103 {dimension_numbers = #tpu.dot_dimension_numbers<[1], [0], [0], [1], [0, 0, 1, 1], [], []>} : vector<5x128xbf16>, vector<128x256xbf16>, vector<5x256xf32> -> vector<5x256xf32>
    %130 = arith.addf %120, %127 : vector<5x256xf32>
    %131 = arith.addf %121, %129 : vector<5x256xf32>
    %c3_104 = arith.constant 3 : index
    %c0_105 = arith.constant 0 : index
    %c0_106 = arith.constant 0 : index
    %132 = vector.load %arg4[%c3_104, %c0_105, %c0_106] : memref<5x128x256xbf16, #tpu.memory_space<vmem>>, vector<1x128x256xbf16>
    %133 = vector.shape_cast %132 : vector<1x128x256xbf16> to vector<128x256xbf16>
    %134 = vector.extract_strided_slice %103 {offsets = [1, 0], sizes = [5, 128], strides = [1, 1]} : vector<7x128xf32> to vector<5x128xf32>
    %135 = vector.extract_strided_slice %95 {offsets = [2, 0], sizes = [5, 128], strides = [1, 1]} : vector<7x128xf32> to vector<5x128xf32>
    %136 = arith.truncf %134 : vector<5x128xf32> to vector<5x128xbf16>
    %cst_107 = arith.constant dense<0.000000e+00> : vector<5x256xf32>
    %137 = tpu.matmul %136, %133, %cst_107 {dimension_numbers = #tpu.dot_dimension_numbers<[1], [0], [0], [1], [0, 0, 1, 1], [], []>} : vector<5x128xbf16>, vector<128x256xbf16>, vector<5x256xf32> -> vector<5x256xf32>
    %138 = arith.truncf %135 : vector<5x128xf32> to vector<5x128xbf16>
    %cst_108 = arith.constant dense<0.000000e+00> : vector<5x256xf32>
    %139 = tpu.matmul %138, %133, %cst_108 {dimension_numbers = #tpu.dot_dimension_numbers<[1], [0], [0], [1], [0, 0, 1, 1], [], []>} : vector<5x128xbf16>, vector<128x256xbf16>, vector<5x256xf32> -> vector<5x256xf32>
    %140 = arith.addf %130, %137 : vector<5x256xf32>
    %141 = arith.addf %131, %139 : vector<5x256xf32>
    %c4_109 = arith.constant 4 : index
    %c0_110 = arith.constant 0 : index
    %c0_111 = arith.constant 0 : index
    %142 = vector.load %arg4[%c4_109, %c0_110, %c0_111] : memref<5x128x256xbf16, #tpu.memory_space<vmem>>, vector<1x128x256xbf16>
    %143 = vector.shape_cast %142 : vector<1x128x256xbf16> to vector<128x256xbf16>
    %144 = vector.extract_strided_slice %95 {offsets = [2, 0], sizes = [5, 128], strides = [1, 1]} : vector<7x128xf32> to vector<5x128xf32>
    %145 = vector.extract_strided_slice %103 {offsets = [2, 0], sizes = [5, 128], strides = [1, 1]} : vector<7x128xf32> to vector<5x128xf32>
    %146 = arith.truncf %144 : vector<5x128xf32> to vector<5x128xbf16>
    %cst_112 = arith.constant dense<0.000000e+00> : vector<5x256xf32>
    %147 = tpu.matmul %146, %143, %cst_112 {dimension_numbers = #tpu.dot_dimension_numbers<[1], [0], [0], [1], [0, 0, 1, 1], [], []>} : vector<5x128xbf16>, vector<128x256xbf16>, vector<5x256xf32> -> vector<5x256xf32>
    %148 = arith.truncf %145 : vector<5x128xf32> to vector<5x128xbf16>
    %cst_113 = arith.constant dense<0.000000e+00> : vector<5x256xf32>
    %149 = tpu.matmul %148, %143, %cst_113 {dimension_numbers = #tpu.dot_dimension_numbers<[1], [0], [0], [1], [0, 0, 1, 1], [], []>} : vector<5x128xbf16>, vector<128x256xbf16>, vector<5x256xf32> -> vector<5x256xf32>
    %150 = arith.addf %140, %147 : vector<5x256xf32>
    %151 = arith.addf %141, %149 : vector<5x256xf32>
    %152 = arith.maximumf %150, %151 : vector<5x256xf32>
    %153 = vector.extract_strided_slice %152 {offsets = [0, 0], sizes = [5, 128], strides = [1, 1]} : vector<5x256xf32> to vector<5x128xf32>
    %154 = vector.extract_strided_slice %152 {offsets = [0, 128], sizes = [5, 128], strides = [1, 1]} : vector<5x256xf32> to vector<5x128xf32>
    %155 = arith.maximumf %153, %154 : vector<5x128xf32>
    %c0_114 = arith.constant 0 : index
    %c0_115 = arith.constant 0 : index
    %156 = vector.load %arg5[%c0_114, %c0_115] : memref<1x128xf32, #tpu.memory_space<vmem>>, vector<1x128xf32>
    %157 = vector.broadcast %156 : vector<1x128xf32> to vector<5x128xf32>
    %158 = arith.addf %155, %157 : vector<5x128xf32>
    %cst_116 = arith.constant 0.000000e+00 : f32
    %159 = vector.broadcast %cst_116 : f32 to vector<5x128xf32>
    %160 = arith.maximumf %158, %159 : vector<5x128xf32>
    %161 = arith.truncf %160 : vector<5x128xf32> to vector<5x128xbf16>
    %c0_117 = arith.constant 0 : index
    %c0_118 = arith.constant 0 : index
    %162 = vector.load %arg6[%c0_117, %c0_118] : memref<128x1280xbf16, #tpu.memory_space<vmem>>, vector<128x1280xbf16>
    %cst_119 = arith.constant dense<0.000000e+00> : vector<5x1280xf32>
    %163 = tpu.matmul %161, %162, %cst_119 {dimension_numbers = #tpu.dot_dimension_numbers<[1], [0], [0], [1], [0, 0, 1, 1], [], []>} : vector<5x128xbf16>, vector<128x1280xbf16>, vector<5x1280xf32> -> vector<5x1280xf32>
    %164 = vector.extract_strided_slice %163 {offsets = [0, 0], sizes = [1, 256], strides = [1, 1]} : vector<5x1280xf32> to vector<1x256xf32>
    %165 = vector.extract_strided_slice %163 {offsets = [1, 256], sizes = [1, 256], strides = [1, 1]} : vector<5x1280xf32> to vector<1x256xf32>
    %166 = arith.addf %164, %165 : vector<1x256xf32>
    %167 = vector.extract_strided_slice %163 {offsets = [2, 512], sizes = [1, 256], strides = [1, 1]} : vector<5x1280xf32> to vector<1x256xf32>
    %168 = arith.addf %166, %167 : vector<1x256xf32>
    %169 = vector.extract_strided_slice %163 {offsets = [3, 768], sizes = [1, 256], strides = [1, 1]} : vector<5x1280xf32> to vector<1x256xf32>
    %170 = arith.addf %168, %169 : vector<1x256xf32>
    %171 = vector.extract_strided_slice %163 {offsets = [4, 1024], sizes = [1, 256], strides = [1, 1]} : vector<5x1280xf32> to vector<1x256xf32>
    %172 = arith.addf %170, %171 : vector<1x256xf32>
    %c0_120 = arith.constant 0 : index
    %c0_121 = arith.constant 0 : index
    %173 = vector.load %arg7[%c0_120, %c0_121] : memref<1x256xf32, #tpu.memory_space<vmem>>, vector<1x256xf32>
    %174 = arith.addf %172, %173 : vector<1x256xf32>
    %cst_122 = arith.constant 0.000000e+00 : f32
    %175 = vector.broadcast %cst_122 : f32 to vector<1x256xf32>
    %176 = arith.maximumf %174, %175 : vector<1x256xf32>
    %177 = vector.shape_cast %176 : vector<1x256xf32> to vector<1x256xf32>
    %178 = vector.broadcast %177 : vector<1x256xf32> to vector<8x256xf32>
    %179 = arith.truncf %178 : vector<8x256xf32> to vector<8x256xbf16>
    %c0_123 = arith.constant 0 : index
    %c0_124 = arith.constant 0 : index
    %180 = vector.load %arg8[%c0_123, %c0_124] : memref<256x10xbf16, #tpu.memory_space<vmem>>, vector<256x10xbf16>
    %cst_125 = arith.constant dense<0.000000e+00> : vector<8x10xf32>
    %181 = tpu.matmul %179, %180, %cst_125 {dimension_numbers = #tpu.dot_dimension_numbers<[1], [0], [0], [1], [0, 0, 1, 1], [], []>} : vector<8x256xbf16>, vector<256x10xbf16>, vector<8x10xf32> -> vector<8x10xf32>
    %182 = vector.extract_strided_slice %181 {offsets = [0, 0], sizes = [1, 10], strides = [1, 1]} : vector<8x10xf32> to vector<1x10xf32>
    %c0_126 = arith.constant 0 : index
    %c0_127 = arith.constant 0 : index
    %183 = vector.load %arg9[%c0_126, %c0_127] : memref<1x10xf32, #tpu.memory_space<vmem>>, vector<1x10xf32>
    %184 = arith.addf %182, %183 : vector<1x10xf32>
    %c0_128 = arith.constant 0 : index
    %c0_129 = arith.constant 0 : index
    %c0_130 = arith.constant 0 : index
    %185 = vector.load %arg10[%c0_128, %c0_129, %c0_130] : memref<1x1x10xf32, #tpu.memory_space<vmem>>, vector<1x1x10xf32>
    %186 = vector.shape_cast %185 : vector<1x1x10xf32> to vector<1x10xf32>
    %187 = vector.shape_cast %184 : vector<1x10xf32> to vector<1x1x10xf32>
    tpu.vector_store %arg10[%c0_128, %c0_129, %c0_130], %187 {strides = array<i32>} : memref<1x1x10xf32, #tpu.memory_space<vmem>>, vector<1x1x10xf32>,
    return
  }
  func.func @transform_0(%arg0: i32) -> (i32, i32, i32) {
    %c0_i32 = arith.constant 0 : i32
    %c0_i32_0 = arith.constant 0 : i32
    %c0_i32_1 = arith.constant 0 : i32
    return %arg0, %c0_i32, %c0_i32_0 : i32, i32, i32
  }
  func.func @transform_1(%arg0: i32) -> (i32, i32, i32) {
    %c0_i32 = arith.constant 0 : i32
    %c0_i32_0 = arith.constant 0 : i32
    %c0_i32_1 = arith.constant 0 : i32
    %c0_i32_2 = arith.constant 0 : i32
    return %c0_i32, %c0_i32_0, %c0_i32_1 : i32, i32, i32
  }
  func.func @transform_2(%arg0: i32) -> (i32, i32) {
    %c0_i32 = arith.constant 0 : i32
    %c0_i32_0 = arith.constant 0 : i32
    %c0_i32_1 = arith.constant 0 : i32
    return %c0_i32, %c0_i32_0 : i32, i32
  }
  func.func @transform_3(%arg0: i32) -> (i32, i32, i32) {
    %c0_i32 = arith.constant 0 : i32
    %c0_i32_0 = arith.constant 0 : i32
    %c0_i32_1 = arith.constant 0 : i32
    %c0_i32_2 = arith.constant 0 : i32
    return %c0_i32, %c0_i32_0, %c0_i32_1 : i32, i32, i32
  }
  func.func @transform_4(%arg0: i32) -> (i32, i32) {
    %c0_i32 = arith.constant 0 : i32
    %c0_i32_0 = arith.constant 0 : i32
    %c0_i32_1 = arith.constant 0 : i32
    return %c0_i32, %c0_i32_0 : i32, i32
  }
  func.func @transform_5(%arg0: i32) -> (i32, i32) {
    %c0_i32 = arith.constant 0 : i32
    %c0_i32_0 = arith.constant 0 : i32
    %c0_i32_1 = arith.constant 0 : i32
    return %c0_i32, %c0_i32_0 : i32, i32
  }
  func.func @transform_6(%arg0: i32) -> (i32, i32) {
    %c0_i32 = arith.constant 0 : i32
    %c0_i32_0 = arith.constant 0 : i32
    %c0_i32_1 = arith.constant 0 : i32
    return %c0_i32, %c0_i32_0 : i32, i32
  }
  func.func @transform_7(%arg0: i32) -> (i32, i32) {
    %c0_i32 = arith.constant 0 : i32
    %c0_i32_0 = arith.constant 0 : i32
    %c0_i32_1 = arith.constant 0 : i32
    return %c0_i32, %c0_i32_0 : i32, i32
  }
  func.func @transform_8(%arg0: i32) -> (i32, i32) {
    %c0_i32 = arith.constant 0 : i32
    %c0_i32_0 = arith.constant 0 : i32
    %c0_i32_1 = arith.constant 0 : i32
    return %c0_i32, %c0_i32_0 : i32, i32
  }
  func.func @transform_9(%arg0: i32) -> (i32, i32, i32) {
    %c0_i32 = arith.constant 0 : i32
    %c0_i32_0 = arith.constant 0 : i32
    %c0_i32_1 = arith.constant 0 : i32
    return %arg0, %c0_i32, %c0_i32_0 : i32, i32, i32
  }
}

</mosaic_0001>

<llo_original>
// kernel: net_forward.1
$region0: #{net_forward.1}
  #allocation0 [shape = 'u32[]', space=smem, size = 0x4, offset = 0x4, fixed_abs, tag = 'smem constant byte address 0x4 - core index']
  #allocation1 [shape = 'u32[72,128]{1,0:T(1,128)}', space=vmem, size = 0x9000, scoped, tag = 'internal scratch']
  %s0 = inlined_call_operand.vmem [shape: bf16[2,32,96], index: 0, kind: input, shape index: {}]
  %s1 = inlined_call_operand.hbm [shape: bf16[5,96,256], index: 1, kind: input, shape index: {}]
  %s2 = inlined_call_operand.vmem [shape: f32[1,128], index: 2, kind: input, shape index: {}]
  %s3 = inlined_call_operand.vmem [shape: bf16[5,128,256], index: 3, kind: input, shape index: {}]
  %s4 = inlined_call_operand.vmem [shape: f32[1,128], index: 4, kind: input, shape index: {}]
  %s5 = inlined_call_operand.hbm [shape: bf16[128,1280], index: 5, kind: input, shape index: {}]
  %s6 = inlined_call_operand.vmem [shape: f32[1,256], index: 6, kind: input, shape index: {}]
  %s7 = inlined_call_operand.vmem [shape: bf16[256,10], index: 7, kind: input, shape index: {}]
  %s8 = inlined_call_operand.vmem [shape: f32[1,10], index: 8, kind: input, shape index: {}]
  %s9 = inlined_call_operand.hbm [shape: f32[2,1,10], index: 9, kind: output, shape index: {}]
  %s10 = sld [smem:[#allocation0]]
  $region77: #{net_forward.1} parent=0
    _
  %s12 = ssub.s32 1, %s10
  %s13 = scalar_select 0, %s12, %s10
  $region1: #{net_forward.1} parent=0
    #allocation2 [shape = 'u8[245760]{0}', space=vmem, size = 0x3c000, scoped, tag = 'input window, operand 1, single buffered']
    #allocation3 [shape = 's32[2]{0}', space=sflag, size = 0x8, scoped, tag = 'scoped memory for net_forward.1']
    #allocation4 [shape = 's32[2]{0}', space=sflag, size = 0x8, scoped, tag = 'scoped memory for net_forward.1']
    #allocation5 [shape = 'u8[327680]{0}', space=vmem, size = 0x50000, scoped, tag = 'input window, operand 5, single buffered']
    #allocation6 [shape = 's32[1]{0}', space=sflag, size = 0x4, scoped, tag = 'scoped memory for net_forward.1']
    #allocation7 [shape = 'u8[1024]{0}', space=vmem, size = 0x400, scoped, tag = 'output window, operand 0']
    %14 = vsyncpa [#allocation3], 0
    %15 = vsyncpa [#allocation6], 0
    %16 = vsyncpa [#allocation4], 0
    %s17 = scalar_lea.sflag [#allocation4], 1
    %18 = vsyncpa %s17, 0
    loop: start=0, step=1, limit=4
    $region2: #{net_forward.1} parent=1 // loop_pre_header
      _
    $region3: #{net_forward.1} parent=1 // loop_header
      %s20 = sphi 0, %s24
      %p21 = scmp.ge.s32.totalorder %s20, 4
      %s30 = sphi 0, %s32
      %s33 = sphi 0, %s30
      %s34 = sphi 0, %s33
      %s50 = sphi 0, %s34
      %s54 = sphi 0, %s54
      %s56 = sphi 0, %s54
      %s57 = sphi 0, %s56
      %s71 = sphi 0, %s57
      %s75 = sphi 0, %s75
      %s77 = sphi 0, %s75
      %s78 = sphi 0, %s77
      %s92 = sphi 0, %s78
      %s96 = sphi 0, %s96
      %s98 = sphi 0, %s96
      %s99 = sphi 0, %s98
      %s113 = sphi 0, %s99
      %s117 = sphi 0, %s117
      %s119 = sphi 0, %s117
      %s120 = sphi 0, %s119
      %s134 = sphi 0, %s120
      %s138 = sphi 0, %s138
      %s140 = sphi 0, %s138
      %s141 = sphi 0, %s140
      %s155 = sphi 0, %s141
      %s159 = sphi 0, %s159
      %s161 = sphi 0, %s159
      %s162 = sphi 0, %s161
      %s176 = sphi 0, %s162
      %s180 = sphi 0, %s180
      %s182 = sphi 0, %s180
      %s183 = sphi 0, %s182
      %s197 = sphi 0, %s183
      %s201 = sphi 0, %s201
      %s203 = sphi 0, %s201
      %s204 = sphi 0, %s203
      %s218 = sphi 0, %s204
      %s224 = sphi 0, %s226
      %s227 = sphi 0, %s224
      %s228 = sphi 0, %s227
      %s244 = sphi 0, %s228
    $region4: #{net_forward.1} parent=1 // loop_header_branch
      %23 = sbr.rel (%p21) target = $region8
    $region5: #{net_forward.1} parent=1 // loop_body
      %s25 = ssub.s32 %s20, 1
      %s26 = ssub.s32 %s20, 2
      %s27 = sadd.s32 %s20, 1
      %s28 = ssub.s32 %s20, %s27
      %p29 = scmp.eq.s32.totalorder %s28, 0
      %s31 = sadd.s32 %s30, 1
      %s32 = scalar_select %p29, %s30, %s31
      %p35 = pneg %p29
      %p36 = scmp.eq.s32.totalorder %s20, 1
      %p37 = por %p35, %p36
      %p38 = scmp.ne.s32.totalorder %s30, %s33
      %p39 = scmp.eq.s32.totalorder %s20, 0
      %p40 = por %p38, %p39
      %p41 = scmp.ne.s32.totalorder %s30, %s33
      %p42 = scmp.eq.s32.totalorder %s25, 1
      %p43 = por %p41, %p42
      %p44 = scmp.ne.s32.totalorder %s33, %s34
      %p45 = scmp.eq.s32.totalorder %s25, 0
      %p46 = por %p44, %p45
      %p47 = scmp.ne.s32.totalorder %s33, %s34
      %p48 = scmp.eq.s32.totalorder %s26, 1
      %p49 = por %p47, %p48
      %p51 = scmp.ne.s32.totalorder %s34, %s50
      %p52 = scmp.eq.s32.totalorder %s26, 0
      %p53 = por %p51, %p52
      %s55 = sadd.s32 %s54, 1
      %p58 = scmp.eq.s32.totalorder %s20, 1
      %p59 = scmp.ne.s32.totalorder %s54, %s56
      %p60 = scmp.eq.s32.totalorder %s20, 0
      %p61 = por %p59, %p60
      %p62 = scmp.ne.s32.totalorder %s54, %s56
      %p63 = scmp.eq.s32.totalorder %s25, 1
      %p64 = por %p62, %p63
      %p65 = scmp.ne.s32.totalorder %s56, %s57
      %p66 = scmp.eq.s32.totalorder %s25, 0
      %p67 = por %p65, %p66
      %p68 = scmp.ne.s32.totalorder %s56, %s57
      %p69 = scmp.eq.s32.totalorder %s26, 1
      %p70 = por %p68, %p69
      %p72 = scmp.ne.s32.totalorder %s57, %s71
      %p73 = scmp.eq.s32.totalorder %s26, 0
      %p74 = por %p72, %p73
      %s76 = sadd.s32 %s75, 1
      %p79 = scmp.eq.s32.totalorder %s20, 1
      %p80 = scmp.ne.s32.totalorder %s75, %s77
      %p81 = scmp.eq.s32.totalorder %s20, 0
      %p82 = por %p80, %p81
      %p83 = scmp.ne.s32.totalorder %s75, %s77
      %p84 = scmp.eq.s32.totalorder %s25, 1
      %p85 = por %p83, %p84
      %p86 = scmp.ne.s32.totalorder %s77, %s78
      %p87 = scmp.eq.s32.totalorder %s25, 0
      %p88 = por %p86, %p87
      %p89 = scmp.ne.s32.totalorder %s77, %s78
      %p90 = scmp.eq.s32.totalorder %s26, 1
      %p91 = por %p89, %p90
      %p93 = scmp.ne.s32.totalorder %s78, %s92
      %p94 = scmp.eq.s32.totalorder %s26, 0
      %p95 = por %p93, %p94
      %s97 = sadd.s32 %s96, 1
      %p100 = scmp.eq.s32.totalorder %s20, 1
      %p101 = scmp.ne.s32.totalorder %s96, %s98
      %p102 = scmp.eq.s32.totalorder %s20, 0
      %p103 = por %p101, %p102
      %p104 = scmp.ne.s32.totalorder %s96, %s98
      %p105 = scmp.eq.s32.totalorder %s25, 1
      %p106 = por %p104, %p105
      %p107 = scmp.ne.s32.totalorder %s98, %s99
      %p108 = scmp.eq.s32.totalorder %s25, 0
      %p109 = por %p107, %p108
      %p110 = scmp.ne.s32.totalorder %s98, %s99
      %p111 = scmp.eq.s32.totalorder %s26, 1
      %p112 = por %p110, %p111
      %p114 = scmp.ne.s32.totalorder %s99, %s113
      %p115 = scmp.eq.s32.totalorder %s26, 0
      %p116 = por %p114, %p115
      %s118 = sadd.s32 %s117, 1
      %p121 = scmp.eq.s32.totalorder %s20, 1
      %p122 = scmp.ne.s32.totalorder %s117, %s119
      %p123 = scmp.eq.s32.totalorder %s20, 0
      %p124 = por %p122, %p123
      %p125 = scmp.ne.s32.totalorder %s117, %s119
      %p126 = scmp.eq.s32.totalorder %s25, 1
      %p127 = por %p125, %p126
      %p128 = scmp.ne.s32.totalorder %s119, %s120
      %p129 = scmp.eq.s32.totalorder %s25, 0
      %p130 = por %p128, %p129
      %p131 = scmp.ne.s32.totalorder %s119, %s120
      %p132 = scmp.eq.s32.totalorder %s26, 1
      %p133 = por %p131, %p132
      %p135 = scmp.ne.s32.totalorder %s120, %s134
      %p136 = scmp.eq.s32.totalorder %s26, 0
      %p137 = por %p135, %p136
      %s139 = sadd.s32 %s138, 1
      %p142 = scmp.eq.s32.totalorder %s20, 1
      %p143 = scmp.ne.s32.totalorder %s138, %s140
      %p144 = scmp.eq.s32.totalorder %s20, 0
      %p145 = por %p143, %p144
      %p146 = scmp.ne.s32.totalorder %s138, %s140
      %p147 = scmp.eq.s32.totalorder %s25, 1
      %p148 = por %p146, %p147
      %p149 = scmp.ne.s32.totalorder %s140, %s141
      %p150 = scmp.eq.s32.totalorder %s25, 0
      %p151 = por %p149, %p150
      %p152 = scmp.ne.s32.totalorder %s140, %s141
      %p153 = scmp.eq.s32.totalorder %s26, 1
      %p154 = por %p152, %p153
      %p156 = scmp.ne.s32.totalorder %s141, %s155
      %p157 = scmp.eq.s32.totalorder %s26, 0
      %p158 = por %p156, %p157
      %s160 = sadd.s32 %s159, 1
      %p163 = scmp.eq.s32.totalorder %s20, 1
      %p164 = scmp.ne.s32.totalorder %s159, %s161
      %p165 = scmp.eq.s32.totalorder %s20, 0
      %p166 = por %p164, %p165
      %p167 = scmp.ne.s32.totalorder %s159, %s161
      %p168 = scmp.eq.s32.totalorder %s25, 1
      %p169 = por %p167, %p168
      %p170 = scmp.ne.s32.totalorder %s161, %s162
      %p171 = scmp.eq.s32.totalorder %s25, 0
      %p172 = por %p170, %p171
      %p173 = scmp.ne.s32.totalorder %s161, %s162
      %p174 = scmp.eq.s32.totalorder %s26, 1
      %p175 = por %p173, %p174
      %p177 = scmp.ne.s32.totalorder %s162, %s176
      %p178 = scmp.eq.s32.totalorder %s26, 0
      %p179 = por %p177, %p178
      %s181 = sadd.s32 %s180, 1
      %p184 = scmp.eq.s32.totalorder %s20, 1
      %p185 = scmp.ne.s32.totalorder %s180, %s182
      %p186 = scmp.eq.s32.totalorder %s20, 0
      %p187 = por %p185, %p186
      %p188 = scmp.ne.s32.totalorder %s180, %s182
      %p189 = scmp.eq.s32.totalorder %s25, 1
      %p190 = por %p188, %p189
      %p191 = scmp.ne.s32.totalorder %s182, %s183
      %p192 = scmp.eq.s32.totalorder %s25, 0
      %p193 = por %p191, %p192
      %p194 = scmp.ne.s32.totalorder %s182, %s183
      %p195 = scmp.eq.s32.totalorder %s26, 1
      %p196 = por %p194, %p195
      %p198 = scmp.ne.s32.totalorder %s183, %s197
      %p199 = scmp.eq.s32.totalorder %s26, 0
      %p200 = por %p198, %p199
      %s202 = sadd.s32 %s201, 1
      %p205 = scmp.eq.s32.totalorder %s20, 1
      %p206 = scmp.ne.s32.totalorder %s201, %s203
      %p207 = scmp.eq.s32.totalorder %s20, 0
      %p208 = por %p206, %p207
      %p209 = scmp.ne.s32.totalorder %s201, %s203
      %p210 = scmp.eq.s32.totalorder %s25, 1
      %p211 = por %p209, %p210
      %p212 = scmp.ne.s32.totalorder %s203, %s204
      %p213 = scmp.eq.s32.totalorder %s25, 0
      %p214 = por %p212, %p213
      %p215 = scmp.ne.s32.totalorder %s203, %s204
      %p216 = scmp.eq.s32.totalorder %s26, 1
      %p217 = por %p215, %p216
      %p219 = scmp.ne.s32.totalorder %s204, %s218
      %p220 = scmp.eq.s32.totalorder %s26, 0
      %p221 = por %p219, %p220
      %s222 = ssub.s32 %s20, %s27
      %p223 = scmp.eq.s32.totalorder %s222, 0
      %s225 = sadd.s32 %s224, 1
      %s226 = scalar_select %p223, %s224, %s225
      %p229 = pneg %p223
      %p230 = scmp.eq.s32.totalorder %s20, 1
      %p231 = por %p229, %p230
      %p232 = scmp.ne.s32.totalorder %s224, %s227
      %p233 = scmp.eq.s32.totalorder %s20, 0
      %p234 = por %p232, %p233
      %p235 = scmp.ne.s32.totalorder %s224, %s227
      %p236 = scmp.eq.s32.totalorder %s25, 1
      %p237 = por %p235, %p236
      %p238 = scmp.ne.s32.totalorder %s227, %s228
      %p239 = scmp.eq.s32.totalorder %s25, 0
      %p240 = por %p238, %p239
      %p241 = scmp.ne.s32.totalorder %s227, %s228
      %p242 = scmp.eq.s32.totalorder %s26, 1
      %p243 = por %p241, %p242
      %p245 = scmp.ne.s32.totalorder %s228, %s244
      %p246 = scmp.eq.s32.totalorder %s26, 0
      %p247 = por %p245, %p246
      %p248 = scmp.le.s32.totalorder 1, %s20
      %p249 = scmp.lt.s32.totalorder %s20, 3
      %p250 = pnand %p248, %p249
      %p251 = pneg %p250
      // Predicated region
      $region9: #{net_forward.1} parent=5 // pred_check
        _
      $region10: #{net_forward.1} parent=5 // pred_check_branch
        %253 = sbr.rel (%p250) target = $region12
      $region11: #{net_forward.1} parent=5 // pred_region
        %s254 = ssub.s32 %s20, 1
        // Predicated region
        $region13: #{net_forward.1} parent=11 // pred_check
          %p255 = pneg %p67
        $region14: #{net_forward.1} parent=11 // pred_check_branch
          %257 = sbr.rel (%p255) target = $region16
        $region15: #{net_forward.1} parent=11 // pred_region
          %259 = vsyncadd [#allocation3], 0
          %s260 = sshll.u32 %s1, 4
          %s261 = int_to_ptr.hbm [resolvable:$true] %s260
          %s262 = sshll.u32 [#allocation2], 4
          %s263 = int_to_ptr.vmem [resolvable:$true] %s262
          %268 = dma.hbm_to_vmem [thread:$0]  %s261, 7680, %s263, [#allocation3], 128, 128, 8
        $region16: #{net_forward.1} parent=11 // pred_fallthru
          _
        // Predicated region
        $region17: #{net_forward.1} parent=11 // pred_check
          %p269 = pneg %p88
        $region18: #{net_forward.1} parent=11 // pred_check_branch
          %271 = sbr.rel (%p269) target = $region20
        $region19: #{net_forward.1} parent=11 // pred_region
          _
        $region20: #{net_forward.1} parent=11 // pred_fallthru
          _
        // Predicated region
        $region21: #{net_forward.1} parent=11 // pred_check
          %p272 = pneg %p109
        $region22: #{net_forward.1} parent=11 // pred_check_branch
          %274 = sbr.rel (%p272) target = $region24
        $region23: #{net_forward.1} parent=11 // pred_region
          _
        $region24: #{net_forward.1} parent=11 // pred_fallthru
          _
        // Predicated region
        $region25: #{net_forward.1} parent=11 // pred_check
          %p275 = pneg %p130
        $region26: #{net_forward.1} parent=11 // pred_check_branch
          %277 = sbr.rel (%p275) target = $region28
        $region27: #{net_forward.1} parent=11 // pred_region
          _
        $region28: #{net_forward.1} parent=11 // pred_fallthru
          _
        // Predicated region
        $region29: #{net_forward.1} parent=11 // pred_check
          %p278 = pneg %p151
        $region30: #{net_forward.1} parent=11 // pred_check_branch
          %280 = sbr.rel (%p278) target = $region32
        $region31: #{net_forward.1} parent=11 // pred_region
          %282 = vsyncadd [#allocation6], 0
          %s283 = sshll.u32 %s5, 4
          %s284 = int_to_ptr.hbm [resolvable:$true] %s283
          %s285 = sshll.u32 [#allocation5], 4
          %s286 = int_to_ptr.vmem [resolvable:$true] %s285
          %291 = dma.hbm_to_vmem [thread:$0]  %s284, 10240, %s286, [#allocation6], 640, 640, 40
        $region32: #{net_forward.1} parent=11 // pred_fallthru
          _
        // Predicated region
        $region33: #{net_forward.1} parent=11 // pred_check
          %p292 = pneg %p172
        $region34: #{net_forward.1} parent=11 // pred_check_branch
          %294 = sbr.rel (%p292) target = $region36
        $region35: #{net_forward.1} parent=11 // pred_region
          _
        $region36: #{net_forward.1} parent=11 // pred_fallthru
          _
        // Predicated region
        $region37: #{net_forward.1} parent=11 // pred_check
          %p295 = pneg %p193
        $region38: #{net_forward.1} parent=11 // pred_check_branch
          %297 = sbr.rel (%p295) target = $region40
        $region39: #{net_forward.1} parent=11 // pred_region
          _
        $region40: #{net_forward.1} parent=11 // pred_fallthru
          _
        // Predicated region
        $region41: #{net_forward.1} parent=11 // pred_check
          %p298 = pneg %p214
        $region42: #{net_forward.1} parent=11 // pred_check_branch
          %300 = sbr.rel (%p298) target = $region44
        $region43: #{net_forward.1} parent=11 // pred_region
          _
        $region44: #{net_forward.1} parent=11 // pred_fallthru
          _
      $region12: #{net_forward.1} parent=5 // pred_fallthru
        _
      %p301 = scmp.lt.s32.totalorder %s20, 2
      // Predicated region
      $region45: #{net_forward.1} parent=5 // pred_check
        %p302 = pneg %p301
      $region46: #{net_forward.1} parent=5 // pred_check_branch
        %304 = sbr.rel (%p302) target = $region48
      $region47: #{net_forward.1} parent=5 // pred_region
        // Predicated region
        $region49: #{net_forward.1} parent=47 // pred_check
          %p305 = pneg %p40
        $region50: #{net_forward.1} parent=47 // pred_check_branch
          %307 = sbr.rel (%p305) target = $region52
        $region51: #{net_forward.1} parent=47 // pred_region
          %p308 = scmp.lt.s32.totalorder %s20, 1
          %s309 = scalar_select %p308, %s20, 1
          %s310 = smul.addr %s309, 4
          %s311 = smul.addr %s310, 4
          %s312 = scalar_lea.vmem %s0, %s311
        $region52: #{net_forward.1} parent=47 // pred_fallthru
          _
      $region48: #{net_forward.1} parent=5 // pred_fallthru
        _
      %p313 = scmp.le.s32.totalorder 1, %s20
      %p314 = scmp.lt.s32.totalorder %s20, 3
      %p315 = pnand %p313, %p314
      %p316 = pneg %p315
      // Predicated region
      $region53: #{net_forward.1} parent=5 // pred_check
        _
      $region54: #{net_forward.1} parent=5 // pred_check_branch
        %318 = sbr.rel (%p315) target = $region56
      $region55: #{net_forward.1} parent=5 // pred_region
        %s319 = ssub.s32 %s20, 1
        // Predicated region
        $region57: #{net_forward.1} parent=55 // pred_check
          %p320 = pneg %p67
        $region58: #{net_forward.1} parent=55 // pred_check_branch
          %322 = sbr.rel (%p320) target = $region60
        $region59: #{net_forward.1} parent=55 // pred_region
          %324 = dma.done [#allocation3], 7680
        $region60: #{net_forward.1} parent=55 // pred_fallthru
          _
        // Predicated region
        $region61: #{net_forward.1} parent=55 // pred_check
          %p325 = pneg %p151
        $region62: #{net_forward.1} parent=55 // pred_check_branch
          %327 = sbr.rel (%p325) target = $region64
        $region63: #{net_forward.1} parent=55 // pred_region
          %329 = dma.done [#allocation6], 10240
        $region64: #{net_forward.1} parent=55 // pred_fallthru
          _
        %p330 = scmp.lt.s32.totalorder %s25, 1
        %s331 = scalar_select %p330, %s25, 1
        %s332 = smul.addr %s331, 4
        %s333 = smul.addr %s332, 4
        %s334 = scalar_lea.vmem %s0, %s333
        %p335 = pneg %p46
        %p336 = pneg %p43
        %p337 = pneg %p67
        %p338 = pneg %p64
        %p339 = pneg %p88
        %p340 = pneg %p85
        %p341 = pneg %p109
        %p342 = pneg %p106
        %p343 = pneg %p130
        %p344 = pneg %p127
        %p345 = pneg %p151
        %p346 = pneg %p148
        %p347 = pneg %p172
        %p348 = pneg %p169
        %p349 = pneg %p193
        %p350 = pneg %p190
        %p351 = pneg %p214
        %p352 = pneg %p211
        %p353 = pneg %p240
        %p354 = pneg %p237
        %s355 = sand.u32 %s227, 1
        %s356 = scalar_lea.sflag [#allocation4], %s355
        %s357 = sand.u32 %s227, 1
        %s358 = scalar_lea.vmem [#allocation7], %s357
        %p359 = scmp.lt.s32.totalorder %s25, 1
        %s360 = scalar_select %p359, %s25, 1
        %s361 = smul.addr %s360, 4
        %s362 = smul.addr %s361, 4
        %s363 = scalar_lea.vmem %s0, %s362
        %v365 = vld [vmem:[#allocation2] sm:$0xff]
        %v366 = vld [vmem:[#allocation2 + $0x8] sm:$0xff]
        %v367 = vld [vmem:[#allocation2 + $0x10] sm:$0xff]
        %v368 = vld [vmem:[#allocation2 + $0x18] sm:$0xff]
        %v369 = vld [vmem:[#allocation2 + $0x20] sm:$0xff]
        %v370 = vld [vmem:[#allocation2 + $0x28] sm:$0xff]
        %v371 = vld [vmem:[#allocation2 + $0x30] sm:$0xff]
        %v372 = vld [vmem:[#allocation2 + $0x38] sm:$0xff]
        %v373 = vld [vmem:[#allocation2 + $0x40] sm:$0xff]
        %v374 = vld [vmem:[#allocation2 + $0x48] sm:$0xff]
        %v375 = vld [vmem:[#allocation2 + $0x50] sm:$0xff]
        %v376 = vld [vmem:[#allocation2 + $0x58] sm:$0xff]
        %v377 = vld [vmem:[%s363] sm:$0xf]
        %v378 = vld [vmem:[%s363 + $0x4] sm:$0xf]
        %v379 = vld [vmem:[%s363 + $0x8] sm:$0xf]
        %v380 = vld [vmem:[%s363 + $0xc] sm:$0xf]
        %s381 = scalar_lea.vmem [#allocation2], 96
        %v382 = vld [vmem:[%s381] sm:$0xff]
        %v383 = vld [vmem:[%s381 + $0x8] sm:$0xff]
        %v384 = vld [vmem:[%s381 + $0x10] sm:$0xff]
        %v385 = vld [vmem:[%s381 + $0x18] sm:$0xff]
        %v386 = vld [vmem:[%s381 + $0x20] sm:$0xff]
        %v387 = vld [vmem:[%s381 + $0x28] sm:$0xff]
        %v388 = vld [vmem:[%s381 + $0x30] sm:$0xff]
        %v389 = vld [vmem:[%s381 + $0x38] sm:$0xff]
        %v390 = vld [vmem:[%s381 + $0x40] sm:$0xff]
        %v391 = vld [vmem:[%s381 + $0x48] sm:$0xff]
        %v392 = vld [vmem:[%s381 + $0x50] sm:$0xff]
        %v393 = vld [vmem:[%s381 + $0x58] sm:$0xff]
        %v406 = vunpack.c.l.b16 %v382
        %v407 = vunpack.c.h.b16 %v382
        %v408 = vunpack.c.l.b16 %v383
        %v409 = vunpack.c.h.b16 %v383
        %v410 = vunpack.c.l.b16 %v384
        %v411 = vunpack.c.h.b16 %v384
        %v412 = vunpack.c.l.b16 %v385
        %v413 = vunpack.c.h.b16 %v385
        %v414 = vunpack.c.l.b16 %v386
        %v415 = vunpack.c.h.b16 %v386
        %v416 = vunpack.c.l.b16 %v387
        %v417 = vunpack.c.h.b16 %v387
        %v418 = vunpack.c.l.b16 %v388
        %v419 = vunpack.c.h.b16 %v388
        %v420 = vunpack.c.l.b16 %v389
        %v421 = vunpack.c.h.b16 %v389
        %v422 = vunpack.c.l.b16 %v390
        %v423 = vunpack.c.h.b16 %v390
        %v424 = vunpack.c.l.b16 %v391
        %v425 = vunpack.c.h.b16 %v391
        %v426 = vunpack.c.l.b16 %v392
        %v427 = vunpack.c.h.b16 %v392
        %v428 = vunpack.c.l.b16 %v393
        %v429 = vunpack.c.h.b16 %v393
        %v430 = vpack.c.b16 %v408, %v406
        %v431 = vpack.c.b16 %v409, %v407
        %v432 = vpack.c.b16 %v412, %v410
        %v433 = vpack.c.b16 %v413, %v411
        %v434 = vpack.c.b16 %v416, %v414
        %v435 = vpack.c.b16 %v417, %v415
        %v436 = vpack.c.b16 %v420, %v418
        %v437 = vpack.c.b16 %v421, %v419
        %v438 = vpack.c.b16 %v424, %v422
        %v439 = vpack.c.b16 %v425, %v423
        %v440 = vpack.c.b16 %v428, %v426
        %v441 = vpack.c.b16 %v429, %v427
        %vm454 = vcmask 785408
        %v456 = vsel %vm454, %v378, 0
        %458 = vmatpush.bf16.msra.mxu0 0
        %459 = vmatpush.bf16.msra.mxu0 0
        %460 = vmatpush.bf16.msra.mxu0 %v440
        %461 = vmatpush.bf16.msra.mxu0 %v438
        %462 = vmatpush.bf16.msra.mxu0 %v436
        %463 = vmatpush.bf16.msra.mxu0 %v434
        %464 = vmatpush.bf16.msra.mxu0 %v432
        %465 = vmatpush.bf16.msra.mxu0 %v430
        %466 = vmatmul.bf16.gmra.mxu0 %v456
        %v467 = vpop.f32.mrf.mxu0
        %v468 = vadd.f32 0.0, %v467
        %v469 = vpop.f32.mrf.mxu0
        %470 = vdwg.mxu0
        %471 = vmatpush.bf16.msra.mxu0 0
        %472 = vmatpush.bf16.msra.mxu0 0
        %473 = vmatpush.bf16.msra.mxu0 %v441
        %474 = vmatpush.bf16.msra.mxu0 %v439
        %475 = vmatpush.bf16.msra.mxu0 %v437
        %476 = vmatpush.bf16.msra.mxu0 %v435
        %477 = vmatpush.bf16.msra.mxu0 %v433
        %478 = vmatpush.bf16.msra.mxu0 %v431
        %479 = vmatmul.bf16.gmra.mxu0 %v456
        %v480 = vpop.f32.mrf.mxu0
        %v481 = vadd.f32 0.0, %v480
        %v482 = vpop.f32.mrf.mxu0
        %483 = vdwg.mxu0
        %v496 = vunpack.c.l.b16 %v365
        %v497 = vunpack.c.h.b16 %v365
        %v498 = vunpack.c.l.b16 %v366
        %v499 = vunpack.c.h.b16 %v366
        %v500 = vunpack.c.l.b16 %v367
        %v501 = vunpack.c.h.b16 %v367
        %v502 = vunpack.c.l.b16 %v368
        %v503 = vunpack.c.h.b16 %v368
        %v504 = vunpack.c.l.b16 %v369
        %v505 = vunpack.c.h.b16 %v369
        %v506 = vunpack.c.l.b16 %v370
        %v507 = vunpack.c.h.b16 %v370
        %v508 = vunpack.c.l.b16 %v371
        %v509 = vunpack.c.h.b16 %v371
        %v510 = vunpack.c.l.b16 %v372
        %v511 = vunpack.c.h.b16 %v372
        %v512 = vunpack.c.l.b16 %v373
        %v513 = vunpack.c.h.b16 %v373
        %v514 = vunpack.c.l.b16 %v374
        %v515 = vunpack.c.h.b16 %v374
        %v516 = vunpack.c.l.b16 %v375
        %v517 = vunpack.c.h.b16 %v375
        %v518 = vunpack.c.l.b16 %v376
        %v519 = vunpack.c.h.b16 %v376
        %v520 = vpack.c.b16 %v498, %v496
        %v521 = vpack.c.b16 %v499, %v497
        %v522 = vpack.c.b16 %v502, %v500
        %v523 = vpack.c.b16 %v503, %v501
        %v524 = vpack.c.b16 %v506, %v504
        %v525 = vpack.c.b16 %v507, %v505
        %v526 = vpack.c.b16 %v510, %v508
        %v527 = vpack.c.b16 %v511, %v509
        %v528 = vpack.c.b16 %v514, %v512
        %v529 = vpack.c.b16 %v515, %v513
        %v530 = vpack.c.b16 %v518, %v516
        %v531 = vpack.c.b16 %v519, %v517
        %v545 = vsel %vm454, %v377, 0
        %547 = vmatpush.bf16.msra.mxu0 0
        %548 = vmatpush.bf16.msra.mxu0 0
        %549 = vmatpush.bf16.msra.mxu0 %v530
        %550 = vmatpush.bf16.msra.mxu0 %v528
        %551 = vmatpush.bf16.msra.mxu0 %v526
        %552 = vmatpush.bf16.msra.mxu0 %v524
        %553 = vmatpush.bf16.msra.mxu0 %v522
        %554 = vmatpush.bf16.msra.mxu0 %v520
        %555 = vmatmul.bf16.gmra.mxu0 %v545
        %v556 = vpop.f32.mrf.mxu0
        %v557 = vadd.f32 %v468, %v556
        %v558 = vpop.f32.mrf.mxu0
        %559 = vdwg.mxu0
        %560 = vmatpush.bf16.msra.mxu0 0
        %561 = vmatpush.bf16.msra.mxu0 0
        %562 = vmatpush.bf16.msra.mxu0 %v531
        %563 = vmatpush.bf16.msra.mxu0 %v529
        %564 = vmatpush.bf16.msra.mxu0 %v527
        %565 = vmatpush.bf16.msra.mxu0 %v525
        %566 = vmatpush.bf16.msra.mxu0 %v523
        %567 = vmatpush.bf16.msra.mxu0 %v521
        %568 = vmatmul.bf16.gmra.mxu0 %v545
        %v569 = vpop.f32.mrf.mxu0
        %v570 = vadd.f32 %v481, %v569
        %v571 = vpop.f32.mrf.mxu0
        %572 = vdwg.mxu0
        %v574 = vsel %vm454, %v379, 0
        %576 = vmatpush.bf16.msra.mxu0 0
        %577 = vmatpush.bf16.msra.mxu0 0
        %578 = vmatpush.bf16.msra.mxu0 %v440
        %579 = vmatpush.bf16.msra.mxu0 %v438
        %580 = vmatpush.bf16.msra.mxu0 %v436
        %581 = vmatpush.bf16.msra.mxu0 %v434
        %582 = vmatpush.bf16.msra.mxu0 %v432
        %583 = vmatpush.bf16.msra.mxu0 %v430
        %584 = vmatmul.bf16.gmra.mxu0 %v574
        %v585 = vpop.f32.mrf.mxu0
        %v586 = vadd.f32 0.0, %v585
        %v587 = vpop.f32.mrf.mxu0
        %588 = vdwg.mxu0
        %589 = vmatpush.bf16.msra.mxu0 0
        %590 = vmatpush.bf16.msra.mxu0 0
        %591 = vmatpush.bf16.msra.mxu0 %v441
        %592 = vmatpush.bf16.msra.mxu0 %v439
        %593 = vmatpush.bf16.msra.mxu0 %v437
        %594 = vmatpush.bf16.msra.mxu0 %v435
        %595 = vmatpush.bf16.msra.mxu0 %v433
        %596 = vmatpush.bf16.msra.mxu0 %v431
        %597 = vmatmul.bf16.gmra.mxu0 %v574
        %v598 = vpop.f32.mrf.mxu0
        %v599 = vadd.f32 0.0, %v598
        %v600 = vpop.f32.mrf.mxu0
        %601 = vdwg.mxu0
        %602 = vmatpush.bf16.msra.mxu0 0
        %603 = vmatpush.bf16.msra.mxu0 0
        %604 = vmatpush.bf16.msra.mxu0 %v530
        %605 = vmatpush.bf16.msra.mxu0 %v528
        %606 = vmatpush.bf16.msra.mxu0 %v526
        %607 = vmatpush.bf16.msra.mxu0 %v524
        %608 = vmatpush.bf16.msra.mxu0 %v522
        %609 = vmatpush.bf16.msra.mxu0 %v520
        %610 = vmatmul.bf16.gmra.mxu0 %v456
        %v611 = vpop.f32.mrf.mxu0
        %v612 = vadd.f32 %v586, %v611
        %v613 = vpop.f32.mrf.mxu0
        %614 = vdwg.mxu0
        %615 = vmatpush.bf16.msra.mxu0 0
        %616 = vmatpush.bf16.msra.mxu0 0
        %617 = vmatpush.bf16.msra.mxu0 %v531
        %618 = vmatpush.bf16.msra.mxu0 %v529
        %619 = vmatpush.bf16.msra.mxu0 %v527
        %620 = vmatpush.bf16.msra.mxu0 %v525
        %621 = vmatpush.bf16.msra.mxu0 %v523
        %622 = vmatpush.bf16.msra.mxu0 %v521
        %623 = vmatmul.bf16.gmra.mxu0 %v456
        %v624 = vpop.f32.mrf.mxu0
        %v625 = vadd.f32 %v599, %v624
        %v626 = vpop.f32.mrf.mxu0
        %627 = vdwg.mxu0
        %v629 = vsel %vm454, %v380, 0
        %631 = vmatpush.bf16.msra.mxu0 0
        %632 = vmatpush.bf16.msra.mxu0 0
        %633 = vmatpush.bf16.msra.mxu0 %v440
        %634 = vmatpush.bf16.msra.mxu0 %v438
        %635 = vmatpush.bf16.msra.mxu0 %v436
        %636 = vmatpush.bf16.msra.mxu0 %v434
        %637 = vmatpush.bf16.msra.mxu0 %v432
        %638 = vmatpush.bf16.msra.mxu0 %v430
        %639 = vmatmul.bf16.gmra.mxu0 %v629
        %v640 = vpop.f32.mrf.mxu0
        %v641 = vadd.f32 0.0, %v640
        %v642 = vpop.f32.mrf.mxu0
        %643 = vdwg.mxu0
        %644 = vmatpush.bf16.msra.mxu0 0
        %645 = vmatpush.bf16.msra.mxu0 0
        %646 = vmatpush.bf16.msra.mxu0 %v441
        %647 = vmatpush.bf16.msra.mxu0 %v439
        %648 = vmatpush.bf16.msra.mxu0 %v437
        %649 = vmatpush.bf16.msra.mxu0 %v435
        %650 = vmatpush.bf16.msra.mxu0 %v433
        %651 = vmatpush.bf16.msra.mxu0 %v431
        %652 = vmatmul.bf16.gmra.mxu0 %v629
        %v653 = vpop.f32.mrf.mxu0
        %v654 = vadd.f32 0.0, %v653
        %v655 = vpop.f32.mrf.mxu0
        %656 = vdwg.mxu0
        %657 = vmatpush.bf16.msra.mxu0 0
        %658 = vmatpush.bf16.msra.mxu0 0
        %659 = vmatpush.bf16.msra.mxu0 %v530
        %660 = vmatpush.bf16.msra.mxu0 %v528
        %661 = vmatpush.bf16.msra.mxu0 %v526
        %662 = vmatpush.bf16.msra.mxu0 %v524
        %663 = vmatpush.bf16.msra.mxu0 %v522
        %664 = vmatpush.bf16.msra.mxu0 %v520
        %665 = vmatmul.bf16.gmra.mxu0 %v574
        %v666 = vpop.f32.mrf.mxu0
        %v667 = vadd.f32 %v641, %v666
        %v668 = vpop.f32.mrf.mxu0
        %669 = vdwg.mxu0
        %670 = vmatpush.bf16.msra.mxu0 0
        %671 = vmatpush.bf16.msra.mxu0 0
        %672 = vmatpush.bf16.msra.mxu0 %v531
        %673 = vmatpush.bf16.msra.mxu0 %v529
        %674 = vmatpush.bf16.msra.mxu0 %v527
        %675 = vmatpush.bf16.msra.mxu0 %v525
        %676 = vmatpush.bf16.msra.mxu0 %v523
        %677 = vmatpush.bf16.msra.mxu0 %v521
        %678 = vmatmul.bf16.gmra.mxu0 %v574
        %v679 = vpop.f32.mrf.mxu0
        %v680 = vadd.f32 %v654, %v679
        %v681 = vpop.f32.mrf.mxu0
        %682 = vdwg.mxu0
        %v684 = vunpack.c.l.b16 %v377
        %v685 = vpack.c.b16 %v684, %v684
        %v687 = vshrl.u32 %v685, 16
        %v689 = vshll.u32 %v685, 16
        %v691 = vrot.slane %v689, 1
        %v692 = vor.u32 %v687, %v691
        %v694 = vsel %vm454, %v692, 0
        %696 = vmatpush.bf16.msra.mxu0 0
        %697 = vmatpush.bf16.msra.mxu0 0
        %698 = vmatpush.bf16.msra.mxu0 %v440
        %699 = vmatpush.bf16.msra.mxu0 %v438
        %700 = vmatpush.bf16.msra.mxu0 %v436
        %701 = vmatpush.bf16.msra.mxu0 %v434
        %702 = vmatpush.bf16.msra.mxu0 %v432
        %703 = vmatpush.bf16.msra.mxu0 %v430
        %704 = vmatmul.bf16.gmra.mxu0 %v694
        %v705 = vpop.f32.mrf.mxu0
        %v706 = vadd.f32 0.0, %v705
        %v707 = vpop.f32.mrf.mxu0
        %708 = vdwg.mxu0
        %709 = vmatpush.bf16.msra.mxu0 0
        %710 = vmatpush.bf16.msra.mxu0 0
        %711 = vmatpush.bf16.msra.mxu0 %v441
        %712 = vmatpush.bf16.msra.mxu0 %v439
        %713 = vmatpush.bf16.msra.mxu0 %v437
        %714 = vmatpush.bf16.msra.mxu0 %v435
        %715 = vmatpush.bf16.msra.mxu0 %v433
        %716 = vmatpush.bf16.msra.mxu0 %v431
        %717 = vmatmul.bf16.gmra.mxu0 %v694
        %v718 = vpop.f32.mrf.mxu0
        %v719 = vadd.f32 0.0, %v718
        %v720 = vpop.f32.mrf.mxu0
        %721 = vdwg.mxu0
        %722 = vmatpush.bf16.msra.mxu0 0
        %723 = vmatpush.bf16.msra.mxu0 0
        %724 = vmatpush.bf16.msra.mxu0 %v530
        %725 = vmatpush.bf16.msra.mxu0 %v528
        %726 = vmatpush.bf16.msra.mxu0 %v526
        %727 = vmatpush.bf16.msra.mxu0 %v524
        %728 = vmatpush.bf16.msra.mxu0 %v522
        %729 = vmatpush.bf16.msra.mxu0 %v520
        %730 = vmatmul.bf16.gmra.mxu0 %v629
        %v731 = vpop.f32.mrf.mxu0
        %v732 = vadd.f32 %v706, %v731
        %v733 = vpop.f32.mrf.mxu0
        %734 = vdwg.mxu0
        %735 = vmatpush.bf16.msra.mxu0 0
        %736 = vmatpush.bf16.msra.mxu0 0
        %737 = vmatpush.bf16.msra.mxu0 %v531
        %738 = vmatpush.bf16.msra.mxu0 %v529
        %739 = vmatpush.bf16.msra.mxu0 %v527
        %740 = vmatpush.bf16.msra.mxu0 %v525
        %741 = vmatpush.bf16.msra.mxu0 %v523
        %742 = vmatpush.bf16.msra.mxu0 %v521
        %743 = vmatmul.bf16.gmra.mxu0 %v629
        %v744 = vpop.f32.mrf.mxu0
        %v745 = vadd.f32 %v719, %v744
        %v746 = vpop.f32.mrf.mxu0
        %747 = vdwg.mxu0
        %s748 = scalar_lea.vmem [#allocation2], 192
        %v749 = vld [vmem:[%s748] sm:$0xff]
        %v750 = vld [vmem:[%s748 + $0x8] sm:$0xff]
        %v751 = vld [vmem:[%s748 + $0x10] sm:$0xff]
        %v752 = vld [vmem:[%s748 + $0x18] sm:$0xff]
        %v753 = vld [vmem:[%s748 + $0x20] sm:$0xff]
        %v754 = vld [vmem:[%s748 + $0x28] sm:$0xff]
        %v755 = vld [vmem:[%s748 + $0x30] sm:$0xff]
        %v756 = vld [vmem:[%s748 + $0x38] sm:$0xff]
        %v757 = vld [vmem:[%s748 + $0x40] sm:$0xff]
        %v758 = vld [vmem:[%s748 + $0x48] sm:$0xff]
        %v759 = vld [vmem:[%s748 + $0x50] sm:$0xff]
        %v760 = vld [vmem:[%s748 + $0x58] sm:$0xff]
        %v773 = vunpack.c.l.b16 %v749
        %v774 = vunpack.c.h.b16 %v749
        %v775 = vunpack.c.l.b16 %v750
        %v776 = vunpack.c.h.b16 %v750
        %v777 = vunpack.c.l.b16 %v751
        %v778 = vunpack.c.h.b16 %v751
        %v779 = vunpack.c.l.b16 %v752
        %v780 = vunpack.c.h.b16 %v752
        %v781 = vunpack.c.l.b16 %v753
        %v782 = vunpack.c.h.b16 %v753
        %v783 = vunpack.c.l.b16 %v754
        %v784 = vunpack.c.h.b16 %v754
        %v785 = vunpack.c.l.b16 %v755
        %v786 = vunpack.c.h.b16 %v755
        %v787 = vunpack.c.l.b16 %v756
        %v788 = vunpack.c.h.b16 %v756
        %v789 = vunpack.c.l.b16 %v757
        %v790 = vunpack.c.h.b16 %v757
        %v791 = vunpack.c.l.b16 %v758
        %v792 = vunpack.c.h.b16 %v758
        %v793 = vunpack.c.l.b16 %v759
        %v794 = vunpack.c.h.b16 %v759
        %v795 = vunpack.c.l.b16 %v760
        %v796 = vunpack.c.h.b16 %v760
        %v797 = vpack.c.b16 %v775, %v773
        %v798 = vpack.c.b16 %v776, %v774
        %v799 = vpack.c.b16 %v779, %v777
        %v800 = vpack.c.b16 %v780, %v778
        %v801 = vpack.c.b16 %v783, %v781
        %v802 = vpack.c.b16 %v784, %v782
        %v803 = vpack.c.b16 %v787, %v785
        %v804 = vpack.c.b16 %v788, %v786
        %v805 = vpack.c.b16 %v791, %v789
        %v806 = vpack.c.b16 %v792, %v790
        %v807 = vpack.c.b16 %v795, %v793
        %v808 = vpack.c.b16 %v796, %v794
        %821 = vmatpush.bf16.msra.mxu0 0
        %822 = vmatpush.bf16.msra.mxu0 0
        %823 = vmatpush.bf16.msra.mxu0 %v807
        %824 = vmatpush.bf16.msra.mxu0 %v805
        %825 = vmatpush.bf16.msra.mxu0 %v803
        %826 = vmatpush.bf16.msra.mxu0 %v801
        %827 = vmatpush.bf16.msra.mxu0 %v799
        %828 = vmatpush.bf16.msra.mxu0 %v797
        %829 = vmatmul.bf16.gmra.mxu0 %v574
        %v830 = vpop.f32.mrf.mxu0
        %v831 = vadd.f32 0.0, %v830
        %v832 = vpop.f32.mrf.mxu0
        %833 = vdwg.mxu0
        %834 = vmatpush.bf16.msra.mxu0 0
        %835 = vmatpush.bf16.msra.mxu0 0
        %836 = vmatpush.bf16.msra.mxu0 %v808
        %837 = vmatpush.bf16.msra.mxu0 %v806
        %838 = vmatpush.bf16.msra.mxu0 %v804
        %839 = vmatpush.bf16.msra.mxu0 %v802
        %840 = vmatpush.bf16.msra.mxu0 %v800
        %841 = vmatpush.bf16.msra.mxu0 %v798
        %842 = vmatmul.bf16.gmra.mxu0 %v574
        %v843 = vpop.f32.mrf.mxu0
        %v844 = vadd.f32 0.0, %v843
        %v845 = vpop.f32.mrf.mxu0
        %846 = vdwg.mxu0
        %v847 = vadd.f32 %v557, %v831
        %v848 = vadd.f32 %v570, %v844
        %849 = vmatpush.bf16.msra.mxu0 0
        %850 = vmatpush.bf16.msra.mxu0 0
        %851 = vmatpush.bf16.msra.mxu0 %v807
        %852 = vmatpush.bf16.msra.mxu0 %v805
        %853 = vmatpush.bf16.msra.mxu0 %v803
        %854 = vmatpush.bf16.msra.mxu0 %v801
        %855 = vmatpush.bf16.msra.mxu0 %v799
        %856 = vmatpush.bf16.msra.mxu0 %v797
        %857 = vmatmul.bf16.gmra.mxu0 %v629
        %v858 = vpop.f32.mrf.mxu0
        %v859 = vadd.f32 0.0, %v858
        %v860 = vpop.f32.mrf.mxu0
        %861 = vdwg.mxu0
        %862 = vmatpush.bf16.msra.mxu0 0
        %863 = vmatpush.bf16.msra.mxu0 0
        %864 = vmatpush.bf16.msra.mxu0 %v808
        %865 = vmatpush.bf16.msra.mxu0 %v806
        %866 = vmatpush.bf16.msra.mxu0 %v804
        %867 = vmatpush.bf16.msra.mxu0 %v802
        %868 = vmatpush.bf16.msra.mxu0 %v800
        %869 = vmatpush.bf16.msra.mxu0 %v798
        %870 = vmatmul.bf16.gmra.mxu0 %v629
        %v871 = vpop.f32.mrf.mxu0
        %v872 = vadd.f32 0.0, %v871
        %v873 = vpop.f32.mrf.mxu0
        %874 = vdwg.mxu0
        %v875 = vadd.f32 %v612, %v859
        %v876 = vadd.f32 %v625, %v872
        %877 = vmatpush.bf16.msra.mxu0 0
        %878 = vmatpush.bf16.msra.mxu0 0
        %879 = vmatpush.bf16.msra.mxu0 %v807
        %880 = vmatpush.bf16.msra.mxu0 %v805
        %881 = vmatpush.bf16.msra.mxu0 %v803
        %882 = vmatpush.bf16.msra.mxu0 %v801
        %883 = vmatpush.bf16.msra.mxu0 %v799
        %884 = vmatpush.bf16.msra.mxu0 %v797
        %885 = vmatmul.bf16.gmra.mxu0 %v694
        %v886 = vpop.f32.mrf.mxu0
        %v887 = vadd.f32 0.0, %v886
        %v888 = vpop.f32.mrf.mxu0
        %889 = vdwg.mxu0
        %890 = vmatpush.bf16.msra.mxu0 0
        %891 = vmatpush.bf16.msra.mxu0 0
        %892 = vmatpush.bf16.msra.mxu0 %v808
        %893 = vmatpush.bf16.msra.mxu0 %v806
        %894 = vmatpush.bf16.msra.mxu0 %v804
        %895 = vmatpush.bf16.msra.mxu0 %v802
        %896 = vmatpush.bf16.msra.mxu0 %v800
        %897 = vmatpush.bf16.msra.mxu0 %v798
        %898 = vmatmul.bf16.gmra.mxu0 %v694
        %v899 = vpop.f32.mrf.mxu0
        %v900 = vadd.f32 0.0, %v899
        %v901 = vpop.f32.mrf.mxu0
        %902 = vdwg.mxu0
        %v903 = vadd.f32 %v667, %v887
        %v904 = vadd.f32 %v680, %v900
        %v906 = vunpack.c.l.b16 %v378
        %v907 = vpack.c.b16 %v906, %v906
        %v909 = vshrl.u32 %v907, 16
        %v911 = vshll.u32 %v907, 16
        %v913 = vrot.slane %v911, 1
        %v914 = vor.u32 %v909, %v913
        %v916 = vsel %vm454, %v914, 0
        %918 = vmatpush.bf16.msra.mxu0 0
        %919 = vmatpush.bf16.msra.mxu0 0
        %920 = vmatpush.bf16.msra.mxu0 %v807
        %921 = vmatpush.bf16.msra.mxu0 %v805
        %922 = vmatpush.bf16.msra.mxu0 %v803
        %923 = vmatpush.bf16.msra.mxu0 %v801
        %924 = vmatpush.bf16.msra.mxu0 %v799
        %925 = vmatpush.bf16.msra.mxu0 %v797
        %926 = vmatmul.bf16.gmra.mxu0 %v916
        %v927 = vpop.f32.mrf.mxu0
        %v928 = vadd.f32 0.0, %v927
        %v929 = vpop.f32.mrf.mxu0
        %930 = vdwg.mxu0
        %931 = vmatpush.bf16.msra.mxu0 0
        %932 = vmatpush.bf16.msra.mxu0 0
        %933 = vmatpush.bf16.msra.mxu0 %v808
        %934 = vmatpush.bf16.msra.mxu0 %v806
        %935 = vmatpush.bf16.msra.mxu0 %v804
        %936 = vmatpush.bf16.msra.mxu0 %v802
        %937 = vmatpush.bf16.msra.mxu0 %v800
        %938 = vmatpush.bf16.msra.mxu0 %v798
        %939 = vmatmul.bf16.gmra.mxu0 %v916
        %v940 = vpop.f32.mrf.mxu0
        %v941 = vadd.f32 0.0, %v940
        %v942 = vpop.f32.mrf.mxu0
        %943 = vdwg.mxu0
        %v944 = vadd.f32 %v732, %v928
        %v945 = vadd.f32 %v745, %v941
        %s946 = scalar_lea.vmem [#allocation2], 288
        %v947 = vld [vmem:[%s946] sm:$0xff]
        %v948 = vld [vmem:[%s946 + $0x8] sm:$0xff]
        %v949 = vld [vmem:[%s946 + $0x10] sm:$0xff]
        %v950 = vld [vmem:[%s946 + $0x18] sm:$0xff]
        %v951 = vld [vmem:[%s946 + $0x20] sm:$0xff]
        %v952 = vld [vmem:[%s946 + $0x28] sm:$0xff]
        %v953 = vld [vmem:[%s946 + $0x30] sm:$0xff]
        %v954 = vld [vmem:[%s946 + $0x38] sm:$0xff]
        %v955 = vld [vmem:[%s946 + $0x40] sm:$0xff]
        %v956 = vld [vmem:[%s946 + $0x48] sm:$0xff]
        %v957 = vld [vmem:[%s946 + $0x50] sm:$0xff]
        %v958 = vld [vmem:[%s946 + $0x58] sm:$0xff]
        %v971 = vunpack.c.l.b16 %v947
        %v972 = vunpack.c.h.b16 %v947
        %v973 = vunpack.c.l.b16 %v948
        %v974 = vunpack.c.h.b16 %v948
        %v975 = vunpack.c.l.b16 %v949
        %v976 = vunpack.c.h.b16 %v949
        %v977 = vunpack.c.l.b16 %v950
        %v978 = vunpack.c.h.b16 %v950
        %v979 = vunpack.c.l.b16 %v951
        %v980 = vunpack.c.h.b16 %v951
        %v981 = vunpack.c.l.b16 %v952
        %v982 = vunpack.c.h.b16 %v952
        %v983 = vunpack.c.l.b16 %v953
        %v984 = vunpack.c.h.b16 %v953
        %v985 = vunpack.c.l.b16 %v954
        %v986 = vunpack.c.h.b16 %v954
        %v987 = vunpack.c.l.b16 %v955
        %v988 = vunpack.c.h.b16 %v955
        %v989 = vunpack.c.l.b16 %v956
        %v990 = vunpack.c.h.b16 %v956
        %v991 = vunpack.c.l.b16 %v957
        %v992 = vunpack.c.h.b16 %v957
        %v993 = vunpack.c.l.b16 %v958
        %v994 = vunpack.c.h.b16 %v958
        %v995 = vpack.c.b16 %v973, %v971
        %v996 = vpack.c.b16 %v974, %v972
        %v997 = vpack.c.b16 %v977, %v975
        %v998 = vpack.c.b16 %v978, %v976
        %v999 = vpack.c.b16 %v981, %v979
        %v1000 = vpack.c.b16 %v982, %v980
        %v1001 = vpack.c.b16 %v985, %v983
        %v1002 = vpack.c.b16 %v986, %v984
        %v1003 = vpack.c.b16 %v989, %v987
        %v1004 = vpack.c.b16 %v990, %v988
        %v1005 = vpack.c.b16 %v993, %v991
        %v1006 = vpack.c.b16 %v994, %v992
        %1019 = vmatpush.bf16.msra.mxu0 0
        %1020 = vmatpush.bf16.msra.mxu0 0
        %1021 = vmatpush.bf16.msra.mxu0 %v1005
        %1022 = vmatpush.bf16.msra.mxu0 %v1003
        %1023 = vmatpush.bf16.msra.mxu0 %v1001
        %1024 = vmatpush.bf16.msra.mxu0 %v999
        %1025 = vmatpush.bf16.msra.mxu0 %v997
        %1026 = vmatpush.bf16.msra.mxu0 %v995
        %1027 = vmatmul.bf16.gmra.mxu0 %v629
        %v1028 = vpop.f32.mrf.mxu0
        %v1029 = vadd.f32 0.0, %v1028
        %v1030 = vpop.f32.mrf.mxu0
        %1031 = vdwg.mxu0
        %1032 = vmatpush.bf16.msra.mxu0 0
        %1033 = vmatpush.bf16.msra.mxu0 0
        %1034 = vmatpush.bf16.msra.mxu0 %v1006
        %1035 = vmatpush.bf16.msra.mxu0 %v1004
        %1036 = vmatpush.bf16.msra.mxu0 %v1002
        %1037 = vmatpush.bf16.msra.mxu0 %v1000
        %1038 = vmatpush.bf16.msra.mxu0 %v998
        %1039 = vmatpush.bf16.msra.mxu0 %v996
        %1040 = vmatmul.bf16.gmra.mxu0 %v629
        %v1041 = vpop.f32.mrf.mxu0
        %v1042 = vadd.f32 0.0, %v1041
        %v1043 = vpop.f32.mrf.mxu0
        %1044 = vdwg.mxu0
        %v1045 = vadd.f32 %v847, %v1029
        %v1046 = vadd.f32 %v848, %v1042
        %1047 = vmatpush.bf16.msra.mxu0 0
        %1048 = vmatpush.bf16.msra.mxu0 0
        %1049 = vmatpush.bf16.msra.mxu0 %v1005
        %1050 = vmatpush.bf16.msra.mxu0 %v1003
        %1051 = vmatpush.bf16.msra.mxu0 %v1001
        %1052 = vmatpush.bf16.msra.mxu0 %v999
        %1053 = vmatpush.bf16.msra.mxu0 %v997
        %1054 = vmatpush.bf16.msra.mxu0 %v995
        %1055 = vmatmul.bf16.gmra.mxu0 %v694
        %v1056 = vpop.f32.mrf.mxu0
        %v1057 = vadd.f32 0.0, %v1056
        %v1058 = vpop.f32.mrf.mxu0
        %1059 = vdwg.mxu0
        %1060 = vmatpush.bf16.msra.mxu0 0
        %1061 = vmatpush.bf16.msra.mxu0 0
        %1062 = vmatpush.bf16.msra.mxu0 %v1006
        %1063 = vmatpush.bf16.msra.mxu0 %v1004
        %1064 = vmatpush.bf16.msra.mxu0 %v1002
        %1065 = vmatpush.bf16.msra.mxu0 %v1000
        %1066 = vmatpush.bf16.msra.mxu0 %v998
        %1067 = vmatpush.bf16.msra.mxu0 %v996
        %1068 = vmatmul.bf16.gmra.mxu0 %v694
        %v1069 = vpop.f32.mrf.mxu0
        %v1070 = vadd.f32 0.0, %v1069
        %v1071 = vpop.f32.mrf.mxu0
        %1072 = vdwg.mxu0
        %v1073 = vadd.f32 %v875, %v1057
        %v1074 = vadd.f32 %v876, %v1070
        %1075 = vmatpush.bf16.msra.mxu0 0
        %1076 = vmatpush.bf16.msra.mxu0 0
        %1077 = vmatpush.bf16.msra.mxu0 %v1005
        %1078 = vmatpush.bf16.msra.mxu0 %v1003
        %1079 = vmatpush.bf16.msra.mxu0 %v1001
        %1080 = vmatpush.bf16.msra.mxu0 %v999
        %1081 = vmatpush.bf16.msra.mxu0 %v997
        %1082 = vmatpush.bf16.msra.mxu0 %v995
        %1083 = vmatmul.bf16.gmra.mxu0 %v916
        %v1084 = vpop.f32.mrf.mxu0
        %v1085 = vadd.f32 0.0, %v1084
        %v1086 = vpop.f32.mrf.mxu0
        %1087 = vdwg.mxu0
        %1088 = vmatpush.bf16.msra.mxu0 0
        %1089 = vmatpush.bf16.msra.mxu0 0
        %1090 = vmatpush.bf16.msra.mxu0 %v1006
        %1091 = vmatpush.bf16.msra.mxu0 %v1004
        %1092 = vmatpush.bf16.msra.mxu0 %v1002
        %1093 = vmatpush.bf16.msra.mxu0 %v1000
        %1094 = vmatpush.bf16.msra.mxu0 %v998
        %1095 = vmatpush.bf16.msra.mxu0 %v996
        %1096 = vmatmul.bf16.gmra.mxu0 %v916
        %v1097 = vpop.f32.mrf.mxu0
        %v1098 = vadd.f32 0.0, %v1097
        %v1099 = vpop.f32.mrf.mxu0
        %1100 = vdwg.mxu0
        %v1101 = vadd.f32 %v903, %v1085
        %v1102 = vadd.f32 %v904, %v1098
        %v1104 = vunpack.c.l.b16 %v379
        %v1105 = vpack.c.b16 %v1104, %v1104
        %v1107 = vshrl.u32 %v1105, 16
        %v1109 = vshll.u32 %v1105, 16
        %v1111 = vrot.slane %v1109, 1
        %v1112 = vor.u32 %v1107, %v1111
        %v1114 = vsel %vm454, %v1112, 0
        %1116 = vmatpush.bf16.msra.mxu0 0
        %1117 = vmatpush.bf16.msra.mxu0 0
        %1118 = vmatpush.bf16.msra.mxu0 %v1005
        %1119 = vmatpush.bf16.msra.mxu0 %v1003
        %1120 = vmatpush.bf16.msra.mxu0 %v1001
        %1121 = vmatpush.bf16.msra.mxu0 %v999
        %1122 = vmatpush.bf16.msra.mxu0 %v997
        %1123 = vmatpush.bf16.msra.mxu0 %v995
        %1124 = vmatmul.bf16.gmra.mxu0 %v1114
        %v1125 = vpop.f32.mrf.mxu0
        %v1126 = vadd.f32 0.0, %v1125
        %v1127 = vpop.f32.mrf.mxu0
        %1128 = vdwg.mxu0
        %1129 = vmatpush.bf16.msra.mxu0 0
        %1130 = vmatpush.bf16.msra.mxu0 0
        %1131 = vmatpush.bf16.msra.mxu0 %v1006
        %1132 = vmatpush.bf16.msra.mxu0 %v1004
        %1133 = vmatpush.bf16.msra.mxu0 %v1002
        %1134 = vmatpush.bf16.msra.mxu0 %v1000
        %1135 = vmatpush.bf16.msra.mxu0 %v998
        %1136 = vmatpush.bf16.msra.mxu0 %v996
        %1137 = vmatmul.bf16.gmra.mxu0 %v1114
        %v1138 = vpop.f32.mrf.mxu0
        %v1139 = vadd.f32 0.0, %v1138
        %v1140 = vpop.f32.mrf.mxu0
        %1141 = vdwg.mxu0
        %v1142 = vadd.f32 %v944, %v1126
        %v1143 = vadd.f32 %v945, %v1139
        %s1144 = scalar_lea.vmem [#allocation2], 384
        %v1145 = vld [vmem:[%s1144] sm:$0xff]
        %v1146 = vld [vmem:[%s1144 + $0x8] sm:$0xff]
        %v1147 = vld [vmem:[%s1144 + $0x10] sm:$0xff]
        %v1148 = vld [vmem:[%s1144 + $0x18] sm:$0xff]
        %v1149 = vld [vmem:[%s1144 + $0x20] sm:$0xff]
        %v1150 = vld [vmem:[%s1144 + $0x28] sm:$0xff]
        %v1151 = vld [vmem:[%s1144 + $0x30] sm:$0xff]
        %v1152 = vld [vmem:[%s1144 + $0x38] sm:$0xff]
        %v1153 = vld [vmem:[%s1144 + $0x40] sm:$0xff]
        %v1154 = vld [vmem:[%s1144 + $0x48] sm:$0xff]
        %v1155 = vld [vmem:[%s1144 + $0x50] sm:$0xff]
        %v1156 = vld [vmem:[%s1144 + $0x58] sm:$0xff]
        %v1169 = vunpack.c.l.b16 %v1145
        %v1170 = vunpack.c.h.b16 %v1145
        %v1171 = vunpack.c.l.b16 %v1146
        %v1172 = vunpack.c.h.b16 %v1146
        %v1173 = vunpack.c.l.b16 %v1147
        %v1174 = vunpack.c.h.b16 %v1147
        %v1175 = vunpack.c.l.b16 %v1148
        %v1176 = vunpack.c.h.b16 %v1148
        %v1177 = vunpack.c.l.b16 %v1149
        %v1178 = vunpack.c.h.b16 %v1149
        %v1179 = vunpack.c.l.b16 %v1150
        %v1180 = vunpack.c.h.b16 %v1150
        %v1181 = vunpack.c.l.b16 %v1151
        %v1182 = vunpack.c.h.b16 %v1151
        %v1183 = vunpack.c.l.b16 %v1152
        %v1184 = vunpack.c.h.b16 %v1152
        %v1185 = vunpack.c.l.b16 %v1153
        %v1186 = vunpack.c.h.b16 %v1153
        %v1187 = vunpack.c.l.b16 %v1154
        %v1188 = vunpack.c.h.b16 %v1154
        %v1189 = vunpack.c.l.b16 %v1155
        %v1190 = vunpack.c.h.b16 %v1155
        %v1191 = vunpack.c.l.b16 %v1156
        %v1192 = vunpack.c.h.b16 %v1156
        %v1193 = vpack.c.b16 %v1171, %v1169
        %v1194 = vpack.c.b16 %v1172, %v1170
        %v1195 = vpack.c.b16 %v1175, %v1173
        %v1196 = vpack.c.b16 %v1176, %v1174
        %v1197 = vpack.c.b16 %v1179, %v1177
        %v1198 = vpack.c.b16 %v1180, %v1178
        %v1199 = vpack.c.b16 %v1183, %v1181
        %v1200 = vpack.c.b16 %v1184, %v1182
        %v1201 = vpack.c.b16 %v1187, %v1185
        %v1202 = vpack.c.b16 %v1188, %v1186
        %v1203 = vpack.c.b16 %v1191, %v1189
        %v1204 = vpack.c.b16 %v1192, %v1190
        %1217 = vmatpush.bf16.msra.mxu0 0
        %1218 = vmatpush.bf16.msra.mxu0 0
        %1219 = vmatpush.bf16.msra.mxu0 %v1203
        %1220 = vmatpush.bf16.msra.mxu0 %v1201
        %1221 = vmatpush.bf16.msra.mxu0 %v1199
        %1222 = vmatpush.bf16.msra.mxu0 %v1197
        %1223 = vmatpush.bf16.msra.mxu0 %v1195
        %1224 = vmatpush.bf16.msra.mxu0 %v1193
        %1225 = vmatmul.bf16.gmra.mxu0 %v694
        %v1226 = vpop.f32.mrf.mxu0
        %v1227 = vadd.f32 0.0, %v1226
        %v1228 = vpop.f32.mrf.mxu0
        %1229 = vdwg.mxu0
        %1230 = vmatpush.bf16.msra.mxu0 0
        %1231 = vmatpush.bf16.msra.mxu0 0
        %1232 = vmatpush.bf16.msra.mxu0 %v1204
        %1233 = vmatpush.bf16.msra.mxu0 %v1202
        %1234 = vmatpush.bf16.msra.mxu0 %v1200
        %1235 = vmatpush.bf16.msra.mxu0 %v1198
        %1236 = vmatpush.bf16.msra.mxu0 %v1196
        %1237 = vmatpush.bf16.msra.mxu0 %v1194
        %1238 = vmatmul.bf16.gmra.mxu0 %v694
        %v1239 = vpop.f32.mrf.mxu0
        %v1240 = vadd.f32 0.0, %v1239
        %v1241 = vpop.f32.mrf.mxu0
        %1242 = vdwg.mxu0
        %v1243 = vadd.f32 %v1045, %v1227
        %v1244 = vadd.f32 %v1046, %v1240
        %1245 = vmatpush.bf16.msra.mxu0 0
        %1246 = vmatpush.bf16.msra.mxu0 0
        %1247 = vmatpush.bf16.msra.mxu0 %v1203
        %1248 = vmatpush.bf16.msra.mxu0 %v1201
        %1249 = vmatpush.bf16.msra.mxu0 %v1199
        %1250 = vmatpush.bf16.msra.mxu0 %v1197
        %1251 = vmatpush.bf16.msra.mxu0 %v1195
        %1252 = vmatpush.bf16.msra.mxu0 %v1193
        %1253 = vmatmul.bf16.gmra.mxu0 %v916
        %v1254 = vpop.f32.mrf.mxu0
        %v1255 = vadd.f32 0.0, %v1254
        %v1256 = vpop.f32.mrf.mxu0
        %1257 = vdwg.mxu0
        %1258 = vmatpush.bf16.msra.mxu0 0
        %1259 = vmatpush.bf16.msra.mxu0 0
        %1260 = vmatpush.bf16.msra.mxu0 %v1204
        %1261 = vmatpush.bf16.msra.mxu0 %v1202
        %1262 = vmatpush.bf16.msra.mxu0 %v1200
        %1263 = vmatpush.bf16.msra.mxu0 %v1198
        %1264 = vmatpush.bf16.msra.mxu0 %v1196
        %1265 = vmatpush.bf16.msra.mxu0 %v1194
        %1266 = vmatmul.bf16.gmra.mxu0 %v916
        %v1267 = vpop.f32.mrf.mxu0
        %v1268 = vadd.f32 0.0, %v1267
        %v1269 = vpop.f32.mrf.mxu0
        %1270 = vdwg.mxu0
        %v1271 = vadd.f32 %v1073, %v1255
        %v1272 = vadd.f32 %v1074, %v1268
        %1273 = vmatpush.bf16.msra.mxu0 0
        %1274 = vmatpush.bf16.msra.mxu0 0
        %1275 = vmatpush.bf16.msra.mxu0 %v1203
        %1276 = vmatpush.bf16.msra.mxu0 %v1201
        %1277 = vmatpush.bf16.msra.mxu0 %v1199
        %1278 = vmatpush.bf16.msra.mxu0 %v1197
        %1279 = vmatpush.bf16.msra.mxu0 %v1195
        %1280 = vmatpush.bf16.msra.mxu0 %v1193
        %1281 = vmatmul.bf16.gmra.mxu0 %v1114
        %v1282 = vpop.f32.mrf.mxu0
        %v1283 = vadd.f32 0.0, %v1282
        %v1284 = vpop.f32.mrf.mxu0
        %1285 = vdwg.mxu0
        %1286 = vmatpush.bf16.msra.mxu0 0
        %1287 = vmatpush.bf16.msra.mxu0 0
        %1288 = vmatpush.bf16.msra.mxu0 %v1204
        %1289 = vmatpush.bf16.msra.mxu0 %v1202
        %1290 = vmatpush.bf16.msra.mxu0 %v1200
        %1291 = vmatpush.bf16.msra.mxu0 %v1198
        %1292 = vmatpush.bf16.msra.mxu0 %v1196
        %1293 = vmatpush.bf16.msra.mxu0 %v1194
        %1294 = vmatmul.bf16.gmra.mxu0 %v1114
        %v1295 = vpop.f32.mrf.mxu0
        %v1296 = vadd.f32 0.0, %v1295
        %v1297 = vpop.f32.mrf.mxu0
        %1298 = vdwg.mxu0
        %v1299 = vadd.f32 %v1101, %v1283
        %v1300 = vadd.f32 %v1102, %v1296
        %v1302 = vunpack.c.l.b16 %v380
        %v1303 = vpack.c.b16 %v1302, %v1302
        %v1305 = vshrl.u32 %v1303, 16
        %v1307 = vshll.u32 %v1303, 16
        %v1309 = vrot.slane %v1307, 1
        %v1310 = vor.u32 %v1305, %v1309
        %v1312 = vsel %vm454, %v1310, 0
        %1314 = vmatpush.bf16.msra.mxu0 0
        %1315 = vmatpush.bf16.msra.mxu0 0
        %1316 = vmatpush.bf16.msra.mxu0 %v1203
        %1317 = vmatpush.bf16.msra.mxu0 %v1201
        %1318 = vmatpush.bf16.msra.mxu0 %v1199
        %1319 = vmatpush.bf16.msra.mxu0 %v1197
        %1320 = vmatpush.bf16.msra.mxu0 %v1195
        %1321 = vmatpush.bf16.msra.mxu0 %v1193
        %1322 = vmatmul.bf16.gmra.mxu0 %v1312
        %v1323 = vpop.f32.mrf.mxu0
        %v1324 = vadd.f32 0.0, %v1323
        %v1325 = vpop.f32.mrf.mxu0
        %1326 = vdwg.mxu0
        %1327 = vmatpush.bf16.msra.mxu0 0
        %1328 = vmatpush.bf16.msra.mxu0 0
        %1329 = vmatpush.bf16.msra.mxu0 %v1204
        %1330 = vmatpush.bf16.msra.mxu0 %v1202
        %1331 = vmatpush.bf16.msra.mxu0 %v1200
        %1332 = vmatpush.bf16.msra.mxu0 %v1198
        %1333 = vmatpush.bf16.msra.mxu0 %v1196
        %1334 = vmatpush.bf16.msra.mxu0 %v1194
        %1335 = vmatmul.bf16.gmra.mxu0 %v1312
        %v1336 = vpop.f32.mrf.mxu0
        %v1337 = vadd.f32 0.0, %v1336
        %v1338 = vpop.f32.mrf.mxu0
        %1339 = vdwg.mxu0
        %v1340 = vadd.f32 %v1142, %v1324
        %v1341 = vadd.f32 %v1143, %v1337
        %v1342 = vmax.f32 %v1243, %v1271
        %v1343 = vmax.f32 %v1244, %v1272
        %v1344 = vmax.f32 %v1299, %v1340
        %v1345 = vmax.f32 %v1300, %v1341
        %v1346 = vmax.f32 %v1342, %v1343
        %v1347 = vld [vmem:[%s2] sm:$0x1]
        %v1349 = vperm.slane %v1347, 0
        %v1351 = vadd.f32 %v1346, %v1349
        %v1352 = vmax.f32 %v1351, 0.0
        %v1353 = vmax.f32 %v1344, %v1345
        %v1354 = vadd.f32 %v1353, %v1349
        %v1355 = vmax.f32 %v1354, 0.0
        %v1356 = vld [vmem:[%s3] sm:$0xff]
        %v1357 = vld [vmem:[%s3 + $0x8] sm:$0xff]
        %v1358 = vld [vmem:[%s3 + $0x10] sm:$0xff]
        %v1359 = vld [vmem:[%s3 + $0x18] sm:$0xff]
        %v1360 = vld [vmem:[%s3 + $0x20] sm:$0xff]
        %v1361 = vld [vmem:[%s3 + $0x28] sm:$0xff]
        %v1362 = vld [vmem:[%s3 + $0x30] sm:$0xff]
        %v1363 = vld [vmem:[%s3 + $0x38] sm:$0xff]
        %v1364 = vld [vmem:[%s3 + $0x40] sm:$0xff]
        %v1365 = vld [vmem:[%s3 + $0x48] sm:$0xff]
        %v1366 = vld [vmem:[%s3 + $0x50] sm:$0xff]
        %v1367 = vld [vmem:[%s3 + $0x58] sm:$0xff]
        %v1368 = vld [vmem:[%s3 + $0x60] sm:$0xff]
        %v1369 = vld [vmem:[%s3 + $0x68] sm:$0xff]
        %v1370 = vld [vmem:[%s3 + $0x70] sm:$0xff]
        %v1371 = vld [vmem:[%s3 + $0x78] sm:$0xff]
        %v1372 = vpack.c.bf16 %v1352, %v1352
        %v1373 = vpack.c.bf16 %v1355, %v1355
        %s1374 = scalar_lea.vmem %s3, 128
        %v1375 = vld [vmem:[%s1374] sm:$0xff]
        %v1376 = vld [vmem:[%s1374 + $0x8] sm:$0xff]
        %v1377 = vld [vmem:[%s1374 + $0x10] sm:$0xff]
        %v1378 = vld [vmem:[%s1374 + $0x18] sm:$0xff]
        %v1379 = vld [vmem:[%s1374 + $0x20] sm:$0xff]
        %v1380 = vld [vmem:[%s1374 + $0x28] sm:$0xff]
        %v1381 = vld [vmem:[%s1374 + $0x30] sm:$0xff]
        %v1382 = vld [vmem:[%s1374 + $0x38] sm:$0xff]
        %v1383 = vld [vmem:[%s1374 + $0x40] sm:$0xff]
        %v1384 = vld [vmem:[%s1374 + $0x48] sm:$0xff]
        %v1385 = vld [vmem:[%s1374 + $0x50] sm:$0xff]
        %v1386 = vld [vmem:[%s1374 + $0x58] sm:$0xff]
        %v1387 = vld [vmem:[%s1374 + $0x60] sm:$0xff]
        %v1388 = vld [vmem:[%s1374 + $0x68] sm:$0xff]
        %v1389 = vld [vmem:[%s1374 + $0x70] sm:$0xff]
        %v1390 = vld [vmem:[%s1374 + $0x78] sm:$0xff]
        %v1407 = vunpack.c.l.b16 %v1375
        %v1408 = vunpack.c.h.b16 %v1375
        %v1409 = vunpack.c.l.b16 %v1376
        %v1410 = vunpack.c.h.b16 %v1376
        %v1411 = vunpack.c.l.b16 %v1377
        %v1412 = vunpack.c.h.b16 %v1377
        %v1413 = vunpack.c.l.b16 %v1378
        %v1414 = vunpack.c.h.b16 %v1378
        %v1415 = vunpack.c.l.b16 %v1379
        %v1416 = vunpack.c.h.b16 %v1379
        %v1417 = vunpack.c.l.b16 %v1380
        %v1418 = vunpack.c.h.b16 %v1380
        %v1419 = vunpack.c.l.b16 %v1381
        %v1420 = vunpack.c.h.b16 %v1381
        %v1421 = vunpack.c.l.b16 %v1382
        %v1422 = vunpack.c.h.b16 %v1382
        %v1423 = vunpack.c.l.b16 %v1383
        %v1424 = vunpack.c.h.b16 %v1383
        %v1425 = vunpack.c.l.b16 %v1384
        %v1426 = vunpack.c.h.b16 %v1384
        %v1427 = vunpack.c.l.b16 %v1385
        %v1428 = vunpack.c.h.b16 %v1385
        %v1429 = vunpack.c.l.b16 %v1386
        %v1430 = vunpack.c.h.b16 %v1386
        %v1431 = vunpack.c.l.b16 %v1387
        %v1432 = vunpack.c.h.b16 %v1387
        %v1433 = vunpack.c.l.b16 %v1388
        %v1434 = vunpack.c.h.b16 %v1388
        %v1435 = vunpack.c.l.b16 %v1389
        %v1436 = vunpack.c.h.b16 %v1389
        %v1437 = vunpack.c.l.b16 %v1390
        %v1438 = vunpack.c.h.b16 %v1390
        %v1439 = vpack.c.b16 %v1409, %v1407
        %v1440 = vpack.c.b16 %v1410, %v1408
        %v1441 = vpack.c.b16 %v1413, %v1411
        %v1442 = vpack.c.b16 %v1414, %v1412
        %v1443 = vpack.c.b16 %v1417, %v1415
        %v1444 = vpack.c.b16 %v1418, %v1416
        %v1445 = vpack.c.b16 %v1421, %v1419
        %v1446 = vpack.c.b16 %v1422, %v1420
        %v1447 = vpack.c.b16 %v1425, %v1423
        %v1448 = vpack.c.b16 %v1426, %v1424
        %v1449 = vpack.c.b16 %v1429, %v1427
        %v1450 = vpack.c.b16 %v1430, %v1428
        %v1451 = vpack.c.b16 %v1433, %v1431
        %v1452 = vpack.c.b16 %v1434, %v1432
        %v1453 = vpack.c.b16 %v1437, %v1435
        %v1454 = vpack.c.b16 %v1438, %v1436
        %1471 = vmatpush.bf16.msra.mxu0 %v1453
        %1472 = vmatpush.bf16.msra.mxu0 %v1451
        %1473 = vmatpush.bf16.msra.mxu0 %v1449
        %1474 = vmatpush.bf16.msra.mxu0 %v1447
        %1475 = vmatpush.bf16.msra.mxu0 %v1445
        %1476 = vmatpush.bf16.msra.mxu0 %v1443
        %1477 = vmatpush.bf16.msra.mxu0 %v1441
        %1478 = vmatpush.bf16.msra.mxu0 %v1439
        %1479 = vmatmul.bf16.gmra.mxu0 %v1373
        %v1480 = vpop.f32.mrf.mxu0
        %v1481 = vadd.f32 0.0, %v1480
        %v1482 = vpop.f32.mrf.mxu0
        %1483 = vdwg.mxu0
        %1484 = vmatpush.bf16.msra.mxu0 %v1454
        %1485 = vmatpush.bf16.msra.mxu0 %v1452
        %1486 = vmatpush.bf16.msra.mxu0 %v1450
        %1487 = vmatpush.bf16.msra.mxu0 %v1448
        %1488 = vmatpush.bf16.msra.mxu0 %v1446
        %1489 = vmatpush.bf16.msra.mxu0 %v1444
        %1490 = vmatpush.bf16.msra.mxu0 %v1442
        %1491 = vmatpush.bf16.msra.mxu0 %v1440
        %1492 = vmatmul.bf16.gmra.mxu0 %v1373
        %v1493 = vpop.f32.mrf.mxu0
        %v1494 = vadd.f32 0.0, %v1493
        %v1495 = vpop.f32.mrf.mxu0
        %1496 = vdwg.mxu0
        %v1498 = vshrl.u32 %v1372, 16
        %v1500 = vshll.u32 %v1372, 16
        %v1502 = vrot.slane %v1500, 1
        %v1503 = vor.u32 %v1498, %v1502
        %1505 = vmatpush.bf16.msra.mxu0 %v1453
        %1506 = vmatpush.bf16.msra.mxu0 %v1451
        %1507 = vmatpush.bf16.msra.mxu0 %v1449
        %1508 = vmatpush.bf16.msra.mxu0 %v1447
        %1509 = vmatpush.bf16.msra.mxu0 %v1445
        %1510 = vmatpush.bf16.msra.mxu0 %v1443
        %1511 = vmatpush.bf16.msra.mxu0 %v1441
        %1512 = vmatpush.bf16.msra.mxu0 %v1439
        %1513 = vmatmul.bf16.gmra.mxu0 %v1503
        %v1514 = vpop.f32.mrf.mxu0
        %v1515 = vadd.f32 0.0, %v1514
        %v1516 = vpop.f32.mrf.mxu0
        %1517 = vdwg.mxu0
        %1518 = vmatpush.bf16.msra.mxu0 %v1454
        %1519 = vmatpush.bf16.msra.mxu0 %v1452
        %1520 = vmatpush.bf16.msra.mxu0 %v1450
        %1521 = vmatpush.bf16.msra.mxu0 %v1448
        %1522 = vmatpush.bf16.msra.mxu0 %v1446
        %1523 = vmatpush.bf16.msra.mxu0 %v1444
        %1524 = vmatpush.bf16.msra.mxu0 %v1442
        %1525 = vmatpush.bf16.msra.mxu0 %v1440
        %1526 = vmatmul.bf16.gmra.mxu0 %v1503
        %v1527 = vpop.f32.mrf.mxu0
        %v1528 = vadd.f32 0.0, %v1527
        %v1529 = vpop.f32.mrf.mxu0
        %1530 = vdwg.mxu0
        %v1547 = vunpack.c.l.b16 %v1356
        %v1548 = vunpack.c.h.b16 %v1356
        %v1549 = vunpack.c.l.b16 %v1357
        %v1550 = vunpack.c.h.b16 %v1357
        %v1551 = vunpack.c.l.b16 %v1358
        %v1552 = vunpack.c.h.b16 %v1358
        %v1553 = vunpack.c.l.b16 %v1359
        %v1554 = vunpack.c.h.b16 %v1359
        %v1555 = vunpack.c.l.b16 %v1360
        %v1556 = vunpack.c.h.b16 %v1360
        %v1557 = vunpack.c.l.b16 %v1361
        %v1558 = vunpack.c.h.b16 %v1361
        %v1559 = vunpack.c.l.b16 %v1362
        %v1560 = vunpack.c.h.b16 %v1362
        %v1561 = vunpack.c.l.b16 %v1363
        %v1562 = vunpack.c.h.b16 %v1363
        %v1563 = vunpack.c.l.b16 %v1364
        %v1564 = vunpack.c.h.b16 %v1364
        %v1565 = vunpack.c.l.b16 %v1365
        %v1566 = vunpack.c.h.b16 %v1365
        %v1567 = vunpack.c.l.b16 %v1366
        %v1568 = vunpack.c.h.b16 %v1366
        %v1569 = vunpack.c.l.b16 %v1367
        %v1570 = vunpack.c.h.b16 %v1367
        %v1571 = vunpack.c.l.b16 %v1368
        %v1572 = vunpack.c.h.b16 %v1368
        %v1573 = vunpack.c.l.b16 %v1369
        %v1574 = vunpack.c.h.b16 %v1369
        %v1575 = vunpack.c.l.b16 %v1370
        %v1576 = vunpack.c.h.b16 %v1370
        %v1577 = vunpack.c.l.b16 %v1371
        %v1578 = vunpack.c.h.b16 %v1371
        %v1579 = vpack.c.b16 %v1549, %v1547
        %v1580 = vpack.c.b16 %v1550, %v1548
        %v1581 = vpack.c.b16 %v1553, %v1551
        %v1582 = vpack.c.b16 %v1554, %v1552
        %v1583 = vpack.c.b16 %v1557, %v1555
        %v1584 = vpack.c.b16 %v1558, %v1556
        %v1585 = vpack.c.b16 %v1561, %v1559
        %v1586 = vpack.c.b16 %v1562, %v1560
        %v1587 = vpack.c.b16 %v1565, %v1563
        %v1588 = vpack.c.b16 %v1566, %v1564
        %v1589 = vpack.c.b16 %v1569, %v1567
        %v1590 = vpack.c.b16 %v1570, %v1568
        %v1591 = vpack.c.b16 %v1573, %v1571
        %v1592 = vpack.c.b16 %v1574, %v1572
        %v1593 = vpack.c.b16 %v1577, %v1575
        %v1594 = vpack.c.b16 %v1578, %v1576
        %1611 = vmatpush.bf16.msra.mxu0 %v1593
        %1612 = vmatpush.bf16.msra.mxu0 %v1591
        %1613 = vmatpush.bf16.msra.mxu0 %v1589
        %1614 = vmatpush.bf16.msra.mxu0 %v1587
        %1615 = vmatpush.bf16.msra.mxu0 %v1585
        %1616 = vmatpush.bf16.msra.mxu0 %v1583
        %1617 = vmatpush.bf16.msra.mxu0 %v1581
        %1618 = vmatpush.bf16.msra.mxu0 %v1579
        %1619 = vmatmul.bf16.gmra.mxu0 %v1372
        %v1620 = vpop.f32.mrf.mxu0
        %v1621 = vadd.f32 %v1481, %v1620
        %v1622 = vpop.f32.mrf.mxu0
        %1623 = vdwg.mxu0
        %1624 = vmatpush.bf16.msra.mxu0 %v1594
        %1625 = vmatpush.bf16.msra.mxu0 %v1592
        %1626 = vmatpush.bf16.msra.mxu0 %v1590
        %1627 = vmatpush.bf16.msra.mxu0 %v1588
        %1628 = vmatpush.bf16.msra.mxu0 %v1586
        %1629 = vmatpush.bf16.msra.mxu0 %v1584
        %1630 = vmatpush.bf16.msra.mxu0 %v1582
        %1631 = vmatpush.bf16.msra.mxu0 %v1580
        %1632 = vmatmul.bf16.gmra.mxu0 %v1372
        %v1633 = vpop.f32.mrf.mxu0
        %v1634 = vadd.f32 %v1494, %v1633
        %v1635 = vpop.f32.mrf.mxu0
        %1636 = vdwg.mxu0
        %1637 = vmatpush.bf16.msra.mxu0 %v1593
        %1638 = vmatpush.bf16.msra.mxu0 %v1591
        %1639 = vmatpush.bf16.msra.mxu0 %v1589
        %1640 = vmatpush.bf16.msra.mxu0 %v1587
        %1641 = vmatpush.bf16.msra.mxu0 %v1585
        %1642 = vmatpush.bf16.msra.mxu0 %v1583
        %1643 = vmatpush.bf16.msra.mxu0 %v1581
        %1644 = vmatpush.bf16.msra.mxu0 %v1579
        %1645 = vmatmul.bf16.gmra.mxu0 %v1373
        %v1646 = vpop.f32.mrf.mxu0
        %v1647 = vadd.f32 %v1515, %v1646
        %v1648 = vpop.f32.mrf.mxu0
        %1649 = vdwg.mxu0
        %1650 = vmatpush.bf16.msra.mxu0 %v1594
        %1651 = vmatpush.bf16.msra.mxu0 %v1592
        %1652 = vmatpush.bf16.msra.mxu0 %v1590
        %1653 = vmatpush.bf16.msra.mxu0 %v1588
        %1654 = vmatpush.bf16.msra.mxu0 %v1586
        %1655 = vmatpush.bf16.msra.mxu0 %v1584
        %1656 = vmatpush.bf16.msra.mxu0 %v1582
        %1657 = vmatpush.bf16.msra.mxu0 %v1580
        %1658 = vmatmul.bf16.gmra.mxu0 %v1373
        %v1659 = vpop.f32.mrf.mxu0
        %v1660 = vadd.f32 %v1528, %v1659
        %v1661 = vpop.f32.mrf.mxu0
        %1662 = vdwg.mxu0
        %s1663 = scalar_lea.vmem %s3, 256
        %v1664 = vld [vmem:[%s1663] sm:$0xff]
        %v1665 = vld [vmem:[%s1663 + $0x8] sm:$0xff]
        %v1666 = vld [vmem:[%s1663 + $0x10] sm:$0xff]
        %v1667 = vld [vmem:[%s1663 + $0x18] sm:$0xff]
        %v1668 = vld [vmem:[%s1663 + $0x20] sm:$0xff]
        %v1669 = vld [vmem:[%s1663 + $0x28] sm:$0xff]
        %v1670 = vld [vmem:[%s1663 + $0x30] sm:$0xff]
        %v1671 = vld [vmem:[%s1663 + $0x38] sm:$0xff]
        %v1672 = vld [vmem:[%s1663 + $0x40] sm:$0xff]
        %v1673 = vld [vmem:[%s1663 + $0x48] sm:$0xff]
        %v1674 = vld [vmem:[%s1663 + $0x50] sm:$0xff]
        %v1675 = vld [vmem:[%s1663 + $0x58] sm:$0xff]
        %v1676 = vld [vmem:[%s1663 + $0x60] sm:$0xff]
        %v1677 = vld [vmem:[%s1663 + $0x68] sm:$0xff]
        %v1678 = vld [vmem:[%s1663 + $0x70] sm:$0xff]
        %v1679 = vld [vmem:[%s1663 + $0x78] sm:$0xff]
        %v1696 = vunpack.c.l.b16 %v1664
        %v1697 = vunpack.c.h.b16 %v1664
        %v1698 = vunpack.c.l.b16 %v1665
        %v1699 = vunpack.c.h.b16 %v1665
        %v1700 = vunpack.c.l.b16 %v1666
        %v1701 = vunpack.c.h.b16 %v1666
        %v1702 = vunpack.c.l.b16 %v1667
        %v1703 = vunpack.c.h.b16 %v1667
        %v1704 = vunpack.c.l.b16 %v1668
        %v1705 = vunpack.c.h.b16 %v1668
        %v1706 = vunpack.c.l.b16 %v1669
        %v1707 = vunpack.c.h.b16 %v1669
        %v1708 = vunpack.c.l.b16 %v1670
        %v1709 = vunpack.c.h.b16 %v1670
        %v1710 = vunpack.c.l.b16 %v1671
        %v1711 = vunpack.c.h.b16 %v1671
        %v1712 = vunpack.c.l.b16 %v1672
        %v1713 = vunpack.c.h.b16 %v1672
        %v1714 = vunpack.c.l.b16 %v1673
        %v1715 = vunpack.c.h.b16 %v1673
        %v1716 = vunpack.c.l.b16 %v1674
        %v1717 = vunpack.c.h.b16 %v1674
        %v1718 = vunpack.c.l.b16 %v1675
        %v1719 = vunpack.c.h.b16 %v1675
        %v1720 = vunpack.c.l.b16 %v1676
        %v1721 = vunpack.c.h.b16 %v1676
        %v1722 = vunpack.c.l.b16 %v1677
        %v1723 = vunpack.c.h.b16 %v1677
        %v1724 = vunpack.c.l.b16 %v1678
        %v1725 = vunpack.c.h.b16 %v1678
        %v1726 = vunpack.c.l.b16 %v1679
        %v1727 = vunpack.c.h.b16 %v1679
        %v1728 = vpack.c.b16 %v1698, %v1696
        %v1729 = vpack.c.b16 %v1699, %v1697
        %v1730 = vpack.c.b16 %v1702, %v1700
        %v1731 = vpack.c.b16 %v1703, %v1701
        %v1732 = vpack.c.b16 %v1706, %v1704
        %v1733 = vpack.c.b16 %v1707, %v1705
        %v1734 = vpack.c.b16 %v1710, %v1708
        %v1735 = vpack.c.b16 %v1711, %v1709
        %v1736 = vpack.c.b16 %v1714, %v1712
        %v1737 = vpack.c.b16 %v1715, %v1713
        %v1738 = vpack.c.b16 %v1718, %v1716
        %v1739 = vpack.c.b16 %v1719, %v1717
        %v1740 = vpack.c.b16 %v1722, %v1720
        %v1741 = vpack.c.b16 %v1723, %v1721
        %v1742 = vpack.c.b16 %v1726, %v1724
        %v1743 = vpack.c.b16 %v1727, %v1725
        %1760 = vmatpush.bf16.msra.mxu0 %v1742
        %1761 = vmatpush.bf16.msra.mxu0 %v1740
        %1762 = vmatpush.bf16.msra.mxu0 %v1738
        %1763 = vmatpush.bf16.msra.mxu0 %v1736
        %1764 = vmatpush.bf16.msra.mxu0 %v1734
        %1765 = vmatpush.bf16.msra.mxu0 %v1732
        %1766 = vmatpush.bf16.msra.mxu0 %v1730
        %1767 = vmatpush.bf16.msra.mxu0 %v1728
        %1768 = vmatmul.bf16.gmra.mxu0 %v1503
        %v1769 = vpop.f32.mrf.mxu0
        %v1770 = vadd.f32 0.0, %v1769
        %v1771 = vpop.f32.mrf.mxu0
        %1772 = vdwg.mxu0
        %1773 = vmatpush.bf16.msra.mxu0 %v1743
        %1774 = vmatpush.bf16.msra.mxu0 %v1741
        %1775 = vmatpush.bf16.msra.mxu0 %v1739
        %1776 = vmatpush.bf16.msra.mxu0 %v1737
        %1777 = vmatpush.bf16.msra.mxu0 %v1735
        %1778 = vmatpush.bf16.msra.mxu0 %v1733
        %1779 = vmatpush.bf16.msra.mxu0 %v1731
        %1780 = vmatpush.bf16.msra.mxu0 %v1729
        %1781 = vmatmul.bf16.gmra.mxu0 %v1503
        %v1782 = vpop.f32.mrf.mxu0
        %v1783 = vadd.f32 0.0, %v1782
        %v1784 = vpop.f32.mrf.mxu0
        %1785 = vdwg.mxu0
        %v1787 = vshrl.u32 %v1373, 16
        %v1789 = vshll.u32 %v1373, 16
        %v1791 = vrot.slane %v1789, 1
        %v1792 = vor.u32 %v1787, %v1791
        %1794 = vmatpush.bf16.msra.mxu0 %v1742
        %1795 = vmatpush.bf16.msra.mxu0 %v1740
        %1796 = vmatpush.bf16.msra.mxu0 %v1738
        %1797 = vmatpush.bf16.msra.mxu0 %v1736
        %1798 = vmatpush.bf16.msra.mxu0 %v1734
        %1799 = vmatpush.bf16.msra.mxu0 %v1732
        %1800 = vmatpush.bf16.msra.mxu0 %v1730
        %1801 = vmatpush.bf16.msra.mxu0 %v1728
        %1802 = vmatmul.bf16.gmra.mxu0 %v1792
        %v1803 = vpop.f32.mrf.mxu0
        %v1804 = vadd.f32 0.0, %v1803
        %v1805 = vpop.f32.mrf.mxu0
        %1806 = vdwg.mxu0
        %1807 = vmatpush.bf16.msra.mxu0 %v1743
        %1808 = vmatpush.bf16.msra.mxu0 %v1741
        %1809 = vmatpush.bf16.msra.mxu0 %v1739
        %1810 = vmatpush.bf16.msra.mxu0 %v1737
        %1811 = vmatpush.bf16.msra.mxu0 %v1735
        %1812 = vmatpush.bf16.msra.mxu0 %v1733
        %1813 = vmatpush.bf16.msra.mxu0 %v1731
        %1814 = vmatpush.bf16.msra.mxu0 %v1729
        %1815 = vmatmul.bf16.gmra.mxu0 %v1792
        %v1816 = vpop.f32.mrf.mxu0
        %v1817 = vadd.f32 0.0, %v1816
        %v1818 = vpop.f32.mrf.mxu0
        %1819 = vdwg.mxu0
        %v1820 = vadd.f32 %v1621, %v1770
        %v1821 = vadd.f32 %v1634, %v1783
        %v1822 = vadd.f32 %v1647, %v1804
        %v1823 = vadd.f32 %v1660, %v1817
        %s1824 = scalar_lea.vmem %s3, 384
        %v1825 = vld [vmem:[%s1824] sm:$0xff]
        %v1826 = vld [vmem:[%s1824 + $0x8] sm:$0xff]
        %v1827 = vld [vmem:[%s1824 + $0x10] sm:$0xff]
        %v1828 = vld [vmem:[%s1824 + $0x18] sm:$0xff]
        %v1829 = vld [vmem:[%s1824 + $0x20] sm:$0xff]
        %v1830 = vld [vmem:[%s1824 + $0x28] sm:$0xff]
        %v1831 = vld [vmem:[%s1824 + $0x30] sm:$0xff]
        %v1832 = vld [vmem:[%s1824 + $0x38] sm:$0xff]
        %v1833 = vld [vmem:[%s1824 + $0x40] sm:$0xff]
        %v1834 = vld [vmem:[%s1824 + $0x48] sm:$0xff]
        %v1835 = vld [vmem:[%s1824 + $0x50] sm:$0xff]
        %v1836 = vld [vmem:[%s1824 + $0x58] sm:$0xff]
        %v1837 = vld [vmem:[%s1824 + $0x60] sm:$0xff]
        %v1838 = vld [vmem:[%s1824 + $0x68] sm:$0xff]
        %v1839 = vld [vmem:[%s1824 + $0x70] sm:$0xff]
        %v1840 = vld [vmem:[%s1824 + $0x78] sm:$0xff]
        %v1857 = vunpack.c.l.b16 %v1825
        %v1858 = vunpack.c.h.b16 %v1825
        %v1859 = vunpack.c.l.b16 %v1826
        %v1860 = vunpack.c.h.b16 %v1826
        %v1861 = vunpack.c.l.b16 %v1827
        %v1862 = vunpack.c.h.b16 %v1827
        %v1863 = vunpack.c.l.b16 %v1828
        %v1864 = vunpack.c.h.b16 %v1828
        %v1865 = vunpack.c.l.b16 %v1829
        %v1866 = vunpack.c.h.b16 %v1829
        %v1867 = vunpack.c.l.b16 %v1830
        %v1868 = vunpack.c.h.b16 %v1830
        %v1869 = vunpack.c.l.b16 %v1831
        %v1870 = vunpack.c.h.b16 %v1831
        %v1871 = vunpack.c.l.b16 %v1832
        %v1872 = vunpack.c.h.b16 %v1832
        %v1873 = vunpack.c.l.b16 %v1833
        %v1874 = vunpack.c.h.b16 %v1833
        %v1875 = vunpack.c.l.b16 %v1834
        %v1876 = vunpack.c.h.b16 %v1834
        %v1877 = vunpack.c.l.b16 %v1835
        %v1878 = vunpack.c.h.b16 %v1835
        %v1879 = vunpack.c.l.b16 %v1836
        %v1880 = vunpack.c.h.b16 %v1836
        %v1881 = vunpack.c.l.b16 %v1837
        %v1882 = vunpack.c.h.b16 %v1837
        %v1883 = vunpack.c.l.b16 %v1838
        %v1884 = vunpack.c.h.b16 %v1838
        %v1885 = vunpack.c.l.b16 %v1839
        %v1886 = vunpack.c.h.b16 %v1839
        %v1887 = vunpack.c.l.b16 %v1840
        %v1888 = vunpack.c.h.b16 %v1840
        %v1889 = vpack.c.b16 %v1859, %v1857
        %v1890 = vpack.c.b16 %v1860, %v1858
        %v1891 = vpack.c.b16 %v1863, %v1861
        %v1892 = vpack.c.b16 %v1864, %v1862
        %v1893 = vpack.c.b16 %v1867, %v1865
        %v1894 = vpack.c.b16 %v1868, %v1866
        %v1895 = vpack.c.b16 %v1871, %v1869
        %v1896 = vpack.c.b16 %v1872, %v1870
        %v1897 = vpack.c.b16 %v1875, %v1873
        %v1898 = vpack.c.b16 %v1876, %v1874
        %v1899 = vpack.c.b16 %v1879, %v1877
        %v1900 = vpack.c.b16 %v1880, %v1878
        %v1901 = vpack.c.b16 %v1883, %v1881
        %v1902 = vpack.c.b16 %v1884, %v1882
        %v1903 = vpack.c.b16 %v1887, %v1885
        %v1904 = vpack.c.b16 %v1888, %v1886
        %1921 = vmatpush.bf16.msra.mxu0 %v1903
        %1922 = vmatpush.bf16.msra.mxu0 %v1901
        %1923 = vmatpush.bf16.msra.mxu0 %v1899
        %1924 = vmatpush.bf16.msra.mxu0 %v1897
        %1925 = vmatpush.bf16.msra.mxu0 %v1895
        %1926 = vmatpush.bf16.msra.mxu0 %v1893
        %1927 = vmatpush.bf16.msra.mxu0 %v1891
        %1928 = vmatpush.bf16.msra.mxu0 %v1889
        %1929 = vmatmul.bf16.gmra.mxu0 %v1792
        %v1930 = vpop.f32.mrf.mxu0
        %v1931 = vadd.f32 0.0, %v1930
        %v1932 = vpop.f32.mrf.mxu0
        %1933 = vdwg.mxu0
        %1934 = vmatpush.bf16.msra.mxu0 %v1904
        %1935 = vmatpush.bf16.msra.mxu0 %v1902
        %1936 = vmatpush.bf16.msra.mxu0 %v1900
        %1937 = vmatpush.bf16.msra.mxu0 %v1898
        %1938 = vmatpush.bf16.msra.mxu0 %v1896
        %1939 = vmatpush.bf16.msra.mxu0 %v1894
        %1940 = vmatpush.bf16.msra.mxu0 %v1892
        %1941 = vmatpush.bf16.msra.mxu0 %v1890
        %1942 = vmatmul.bf16.gmra.mxu0 %v1792
        %v1943 = vpop.f32.mrf.mxu0
        %v1944 = vadd.f32 0.0, %v1943
        %v1945 = vpop.f32.mrf.mxu0
        %1946 = vdwg.mxu0
        %v1948 = vrot.slane %v1372, 1
        %1950 = vmatpush.bf16.msra.mxu0 %v1903
        %1951 = vmatpush.bf16.msra.mxu0 %v1901
        %1952 = vmatpush.bf16.msra.mxu0 %v1899
        %1953 = vmatpush.bf16.msra.mxu0 %v1897
        %1954 = vmatpush.bf16.msra.mxu0 %v1895
        %1955 = vmatpush.bf16.msra.mxu0 %v1893
        %1956 = vmatpush.bf16.msra.mxu0 %v1891
        %1957 = vmatpush.bf16.msra.mxu0 %v1889
        %1958 = vmatmul.bf16.gmra.mxu0 %v1948
        %v1959 = vpop.f32.mrf.mxu0
        %v1960 = vadd.f32 0.0, %v1959
        %v1961 = vpop.f32.mrf.mxu0
        %1962 = vdwg.mxu0
        %1963 = vmatpush.bf16.msra.mxu0 %v1904
        %1964 = vmatpush.bf16.msra.mxu0 %v1902
        %1965 = vmatpush.bf16.msra.mxu0 %v1900
        %1966 = vmatpush.bf16.msra.mxu0 %v1898
        %1967 = vmatpush.bf16.msra.mxu0 %v1896
        %1968 = vmatpush.bf16.msra.mxu0 %v1894
        %1969 = vmatpush.bf16.msra.mxu0 %v1892
        %1970 = vmatpush.bf16.msra.mxu0 %v1890
        %1971 = vmatmul.bf16.gmra.mxu0 %v1948
        %v1972 = vpop.f32.mrf.mxu0
        %v1973 = vadd.f32 0.0, %v1972
        %v1974 = vpop.f32.mrf.mxu0
        %1975 = vdwg.mxu0
        %v1976 = vadd.f32 %v1820, %v1931
        %v1977 = vadd.f32 %v1821, %v1944
        %v1978 = vadd.f32 %v1822, %v1960
        %v1979 = vadd.f32 %v1823, %v1973
        %s1980 = scalar_lea.vmem %s3, 512
        %v1981 = vld [vmem:[%s1980] sm:$0xff]
        %v1982 = vld [vmem:[%s1980 + $0x8] sm:$0xff]
        %v1983 = vld [vmem:[%s1980 + $0x10] sm:$0xff]
        %v1984 = vld [vmem:[%s1980 + $0x18] sm:$0xff]
        %v1985 = vld [vmem:[%s1980 + $0x20] sm:$0xff]
        %v1986 = vld [vmem:[%s1980 + $0x28] sm:$0xff]
        %v1987 = vld [vmem:[%s1980 + $0x30] sm:$0xff]
        %v1988 = vld [vmem:[%s1980 + $0x38] sm:$0xff]
        %v1989 = vld [vmem:[%s1980 + $0x40] sm:$0xff]
        %v1990 = vld [vmem:[%s1980 + $0x48] sm:$0xff]
        %v1991 = vld [vmem:[%s1980 + $0x50] sm:$0xff]
        %v1992 = vld [vmem:[%s1980 + $0x58] sm:$0xff]
        %v1993 = vld [vmem:[%s1980 + $0x60] sm:$0xff]
        %v1994 = vld [vmem:[%s1980 + $0x68] sm:$0xff]
        %v1995 = vld [vmem:[%s1980 + $0x70] sm:$0xff]
        %v1996 = vld [vmem:[%s1980 + $0x78] sm:$0xff]
        %v2013 = vunpack.c.l.b16 %v1981
        %v2014 = vunpack.c.h.b16 %v1981
        %v2015 = vunpack.c.l.b16 %v1982
        %v2016 = vunpack.c.h.b16 %v1982
        %v2017 = vunpack.c.l.b16 %v1983
        %v2018 = vunpack.c.h.b16 %v1983
        %v2019 = vunpack.c.l.b16 %v1984
        %v2020 = vunpack.c.h.b16 %v1984
        %v2021 = vunpack.c.l.b16 %v1985
        %v2022 = vunpack.c.h.b16 %v1985
        %v2023 = vunpack.c.l.b16 %v1986
        %v2024 = vunpack.c.h.b16 %v1986
        %v2025 = vunpack.c.l.b16 %v1987
        %v2026 = vunpack.c.h.b16 %v1987
        %v2027 = vunpack.c.l.b16 %v1988
        %v2028 = vunpack.c.h.b16 %v1988
        %v2029 = vunpack.c.l.b16 %v1989
        %v2030 = vunpack.c.h.b16 %v1989
        %v2031 = vunpack.c.l.b16 %v1990
        %v2032 = vunpack.c.h.b16 %v1990
        %v2033 = vunpack.c.l.b16 %v1991
        %v2034 = vunpack.c.h.b16 %v1991
        %v2035 = vunpack.c.l.b16 %v1992
        %v2036 = vunpack.c.h.b16 %v1992
        %v2037 = vunpack.c.l.b16 %v1993
        %v2038 = vunpack.c.h.b16 %v1993
        %v2039 = vunpack.c.l.b16 %v1994
        %v2040 = vunpack.c.h.b16 %v1994
        %v2041 = vunpack.c.l.b16 %v1995
        %v2042 = vunpack.c.h.b16 %v1995
        %v2043 = vunpack.c.l.b16 %v1996
        %v2044 = vunpack.c.h.b16 %v1996
        %v2045 = vpack.c.b16 %v2015, %v2013
        %v2046 = vpack.c.b16 %v2016, %v2014
        %v2047 = vpack.c.b16 %v2019, %v2017
        %v2048 = vpack.c.b16 %v2020, %v2018
        %v2049 = vpack.c.b16 %v2023, %v2021
        %v2050 = vpack.c.b16 %v2024, %v2022
        %v2051 = vpack.c.b16 %v2027, %v2025
        %v2052 = vpack.c.b16 %v2028, %v2026
        %v2053 = vpack.c.b16 %v2031, %v2029
        %v2054 = vpack.c.b16 %v2032, %v2030
        %v2055 = vpack.c.b16 %v2035, %v2033
        %v2056 = vpack.c.b16 %v2036, %v2034
        %v2057 = vpack.c.b16 %v2039, %v2037
        %v2058 = vpack.c.b16 %v2040, %v2038
        %v2059 = vpack.c.b16 %v2043, %v2041
        %v2060 = vpack.c.b16 %v2044, %v2042
        %2077 = vmatpush.bf16.msra.mxu0 %v2059
        %2078 = vmatpush.bf16.msra.mxu0 %v2057
        %2079 = vmatpush.bf16.msra.mxu0 %v2055
        %2080 = vmatpush.bf16.msra.mxu0 %v2053
        %2081 = vmatpush.bf16.msra.mxu0 %v2051
        %2082 = vmatpush.bf16.msra.mxu0 %v2049
        %2083 = vmatpush.bf16.msra.mxu0 %v2047
        %2084 = vmatpush.bf16.msra.mxu0 %v2045
        %2085 = vmatmul.bf16.gmra.mxu0 %v1948
        %v2086 = vpop.f32.mrf.mxu0
        %v2087 = vadd.f32 0.0, %v2086
        %v2088 = vpop.f32.mrf.mxu0
        %2089 = vdwg.mxu0
        %2090 = vmatpush.bf16.msra.mxu0 %v2060
        %2091 = vmatpush.bf16.msra.mxu0 %v2058
        %2092 = vmatpush.bf16.msra.mxu0 %v2056
        %2093 = vmatpush.bf16.msra.mxu0 %v2054
        %2094 = vmatpush.bf16.msra.mxu0 %v2052
        %2095 = vmatpush.bf16.msra.mxu0 %v2050
        %2096 = vmatpush.bf16.msra.mxu0 %v2048
        %2097 = vmatpush.bf16.msra.mxu0 %v2046
        %2098 = vmatmul.bf16.gmra.mxu0 %v1948
        %v2099 = vpop.f32.mrf.mxu0
        %v2100 = vadd.f32 0.0, %v2099
        %v2101 = vpop.f32.mrf.mxu0
        %2102 = vdwg.mxu0
        %v2104 = vrot.slane %v1373, 1
        %2106 = vmatpush.bf16.msra.mxu0 %v2059
        %2107 = vmatpush.bf16.msra.mxu0 %v2057
        %2108 = vmatpush.bf16.msra.mxu0 %v2055
        %2109 = vmatpush.bf16.msra.mxu0 %v2053
        %2110 = vmatpush.bf16.msra.mxu0 %v2051
        %2111 = vmatpush.bf16.msra.mxu0 %v2049
        %2112 = vmatpush.bf16.msra.mxu0 %v2047
        %2113 = vmatpush.bf16.msra.mxu0 %v2045
        %2114 = vmatmul.bf16.gmra.mxu0 %v2104
        %v2115 = vpop.f32.mrf.mxu0
        %v2116 = vadd.f32 0.0, %v2115
        %v2117 = vpop.f32.mrf.mxu0
        %2118 = vdwg.mxu0
        %2119 = vmatpush.bf16.msra.mxu0 %v2060
        %2120 = vmatpush.bf16.msra.mxu0 %v2058
        %2121 = vmatpush.bf16.msra.mxu0 %v2056
        %2122 = vmatpush.bf16.msra.mxu0 %v2054
        %2123 = vmatpush.bf16.msra.mxu0 %v2052
        %2124 = vmatpush.bf16.msra.mxu0 %v2050
        %2125 = vmatpush.bf16.msra.mxu0 %v2048
        %2126 = vmatpush.bf16.msra.mxu0 %v2046
        %2127 = vmatmul.bf16.gmra.mxu0 %v2104
        %v2128 = vpop.f32.mrf.mxu0
        %v2129 = vadd.f32 0.0, %v2128
        %v2130 = vpop.f32.mrf.mxu0
        %2131 = vdwg.mxu0
        %v2132 = vadd.f32 %v1976, %v2087
        %v2133 = vadd.f32 %v1977, %v2100
        %v2134 = vadd.f32 %v1978, %v2116
        %v2135 = vadd.f32 %v1979, %v2129
        %v2136 = vmax.f32 %v2132, %v2134
        %v2137 = vmax.f32 %v2133, %v2135
        %v2138 = vmax.f32 %v2136, %v2137
        %v2139 = vld [vmem:[%s4] sm:$0x1]
        %v2141 = vperm.slane %v2139, 0
        %v2143 = vadd.f32 %v2138, %v2141
        %v2144 = vmax.f32 %v2143, 0.0
        %v2145 = vpack.c.bf16 %v2144, %v2144
        %v2146 = vld [vmem:[#allocation5] sm:$0xff]
        %v2147 = vld [vmem:[#allocation5 + $0x8] sm:$0xff]
        %v2148 = vld [vmem:[#allocation5 + $0x10] sm:$0xff]
        %v2149 = vld [vmem:[#allocation5 + $0x18] sm:$0xff]
        %v2150 = vld [vmem:[#allocation5 + $0x20] sm:$0xff]
        %v2151 = vld [vmem:[#allocation5 + $0x28] sm:$0xff]
        %v2152 = vld [vmem:[#allocation5 + $0x30] sm:$0xff]
        %v2153 = vld [vmem:[#allocation5 + $0x38] sm:$0xff]
        %v2154 = vld [vmem:[#allocation5 + $0x40] sm:$0xff]
        %v2155 = vld [vmem:[#allocation5 + $0x48] sm:$0xff]
        %v2156 = vld [vmem:[#allocation5 + $0x50] sm:$0xff]
        %v2157 = vld [vmem:[#allocation5 + $0x58] sm:$0xff]
        %v2158 = vld [vmem:[#allocation5 + $0x60] sm:$0xff]
        %v2159 = vld [vmem:[#allocation5 + $0x68] sm:$0xff]
        %v2160 = vld [vmem:[#allocation5 + $0x70] sm:$0xff]
        %v2161 = vld [vmem:[#allocation5 + $0x78] sm:$0xff]
        %v2162 = vld [vmem:[#allocation5 + $0x80] sm:$0xff]
        %v2163 = vld [vmem:[#allocation5 + $0x88] sm:$0xff]
        %v2164 = vld [vmem:[#allocation5 + $0x90] sm:$0xff]
        %v2165 = vld [vmem:[#allocation5 + $0x98] sm:$0xff]
        %v2166 = vld [vmem:[#allocation5 + $0xa0] sm:$0xff]
        %v2167 = vld [vmem:[#allocation5 + $0xa8] sm:$0xff]
        %v2168 = vld [vmem:[#allocation5 + $0xb0] sm:$0xff]
        %v2169 = vld [vmem:[#allocation5 + $0xb8] sm:$0xff]
        %v2170 = vld [vmem:[#allocation5 + $0xc0] sm:$0xff]
        %v2171 = vld [vmem:[#allocation5 + $0xc8] sm:$0xff]
        %v2172 = vld [vmem:[#allocation5 + $0xd0] sm:$0xff]
        %v2173 = vld [vmem:[#allocation5 + $0xd8] sm:$0xff]
        %v2174 = vld [vmem:[#allocation5 + $0xe0] sm:$0xff]
        %v2175 = vld [vmem:[#allocation5 + $0xe8] sm:$0xff]
        %v2176 = vld [vmem:[#allocation5 + $0xf0] sm:$0xff]
        %v2177 = vld [vmem:[#allocation5 + $0xf8] sm:$0xff]
        %v2178 = vld [vmem:[#allocation5 + $0x100] sm:$0xff]
        %v2179 = vld [vmem:[#allocation5 + $0x108] sm:$0xff]
        %v2180 = vld [vmem:[#allocation5 + $0x110] sm:$0xff]
        %v2181 = vld [vmem:[#allocation5 + $0x118] sm:$0xff]
        %v2182 = vld [vmem:[#allocation5 + $0x120] sm:$0xff]
        %v2183 = vld [vmem:[#allocation5 + $0x128] sm:$0xff]
        %v2184 = vld [vmem:[#allocation5 + $0x130] sm:$0xff]
        %v2185 = vld [vmem:[#allocation5 + $0x138] sm:$0xff]
        %v2186 = vld [vmem:[#allocation5 + $0x140] sm:$0xff]
        %v2187 = vld [vmem:[#allocation5 + $0x148] sm:$0xff]
        %v2188 = vld [vmem:[#allocation5 + $0x150] sm:$0xff]
        %v2189 = vld [vmem:[#allocation5 + $0x158] sm:$0xff]
        %v2190 = vld [vmem:[#allocation5 + $0x160] sm:$0xff]
        %v2191 = vld [vmem:[#allocation5 + $0x168] sm:$0xff]
        %v2192 = vld [vmem:[#allocation5 + $0x170] sm:$0xff]
        %v2193 = vld [vmem:[#allocation5 + $0x178] sm:$0xff]
        %v2194 = vld [vmem:[#allocation5 + $0x180] sm:$0xff]
        %v2195 = vld [vmem:[#allocation5 + $0x188] sm:$0xff]
        %v2196 = vld [vmem:[#allocation5 + $0x190] sm:$0xff]
        %v2197 = vld [vmem:[#allocation5 + $0x198] sm:$0xff]
        %v2198 = vld [vmem:[#allocation5 + $0x1a0] sm:$0xff]
        %v2199 = vld [vmem:[#allocation5 + $0x1a8] sm:$0xff]
        %v2200 = vld [vmem:[#allocation5 + $0x1b0] sm:$0xff]
        %v2201 = vld [vmem:[#allocation5 + $0x1b8] sm:$0xff]
        %v2202 = vld [vmem:[#allocation5 + $0x1c0] sm:$0xff]
        %v2203 = vld [vmem:[#allocation5 + $0x1c8] sm:$0xff]
        %v2204 = vld [vmem:[#allocation5 + $0x1d0] sm:$0xff]
        %v2205 = vld [vmem:[#allocation5 + $0x1d8] sm:$0xff]
        %v2206 = vld [vmem:[#allocation5 + $0x1e0] sm:$0xff]
        %v2207 = vld [vmem:[#allocation5 + $0x1e8] sm:$0xff]
        %v2208 = vld [vmem:[#allocation5 + $0x1f0] sm:$0xff]
        %v2209 = vld [vmem:[#allocation5 + $0x1f8] sm:$0xff]
        %v2210 = vld [vmem:[#allocation5 + $0x200] sm:$0xff]
        %v2211 = vld [vmem:[#allocation5 + $0x208] sm:$0xff]
        %v2212 = vld [vmem:[#allocation5 + $0x210] sm:$0xff]
        %v2213 = vld [vmem:[#allocation5 + $0x218] sm:$0xff]
        %v2214 = vld [vmem:[#allocation5 + $0x220] sm:$0xff]
        %v2215 = vld [vmem:[#allocation5 + $0x228] sm:$0xff]
        %v2216 = vld [vmem:[#allocation5 + $0x230] sm:$0xff]
        %v2217 = vld [vmem:[#allocation5 + $0x238] sm:$0xff]
        %v2218 = vld [vmem:[#allocation5 + $0x240] sm:$0xff]
        %v2219 = vld [vmem:[#allocation5 + $0x248] sm:$0xff]
        %v2220 = vld [vmem:[#allocation5 + $0x250] sm:$0xff]
        %v2221 = vld [vmem:[#allocation5 + $0x258] sm:$0xff]
        %v2222 = vld [vmem:[#allocation5 + $0x260] sm:$0xff]
        %v2223 = vld [vmem:[#allocation5 + $0x268] sm:$0xff]
        %v2224 = vld [vmem:[#allocation5 + $0x270] sm:$0xff]
        %v2225 = vld [vmem:[#allocation5 + $0x278] sm:$0xff]
        %v2306 = vunpack.c.l.b16 %v2146
        %v2307 = vunpack.c.h.b16 %v2146
        %v2308 = vunpack.c.l.b16 %v2147
        %v2309 = vunpack.c.h.b16 %v2147
        %v2310 = vunpack.c.l.b16 %v2148
        %v2311 = vunpack.c.h.b16 %v2148
        %v2312 = vunpack.c.l.b16 %v2149
        %v2313 = vunpack.c.h.b16 %v2149
        %v2314 = vunpack.c.l.b16 %v2150
        %v2315 = vunpack.c.h.b16 %v2150
        %v2316 = vunpack.c.l.b16 %v2151
        %v2317 = vunpack.c.h.b16 %v2151
        %v2318 = vunpack.c.l.b16 %v2152
        %v2319 = vunpack.c.h.b16 %v2152
        %v2320 = vunpack.c.l.b16 %v2153
        %v2321 = vunpack.c.h.b16 %v2153
        %v2322 = vunpack.c.l.b16 %v2154
        %v2323 = vunpack.c.h.b16 %v2154
        %v2324 = vunpack.c.l.b16 %v2155
        %v2325 = vunpack.c.h.b16 %v2155
        %v2326 = vunpack.c.l.b16 %v2156
        %v2327 = vunpack.c.h.b16 %v2156
        %v2328 = vunpack.c.l.b16 %v2157
        %v2329 = vunpack.c.h.b16 %v2157
        %v2330 = vunpack.c.l.b16 %v2158
        %v2331 = vunpack.c.h.b16 %v2158
        %v2332 = vunpack.c.l.b16 %v2159
        %v2333 = vunpack.c.h.b16 %v2159
        %v2334 = vunpack.c.l.b16 %v2160
        %v2335 = vunpack.c.h.b16 %v2160
        %v2336 = vunpack.c.l.b16 %v2161
        %v2337 = vunpack.c.h.b16 %v2161
        %v2338 = vunpack.c.l.b16 %v2162
        %v2339 = vunpack.c.h.b16 %v2162
        %v2340 = vunpack.c.l.b16 %v2163
        %v2341 = vunpack.c.h.b16 %v2163
        %v2342 = vunpack.c.l.b16 %v2164
        %v2343 = vunpack.c.h.b16 %v2164
        %v2344 = vunpack.c.l.b16 %v2165
        %v2345 = vunpack.c.h.b16 %v2165
        %v2346 = vunpack.c.l.b16 %v2166
        %v2347 = vunpack.c.h.b16 %v2166
        %v2348 = vunpack.c.l.b16 %v2167
        %v2349 = vunpack.c.h.b16 %v2167
        %v2350 = vunpack.c.l.b16 %v2168
        %v2351 = vunpack.c.h.b16 %v2168
        %v2352 = vunpack.c.l.b16 %v2169
        %v2353 = vunpack.c.h.b16 %v2169
        %v2354 = vunpack.c.l.b16 %v2170
        %v2355 = vunpack.c.h.b16 %v2170
        %v2356 = vunpack.c.l.b16 %v2171
        %v2357 = vunpack.c.h.b16 %v2171
        %v2358 = vunpack.c.l.b16 %v2172
        %v2359 = vunpack.c.h.b16 %v2172
        %v2360 = vunpack.c.l.b16 %v2173
        %v2361 = vunpack.c.h.b16 %v2173
        %v2362 = vunpack.c.l.b16 %v2174
        %v2363 = vunpack.c.h.b16 %v2174
        %v2364 = vunpack.c.l.b16 %v2175
        %v2365 = vunpack.c.h.b16 %v2175
        %v2366 = vunpack.c.l.b16 %v2176
        %v2367 = vunpack.c.h.b16 %v2176
        %v2368 = vunpack.c.l.b16 %v2177
        %v2369 = vunpack.c.h.b16 %v2177
        %v2370 = vunpack.c.l.b16 %v2178
        %v2371 = vunpack.c.h.b16 %v2178
        %v2372 = vunpack.c.l.b16 %v2179
        %v2373 = vunpack.c.h.b16 %v2179
        %v2374 = vunpack.c.l.b16 %v2180
        %v2375 = vunpack.c.h.b16 %v2180
        %v2376 = vunpack.c.l.b16 %v2181
        %v2377 = vunpack.c.h.b16 %v2181
        %v2378 = vunpack.c.l.b16 %v2182
        %v2379 = vunpack.c.h.b16 %v2182
        %v2380 = vunpack.c.l.b16 %v2183
        %v2381 = vunpack.c.h.b16 %v2183
        %v2382 = vunpack.c.l.b16 %v2184
        %v2383 = vunpack.c.h.b16 %v2184
        %v2384 = vunpack.c.l.b16 %v2185
        %v2385 = vunpack.c.h.b16 %v2185
        %v2386 = vunpack.c.l.b16 %v2186
        %v2387 = vunpack.c.h.b16 %v2186
        %v2388 = vunpack.c.l.b16 %v2187
        %v2389 = vunpack.c.h.b16 %v2187
        %v2390 = vunpack.c.l.b16 %v2188
        %v2391 = vunpack.c.h.b16 %v2188
        %v2392 = vunpack.c.l.b16 %v2189
        %v2393 = vunpack.c.h.b16 %v2189
        %v2394 = vunpack.c.l.b16 %v2190
        %v2395 = vunpack.c.h.b16 %v2190
        %v2396 = vunpack.c.l.b16 %v2191
        %v2397 = vunpack.c.h.b16 %v2191
        %v2398 = vunpack.c.l.b16 %v2192
        %v2399 = vunpack.c.h.b16 %v2192
        %v2400 = vunpack.c.l.b16 %v2193
        %v2401 = vunpack.c.h.b16 %v2193
        %v2402 = vunpack.c.l.b16 %v2194
        %v2403 = vunpack.c.h.b16 %v2194
        %v2404 = vunpack.c.l.b16 %v2195
        %v2405 = vunpack.c.h.b16 %v2195
        %v2406 = vunpack.c.l.b16 %v2196
        %v2407 = vunpack.c.h.b16 %v2196
        %v2408 = vunpack.c.l.b16 %v2197
        %v2409 = vunpack.c.h.b16 %v2197
        %v2410 = vunpack.c.l.b16 %v2198
        %v2411 = vunpack.c.h.b16 %v2198
        %v2412 = vunpack.c.l.b16 %v2199
        %v2413 = vunpack.c.h.b16 %v2199
        %v2414 = vunpack.c.l.b16 %v2200
        %v2415 = vunpack.c.h.b16 %v2200
        %v2416 = vunpack.c.l.b16 %v2201
        %v2417 = vunpack.c.h.b16 %v2201
        %v2418 = vunpack.c.l.b16 %v2202
        %v2419 = vunpack.c.h.b16 %v2202
        %v2420 = vunpack.c.l.b16 %v2203
        %v2421 = vunpack.c.h.b16 %v2203
        %v2422 = vunpack.c.l.b16 %v2204
        %v2423 = vunpack.c.h.b16 %v2204
        %v2424 = vunpack.c.l.b16 %v2205
        %v2425 = vunpack.c.h.b16 %v2205
        %v2426 = vunpack.c.l.b16 %v2206
        %v2427 = vunpack.c.h.b16 %v2206
        %v2428 = vunpack.c.l.b16 %v2207
        %v2429 = vunpack.c.h.b16 %v2207
        %v2430 = vunpack.c.l.b16 %v2208
        %v2431 = vunpack.c.h.b16 %v2208
        %v2432 = vunpack.c.l.b16 %v2209
        %v2433 = vunpack.c.h.b16 %v2209
        %v2434 = vunpack.c.l.b16 %v2210
        %v2435 = vunpack.c.h.b16 %v2210
        %v2436 = vunpack.c.l.b16 %v2211
        %v2437 = vunpack.c.h.b16 %v2211
        %v2438 = vunpack.c.l.b16 %v2212
        %v2439 = vunpack.c.h.b16 %v2212
        %v2440 = vunpack.c.l.b16 %v2213
        %v2441 = vunpack.c.h.b16 %v2213
        %v2442 = vunpack.c.l.b16 %v2214
        %v2443 = vunpack.c.h.b16 %v2214
        %v2444 = vunpack.c.l.b16 %v2215
        %v2445 = vunpack.c.h.b16 %v2215
        %v2446 = vunpack.c.l.b16 %v2216
        %v2447 = vunpack.c.h.b16 %v2216
        %v2448 = vunpack.c.l.b16 %v2217
        %v2449 = vunpack.c.h.b16 %v2217
        %v2450 = vunpack.c.l.b16 %v2218
        %v2451 = vunpack.c.h.b16 %v2218
        %v2452 = vunpack.c.l.b16 %v2219
        %v2453 = vunpack.c.h.b16 %v2219
        %v2454 = vunpack.c.l.b16 %v2220
        %v2455 = vunpack.c.h.b16 %v2220
        %v2456 = vunpack.c.l.b16 %v2221
        %v2457 = vunpack.c.h.b16 %v2221
        %v2458 = vunpack.c.l.b16 %v2222
        %v2459 = vunpack.c.h.b16 %v2222
        %v2460 = vunpack.c.l.b16 %v2223
        %v2461 = vunpack.c.h.b16 %v2223
        %v2462 = vunpack.c.l.b16 %v2224
        %v2463 = vunpack.c.h.b16 %v2224
        %v2464 = vunpack.c.l.b16 %v2225
        %v2465 = vunpack.c.h.b16 %v2225
        %v2466 = vpack.c.b16 %v2316, %v2306
        %v2467 = vpack.c.b16 %v2317, %v2307
        %v2468 = vpack.c.b16 %v2318, %v2308
        %v2469 = vpack.c.b16 %v2319, %v2309
        %v2470 = vpack.c.b16 %v2320, %v2310
        %v2471 = vpack.c.b16 %v2321, %v2311
        %v2472 = vpack.c.b16 %v2322, %v2312
        %v2473 = vpack.c.b16 %v2323, %v2313
        %v2474 = vpack.c.b16 %v2324, %v2314
        %v2475 = vpack.c.b16 %v2325, %v2315
        %v2476 = vpack.c.b16 %v2336, %v2326
        %v2477 = vpack.c.b16 %v2337, %v2327
        %v2478 = vpack.c.b16 %v2338, %v2328
        %v2479 = vpack.c.b16 %v2339, %v2329
        %v2480 = vpack.c.b16 %v2340, %v2330
        %v2481 = vpack.c.b16 %v2341, %v2331
        %v2482 = vpack.c.b16 %v2342, %v2332
        %v2483 = vpack.c.b16 %v2343, %v2333
        %v2484 = vpack.c.b16 %v2344, %v2334
        %v2485 = vpack.c.b16 %v2345, %v2335
        %v2486 = vpack.c.b16 %v2356, %v2346
        %v2487 = vpack.c.b16 %v2357, %v2347
        %v2488 = vpack.c.b16 %v2358, %v2348
        %v2489 = vpack.c.b16 %v2359, %v2349
        %v2490 = vpack.c.b16 %v2360, %v2350
        %v2491 = vpack.c.b16 %v2361, %v2351
        %v2492 = vpack.c.b16 %v2362, %v2352
        %v2493 = vpack.c.b16 %v2363, %v2353
        %v2494 = vpack.c.b16 %v2364, %v2354
        %v2495 = vpack.c.b16 %v2365, %v2355
        %v2496 = vpack.c.b16 %v2376, %v2366
        %v2497 = vpack.c.b16 %v2377, %v2367
        %v2498 = vpack.c.b16 %v2378, %v2368
        %v2499 = vpack.c.b16 %v2379, %v2369
        %v2500 = vpack.c.b16 %v2380, %v2370
        %v2501 = vpack.c.b16 %v2381, %v2371
        %v2502 = vpack.c.b16 %v2382, %v2372
        %v2503 = vpack.c.b16 %v2383, %v2373
        %v2504 = vpack.c.b16 %v2384, %v2374
        %v2505 = vpack.c.b16 %v2385, %v2375
        %v2506 = vpack.c.b16 %v2396, %v2386
        %v2507 = vpack.c.b16 %v2397, %v2387
        %v2508 = vpack.c.b16 %v2398, %v2388
        %v2509 = vpack.c.b16 %v2399, %v2389
        %v2510 = vpack.c.b16 %v2400, %v2390
        %v2511 = vpack.c.b16 %v2401, %v2391
        %v2512 = vpack.c.b16 %v2402, %v2392
        %v2513 = vpack.c.b16 %v2403, %v2393
        %v2514 = vpack.c.b16 %v2404, %v2394
        %v2515 = vpack.c.b16 %v2405, %v2395
        %v2516 = vpack.c.b16 %v2416, %v2406
        %v2517 = vpack.c.b16 %v2417, %v2407
        %v2518 = vpack.c.b16 %v2418, %v2408
        %v2519 = vpack.c.b16 %v2419, %v2409
        %v2520 = vpack.c.b16 %v2420, %v2410
        %v2521 = vpack.c.b16 %v2421, %v2411
        %v2522 = vpack.c.b16 %v2422, %v2412
        %v2523 = vpack.c.b16 %v2423, %v2413
        %v2524 = vpack.c.b16 %v2424, %v2414
        %v2525 = vpack.c.b16 %v2425, %v2415
        %v2526 = vpack.c.b16 %v2436, %v2426
        %v2527 = vpack.c.b16 %v2437, %v2427
        %v2528 = vpack.c.b16 %v2438, %v2428
        %v2529 = vpack.c.b16 %v2439, %v2429
        %v2530 = vpack.c.b16 %v2440, %v2430
        %v2531 = vpack.c.b16 %v2441, %v2431
        %v2532 = vpack.c.b16 %v2442, %v2432
        %v2533 = vpack.c.b16 %v2443, %v2433
        %v2534 = vpack.c.b16 %v2444, %v2434
        %v2535 = vpack.c.b16 %v2445, %v2435
        %v2536 = vpack.c.b16 %v2456, %v2446
        %v2537 = vpack.c.b16 %v2457, %v2447
        %v2538 = vpack.c.b16 %v2458, %v2448
        %v2539 = vpack.c.b16 %v2459, %v2449
        %v2540 = vpack.c.b16 %v2460, %v2450
        %v2541 = vpack.c.b16 %v2461, %v2451
        %v2542 = vpack.c.b16 %v2462, %v2452
        %v2543 = vpack.c.b16 %v2463, %v2453
        %v2544 = vpack.c.b16 %v2464, %v2454
        %v2545 = vpack.c.b16 %v2465, %v2455
        %2626 = vmatpush.bf16.msra.mxu0 %v2536
        %2627 = vmatpush.bf16.msra.mxu0 %v2526
        %2628 = vmatpush.bf16.msra.mxu0 %v2516
        %2629 = vmatpush.bf16.msra.mxu0 %v2506
        %2630 = vmatpush.bf16.msra.mxu0 %v2496
        %2631 = vmatpush.bf16.msra.mxu0 %v2486
        %2632 = vmatpush.bf16.msra.mxu0 %v2476
        %2633 = vmatpush.bf16.msra.mxu0 %v2466
        %2634 = vmatmul.bf16.gmra.mxu0 %v2145
        %v2635 = vpop.f32.mrf.mxu0
        %v2636 = vadd.f32 0.0, %v2635
        %v2637 = vpop.f32.mrf.mxu0
        %2638 = vdwg.mxu0
        %2639 = vmatpush.bf16.msra.mxu0 %v2537
        %2640 = vmatpush.bf16.msra.mxu0 %v2527
        %2641 = vmatpush.bf16.msra.mxu0 %v2517
        %2642 = vmatpush.bf16.msra.mxu0 %v2507
        %2643 = vmatpush.bf16.msra.mxu0 %v2497
        %2644 = vmatpush.bf16.msra.mxu0 %v2487
        %2645 = vmatpush.bf16.msra.mxu0 %v2477
        %2646 = vmatpush.bf16.msra.mxu0 %v2467
        %2647 = vmatmul.bf16.gmra.mxu0 %v2145
        %v2648 = vpop.f32.mrf.mxu0
        %v2649 = vadd.f32 0.0, %v2648
        %v2650 = vpop.f32.mrf.mxu0
        %2651 = vdwg.mxu0
        %2652 = vmatpush.bf16.msra.mxu0 %v2538
        %2653 = vmatpush.bf16.msra.mxu0 %v2528
        %2654 = vmatpush.bf16.msra.mxu0 %v2518
        %2655 = vmatpush.bf16.msra.mxu0 %v2508
        %2656 = vmatpush.bf16.msra.mxu0 %v2498
        %2657 = vmatpush.bf16.msra.mxu0 %v2488
        %2658 = vmatpush.bf16.msra.mxu0 %v2478
        %2659 = vmatpush.bf16.msra.mxu0 %v2468
        %2660 = vmatmul.bf16.gmra.mxu0 %v2145
        %v2661 = vpop.f32.mrf.mxu0
        %v2662 = vadd.f32 0.0, %v2661
        %v2663 = vpop.f32.mrf.mxu0
        %2664 = vdwg.mxu0
        %2665 = vmatpush.bf16.msra.mxu0 %v2539
        %2666 = vmatpush.bf16.msra.mxu0 %v2529
        %2667 = vmatpush.bf16.msra.mxu0 %v2519
        %2668 = vmatpush.bf16.msra.mxu0 %v2509
        %2669 = vmatpush.bf16.msra.mxu0 %v2499
        %2670 = vmatpush.bf16.msra.mxu0 %v2489
        %2671 = vmatpush.bf16.msra.mxu0 %v2479
        %2672 = vmatpush.bf16.msra.mxu0 %v2469
        %2673 = vmatmul.bf16.gmra.mxu0 %v2145
        %v2674 = vpop.f32.mrf.mxu0
        %v2675 = vadd.f32 0.0, %v2674
        %v2676 = vpop.f32.mrf.mxu0
        %2677 = vdwg.mxu0
        %2678 = vmatpush.bf16.msra.mxu0 %v2540
        %2679 = vmatpush.bf16.msra.mxu0 %v2530
        %2680 = vmatpush.bf16.msra.mxu0 %v2520
        %2681 = vmatpush.bf16.msra.mxu0 %v2510
        %2682 = vmatpush.bf16.msra.mxu0 %v2500
        %2683 = vmatpush.bf16.msra.mxu0 %v2490
        %2684 = vmatpush.bf16.msra.mxu0 %v2480
        %2685 = vmatpush.bf16.msra.mxu0 %v2470
        %2686 = vmatmul.bf16.gmra.mxu0 %v2145
        %v2687 = vpop.f32.mrf.mxu0
        %v2688 = vadd.f32 0.0, %v2687
        %v2689 = vpop.f32.mrf.mxu0
        %2690 = vdwg.mxu0
        %2691 = vmatpush.bf16.msra.mxu0 %v2541
        %2692 = vmatpush.bf16.msra.mxu0 %v2531
        %2693 = vmatpush.bf16.msra.mxu0 %v2521
        %2694 = vmatpush.bf16.msra.mxu0 %v2511
        %2695 = vmatpush.bf16.msra.mxu0 %v2501
        %2696 = vmatpush.bf16.msra.mxu0 %v2491
        %2697 = vmatpush.bf16.msra.mxu0 %v2481
        %2698 = vmatpush.bf16.msra.mxu0 %v2471
        %2699 = vmatmul.bf16.gmra.mxu0 %v2145
        %v2700 = vpop.f32.mrf.mxu0
        %v2701 = vadd.f32 0.0, %v2700
        %v2702 = vpop.f32.mrf.mxu0
        %2703 = vdwg.mxu0
        %2704 = vmatpush.bf16.msra.mxu0 %v2542
        %2705 = vmatpush.bf16.msra.mxu0 %v2532
        %2706 = vmatpush.bf16.msra.mxu0 %v2522
        %2707 = vmatpush.bf16.msra.mxu0 %v2512
        %2708 = vmatpush.bf16.msra.mxu0 %v2502
        %2709 = vmatpush.bf16.msra.mxu0 %v2492
        %2710 = vmatpush.bf16.msra.mxu0 %v2482
        %2711 = vmatpush.bf16.msra.mxu0 %v2472
        %2712 = vmatmul.bf16.gmra.mxu0 %v2145
        %v2713 = vpop.f32.mrf.mxu0
        %v2714 = vadd.f32 0.0, %v2713
        %v2715 = vpop.f32.mrf.mxu0
        %2716 = vdwg.mxu0
        %2717 = vmatpush.bf16.msra.mxu0 %v2543
        %2718 = vmatpush.bf16.msra.mxu0 %v2533
        %2719 = vmatpush.bf16.msra.mxu0 %v2523
        %2720 = vmatpush.bf16.msra.mxu0 %v2513
        %2721 = vmatpush.bf16.msra.mxu0 %v2503
        %2722 = vmatpush.bf16.msra.mxu0 %v2493
        %2723 = vmatpush.bf16.msra.mxu0 %v2483
        %2724 = vmatpush.bf16.msra.mxu0 %v2473
        %2725 = vmatmul.bf16.gmra.mxu0 %v2145
        %v2726 = vpop.f32.mrf.mxu0
        %v2727 = vadd.f32 0.0, %v2726
        %v2728 = vpop.f32.mrf.mxu0
        %2729 = vdwg.mxu0
        %2730 = vmatpush.bf16.msra.mxu0 %v2544
        %2731 = vmatpush.bf16.msra.mxu0 %v2534
        %2732 = vmatpush.bf16.msra.mxu0 %v2524
        %2733 = vmatpush.bf16.msra.mxu0 %v2514
        %2734 = vmatpush.bf16.msra.mxu0 %v2504
        %2735 = vmatpush.bf16.msra.mxu0 %v2494
        %2736 = vmatpush.bf16.msra.mxu0 %v2484
        %2737 = vmatpush.bf16.msra.mxu0 %v2474
        %2738 = vmatmul.bf16.gmra.mxu0 %v2145
        %v2739 = vpop.f32.mrf.mxu0
        %v2740 = vadd.f32 0.0, %v2739
        %v2741 = vpop.f32.mrf.mxu0
        %2742 = vdwg.mxu0
        %2743 = vmatpush.bf16.msra.mxu0 %v2545
        %2744 = vmatpush.bf16.msra.mxu0 %v2535
        %2745 = vmatpush.bf16.msra.mxu0 %v2525
        %2746 = vmatpush.bf16.msra.mxu0 %v2515
        %2747 = vmatpush.bf16.msra.mxu0 %v2505
        %2748 = vmatpush.bf16.msra.mxu0 %v2495
        %2749 = vmatpush.bf16.msra.mxu0 %v2485
        %2750 = vmatpush.bf16.msra.mxu0 %v2475
        %2751 = vmatmul.bf16.gmra.mxu0 %v2145
        %v2752 = vpop.f32.mrf.mxu0
        %v2753 = vadd.f32 0.0, %v2752
        %v2754 = vpop.f32.mrf.mxu0
        %2755 = vdwg.mxu0
        %v2758 = vrot.slane %v2662, 1
        %v2759 = vrot.slane %v2675, 1
        %v2762 = vadd.f32 %v2636, %v2758
        %v2763 = vadd.f32 %v2649, %v2759
        %v2766 = vrot.slane %v2688, 2
        %v2767 = vrot.slane %v2701, 2
        %v2770 = vadd.f32 %v2762, %v2766
        %v2771 = vadd.f32 %v2763, %v2767
        %v2774 = vrot.slane %v2714, 3
        %v2775 = vrot.slane %v2727, 3
        %v2778 = vadd.f32 %v2770, %v2774
        %v2779 = vadd.f32 %v2771, %v2775
        %v2782 = vrot.slane %v2740, 4
        %v2783 = vrot.slane %v2753, 4
        %v2786 = vadd.f32 %v2778, %v2782
        %v2787 = vadd.f32 %v2779, %v2783
        %v2788 = vld [vmem:[%s6] sm:$0x3]
        %v2790 = vperm.slane %v2788, 0
        %v2791 = vperm.slane %v2788, 1
        %v2794 = vadd.f32 %v2786, %v2790
        %v2795 = vadd.f32 %v2787, %v2791
        %v2796 = vmax.f32 %v2794, 0.0
        %v2797 = vmax.f32 %v2795, 0.0
        %v2798 = vperm.slane %v2796, 0
        %v2799 = vperm.slane %v2797, 0
        %v2800 = vpack.c.bf16 %v2798, %v2798
        %v2801 = vpack.c.bf16 %v2799, %v2799
        %v2802 = vld [vmem:[%s7] sm:$0xf]
        %v2803 = vld [vmem:[%s7 + $0x4] sm:$0xf]
        %v2804 = vld [vmem:[%s7 + $0x8] sm:$0xf]
        %v2805 = vld [vmem:[%s7 + $0xc] sm:$0xf]
        %v2806 = vld [vmem:[%s7 + $0x10] sm:$0xf]
        %v2807 = vld [vmem:[%s7 + $0x14] sm:$0xf]
        %v2808 = vld [vmem:[%s7 + $0x18] sm:$0xf]
        %v2809 = vld [vmem:[%s7 + $0x1c] sm:$0xf]
        %v2810 = vld [vmem:[%s7 + $0x20] sm:$0xf]
        %v2811 = vld [vmem:[%s7 + $0x24] sm:$0xf]
        %v2812 = vld [vmem:[%s7 + $0x28] sm:$0xf]
        %v2813 = vld [vmem:[%s7 + $0x2c] sm:$0xf]
        %v2814 = vld [vmem:[%s7 + $0x30] sm:$0xf]
        %v2815 = vld [vmem:[%s7 + $0x34] sm:$0xf]
        %v2816 = vld [vmem:[%s7 + $0x38] sm:$0xf]
        %v2817 = vld [vmem:[%s7 + $0x3c] sm:$0xf]
        %v2818 = vld [vmem:[%s7 + $0x40] sm:$0xf]
        %v2819 = vld [vmem:[%s7 + $0x44] sm:$0xf]
        %v2820 = vld [vmem:[%s7 + $0x48] sm:$0xf]
        %v2821 = vld [vmem:[%s7 + $0x4c] sm:$0xf]
        %v2822 = vld [vmem:[%s7 + $0x50] sm:$0xf]
        %v2823 = vld [vmem:[%s7 + $0x54] sm:$0xf]
        %v2824 = vld [vmem:[%s7 + $0x58] sm:$0xf]
        %v2825 = vld [vmem:[%s7 + $0x5c] sm:$0xf]
        %v2826 = vld [vmem:[%s7 + $0x60] sm:$0xf]
        %v2827 = vld [vmem:[%s7 + $0x64] sm:$0xf]
        %v2828 = vld [vmem:[%s7 + $0x68] sm:$0xf]
        %v2829 = vld [vmem:[%s7 + $0x6c] sm:$0xf]
        %v2830 = vld [vmem:[%s7 + $0x70] sm:$0xf]
        %v2831 = vld [vmem:[%s7 + $0x74] sm:$0xf]
        %v2832 = vld [vmem:[%s7 + $0x78] sm:$0xf]
        %v2833 = vld [vmem:[%s7 + $0x7c] sm:$0xf]
        %v2866 = vunpack.c.l.b16 %v2802
        %v2867 = vunpack.c.l.b16 %v2803
        %v2868 = vunpack.c.l.b16 %v2804
        %v2869 = vunpack.c.l.b16 %v2805
        %v2870 = vunpack.c.l.b16 %v2806
        %v2871 = vunpack.c.l.b16 %v2807
        %v2872 = vunpack.c.l.b16 %v2808
        %v2873 = vunpack.c.l.b16 %v2809
        %v2874 = vunpack.c.l.b16 %v2810
        %v2875 = vunpack.c.l.b16 %v2811
        %v2876 = vunpack.c.l.b16 %v2812
        %v2877 = vunpack.c.l.b16 %v2813
        %v2878 = vunpack.c.l.b16 %v2814
        %v2879 = vunpack.c.l.b16 %v2815
        %v2880 = vunpack.c.l.b16 %v2816
        %v2881 = vunpack.c.l.b16 %v2817
        %v2882 = vunpack.c.l.b16 %v2818
        %v2883 = vunpack.c.l.b16 %v2819
        %v2884 = vunpack.c.l.b16 %v2820
        %v2885 = vunpack.c.l.b16 %v2821
        %v2886 = vunpack.c.l.b16 %v2822
        %v2887 = vunpack.c.l.b16 %v2823
        %v2888 = vunpack.c.l.b16 %v2824
        %v2889 = vunpack.c.l.b16 %v2825
        %v2890 = vunpack.c.l.b16 %v2826
        %v2891 = vunpack.c.l.b16 %v2827
        %v2892 = vunpack.c.l.b16 %v2828
        %v2893 = vunpack.c.l.b16 %v2829
        %v2894 = vunpack.c.l.b16 %v2830
        %v2895 = vunpack.c.l.b16 %v2831
        %v2896 = vunpack.c.l.b16 %v2832
        %v2897 = vunpack.c.l.b16 %v2833
        %v2898 = vpack.c.b16 %v2867, %v2866
        %v2899 = vpack.c.b16 %v2869, %v2868
        %v2900 = vpack.c.b16 %v2871, %v2870
        %v2901 = vpack.c.b16 %v2873, %v2872
        %v2902 = vpack.c.b16 %v2875, %v2874
        %v2903 = vpack.c.b16 %v2877, %v2876
        %v2904 = vpack.c.b16 %v2879, %v2878
        %v2905 = vpack.c.b16 %v2881, %v2880
        %v2906 = vpack.c.b16 %v2883, %v2882
        %v2907 = vpack.c.b16 %v2885, %v2884
        %v2908 = vpack.c.b16 %v2887, %v2886
        %v2909 = vpack.c.b16 %v2889, %v2888
        %v2910 = vpack.c.b16 %v2891, %v2890
        %v2911 = vpack.c.b16 %v2893, %v2892
        %v2912 = vpack.c.b16 %v2895, %v2894
        %v2913 = vpack.c.b16 %v2897, %v2896
        %2930 = vmatpush.bf16.msra.mxu0 %v2905
        %2931 = vmatpush.bf16.msra.mxu0 %v2904
        %2932 = vmatpush.bf16.msra.mxu0 %v2903
        %2933 = vmatpush.bf16.msra.mxu0 %v2902
        %2934 = vmatpush.bf16.msra.mxu0 %v2901
        %2935 = vmatpush.bf16.msra.mxu0 %v2900
        %2936 = vmatpush.bf16.msra.mxu0 %v2899
        %2937 = vmatpush.bf16.msra.mxu0 %v2898
        %2938 = vmatmul.bf16.gmra.mxu0 %v2800
        %v2939 = vpop.f32.mrf.mxu0
        %v2940 = vadd.f32 0.0, %v2939
        %v2941 = vpop.f32.mrf.mxu0
        %2942 = vdwg.mxu0
        %2943 = vmatpush.bf16.msra.mxu0 %v2913
        %2944 = vmatpush.bf16.msra.mxu0 %v2912
        %2945 = vmatpush.bf16.msra.mxu0 %v2911
        %2946 = vmatpush.bf16.msra.mxu0 %v2910
        %2947 = vmatpush.bf16.msra.mxu0 %v2909
        %2948 = vmatpush.bf16.msra.mxu0 %v2908
        %2949 = vmatpush.bf16.msra.mxu0 %v2907
        %2950 = vmatpush.bf16.msra.mxu0 %v2906
        %2951 = vmatmul.bf16.gmra.mxu0 %v2801
        %v2952 = vpop.f32.mrf.mxu0
        %v2953 = vadd.f32 %v2940, %v2952
        %v2954 = vpop.f32.mrf.mxu0
        %2955 = vdwg.mxu0
        %v2956 = vld [vmem:[%s8] sm:$0x1]
        %v2957 = vadd.f32 %v2953, %v2956
        %vm2958 = vcmask 73728
        %2959 = vst.msk [vmem:[%s358] sm:$0x1] %vm2958, %v2957
        %s2960 = sand.u32 %s227, 1
        %s2961 = scalar_lea.sflag [#allocation4], %s2960
        %s2962 = sand.u32 %s227, 1
        %s2963 = scalar_lea.vmem [#allocation7], %s2962
        // Predicated region
        $region65: #{net_forward.1} parent=55 // pred_check
          %p2964 = pneg %p237
        $region66: #{net_forward.1} parent=55 // pred_check_branch
          %2966 = sbr.rel (%p2964) target = $region68
        $region67: #{net_forward.1} parent=55 // pred_region
          %2968 = vsyncadd %s2961, 0
          %s2969 = scalar_lea.hbm %s9, %s25
          %s2971 = sshll.u32 %s2963, 4
          %s2972 = int_to_ptr.vmem [resolvable:$true] %s2971
          %s2973 = sshll.u32 %s2969, 4
          %s2974 = int_to_ptr.hbm [resolvable:$true] %s2973
          %2976 = dma.vmem_to_hbm [thread:$0]  %s2972, 16, %s2974, %s2961
        $region68: #{net_forward.1} parent=55 // pred_fallthru
          _
      $region56: #{net_forward.1} parent=5 // pred_fallthru
        _
      %p2977 = scmp.le.s32.totalorder 2, %s20
      // Predicated region
      $region69: #{net_forward.1} parent=5 // pred_check
        %p2978 = pneg %p2977
      $region70: #{net_forward.1} parent=5 // pred_check_branch
        %2980 = sbr.rel (%p2978) target = $region72
      $region71: #{net_forward.1} parent=5 // pred_region
        %s2981 = ssub.s32 %s20, 2
        // Predicated region
        $region73: #{net_forward.1} parent=71 // pred_check
          %p2982 = pneg %p243
        $region74: #{net_forward.1} parent=71 // pred_check_branch
          %2984 = sbr.rel (%p2982) target = $region76
        $region75: #{net_forward.1} parent=71 // pred_region
          %s2985 = sand.u32 %s228, 1
          %s2986 = scalar_lea.sflag [#allocation4], %s2985
          %s2987 = sand.u32 %s228, 1
          %s2988 = scalar_lea.vmem [#allocation7], %s2987
          %2990 = dma.done %s2986, 16
        $region76: #{net_forward.1} parent=71 // pred_fallthru
          _
      $region72: #{net_forward.1} parent=5 // pred_fallthru
        _
    $region6: #{net_forward.1} parent=1 // loop_footer
      %s24 = sadd.s32 1, %s20
    $region7: #{net_forward.1} parent=1 // loop_footer_branch
      %19 = sbr.rel target = $region3
    $region8: #{net_forward.1} parent=1 // loop_exit
      _
    %2991 = vsyncpa [#allocation3], 1
    %s2992 = scalar_lea.sflag [#allocation3], 1
    %2993 = vsyncpa %s2992, 1
    %2994 = vsyncpa [#allocation6], 1
    %2995 = vsyncpa [#allocation4], 1
    %s2996 = scalar_lea.sflag [#allocation4], 1
    %2997 = vsyncpa %s2996, 1

</llo_original>
